<compile_context>
chip_gen: v6e
topology: v6e:2x2x1
jax: 0.10.0
libtpu: 0.0.40
codegen_flags: <defaults>
</compile_context>

<pallas_src>
import functools

import jax
import jax.numpy as jnp
from jax import lax
from jax.experimental import pallas as pl
from jax.experimental.pallas import tpu as pltpu


# ----------------------------- Pallas kernel ---------------------------------

def stacked_decoder_kernel(
    x_ref,       # (B*S, E)
    wmat_ref,    # (L, E, 13E)  = [Wqkv|pad (4E) | W1 (4E) | W2^T (4E) | Wo (E)]
    bvec_ref,    # (L, 4, 4E)   rows: [bq|bk|bv|bo], [b1], [g1|be1|g2|be2], [b2|pad]
    o_ref,       # (B*S, E)
    attn_buf,    # VMEM scratch (B*S, E): lane-dense per-head attention output
    *, heads: int, batch: int,
):
    layers, E, _ = wmat_ref.shape
    H = 4 * E
    x = x_ref[...].astype(jnp.float32)          # (B*S, E), resident across layers
    BS = x.shape[0]
    S = BS // batch
    dh = E // heads
    scale = 1.0 / (float(dh) ** 0.5)

    def layer_norm(h, g, b):
        mu = jnp.mean(h, axis=-1, keepdims=True)
        var = jnp.mean((h - mu) ** 2, axis=-1, keepdims=True)
        return (h - mu) * lax.rsqrt(var + 1e-5) * g + b

    # NOTE: unrolled Python loop is fine at L=2; switch to lax.fori_loop (or a
    # sequential grid axis streaming per-layer weight blocks) when L grows.
    for l in range(layers):
        wm = wmat_ref[l]                        # (E, 13E)
        bv = bvec_ref[l]                        # (4, 4E)
        wqkv = wm[:, 0:H]                       # (E, 4E)  cols 3E:4E are zero pad
        w1 = wm[:, H:2 * H]                     # (E, 4E)
        w2t = wm[:, 2 * H:3 * H]                # (E, 4E)  == W2^T
        wo = wm[:, 3 * H:3 * H + E]             # (E, E)

        b_qkv = bv[0:1, 0:3 * E]                # (1, 3E)
        bo = bv[0:1, 3 * E:4 * E]               # (1, E)
        b1 = bv[1:2, :]                         # (1, 4E)
        g1 = bv[2:3, 0:E]
        be1 = bv[2:3, E:2 * E]
        g2 = bv[2:3, 2 * E:3 * E]
        be2 = bv[2:3, 3 * E:4 * E]
        b2 = bv[3:4, 0:E]

        # ---- fused QKV projection: one full-width matmul over all B*S rows -----
        qkv = jnp.dot(x, wqkv, preferred_element_type=jnp.float32)[:, 0:3 * E] + b_qkv

        # ---- per-(batch, head) attention on tiny (S, dh) tiles ------------------
        # results written lane-dense into attn_buf -> single Wo matmul afterwards
        for b in range(batch):
            r0, r1 = b * S, (b + 1) * S
            for h in range(heads):
                c0 = h * dh
                qh = qkv[r0:r1, c0:c0 + dh]                     # (S, dh)
                kh = qkv[r0:r1, E + c0:E + c0 + dh]             # (S, dh)
                vh = qkv[r0:r1, 2 * E + c0:2 * E + c0 + dh]     # (S, dh)
                s = lax.dot_general(qh, kh, (((1,), (1,)), ((), ())),
                                    preferred_element_type=jnp.float32) * scale
                s = s - jnp.max(s, axis=-1, keepdims=True)
                p = jnp.exp(s)
                p = p / jnp.sum(p, axis=-1, keepdims=True)      # exact softmax
                attn_buf[r0:r1, c0:c0 + dh] = jnp.dot(
                    p, vh, preferred_element_type=jnp.float32)

        # ---- output projection: one (B*S, E) @ (E, E) matmul --------------------
        attn = jnp.dot(attn_buf[...], wo, preferred_element_type=jnp.float32) + bo

        # ---- residual + LayerNorm 1 ----
        h1 = layer_norm(attn + x, g1, be1)

        # ---- feed-forward: E -> 4E (ReLU) -> E ----
        f = jnp.dot(h1, w1, preferred_element_type=jnp.float32) + b1
        f = jnp.maximum(f, 0.0)
        f = lax.dot_general(f, w2t, (((1,), (1,)), ((), ())),
                            preferred_element_type=jnp.float32) + b2

        # ---- residual + LayerNorm 2 ----
        x = layer_norm(f + h1, g2, be2)

    o_ref[...] = x.astype(o_ref.dtype)


# ------------------------------ host-side packing ------------------------------

def pack_layer_params(all_params):
    """Pack per-layer params into two lane-dense stacked slabs.

    wmat: (L, E, 13E) = [Wq|Wk|Wv|0pad (4E) | W1 (4E) | W2^T (4E) | Wo (E)]
    bvec: (L, 4, 4E)  = [[bq|bk|bv|bo], [b1], [g1|be1|g2|be2], [b2|0pad]]
    """
    E = all_params[0][0].shape[0]
    H = 4 * E
    WMAT, BVEC = [], []
    for (wq, bq, wk, bk, wv, bv, wo, bo, g1, be1, w1, b1, w2, b2, g2, be2) in all_params:
        wqkv = jnp.concatenate([wq, wk, wv], axis=1)                       # (E, 3E)
        wqkv_pad = jnp.concatenate(
            [wqkv, jnp.zeros((E, H - 3 * E), wqkv.dtype)], axis=1)         # (E, 4E)
        WMAT.append(jnp.concatenate([wqkv_pad, w1, w2.T, wo], axis=1))     # (E, 13E)
        row0 = jnp.concatenate([bq, bk, bv, bo])                           # (4E,)
        row1 = b1                                                          # (4E,)
        row2 = jnp.concatenate([g1, be1, g2, be2])                         # (4E,)
        row3 = jnp.concatenate([b2, jnp.zeros((H - E,), b2.dtype)])        # (4E,)
        BVEC.append(jnp.stack([row0, row1, row2, row3], axis=0))           # (4, 4E)
    return jnp.stack(WMAT), jnp.stack(BVEC)


def multihead_attention_block3(x, all_params, heads):
    """Full MultiHead_Attention_Block3 forward: one fused pallas_call."""
    B, S, E = x.shape
    wmat, bvec = pack_layer_params(all_params)
    x2d = x.reshape(B * S, E)                   # free host-side reshape

    out2d = pl.pallas_call(
        functools.partial(stacked_decoder_kernel, heads=heads, batch=B),
        out_shape=jax.ShapeDtypeStruct((B * S, E), x.dtype),
        in_specs=[pl.BlockSpec(memory_space=pltpu.MemorySpace.VMEM)] * 3,
        out_specs=pl.BlockSpec(memory_space=pltpu.MemorySpace.VMEM),
        scratch_shapes=[pltpu.VMEM((B * S, E), jnp.float32)],
    )(x2d, wmat, bvec)
    return out2d.reshape(B, S, E)


def init_decoder_block_params(key, embeddsize):
    """Deterministic synthetic parameters for one Decoder_Block_2 (natural layout)."""
    E = embeddsize
    H = 4 * E
    ks = jax.random.split(key, 16)
    se = 1.0 / jnp.sqrt(jnp.float32(E))
    sh = 1.0 / jnp.sqrt(jnp.float32(H))
    wq = jax.random.normal(ks[0], (E, E), jnp.float32) * se
    wk = jax.random.normal(ks[1], (E, E), jnp.float32) * se
    wv = jax.random.normal(ks[2], (E, E), jnp.float32) * se
    wo = jax.random.normal(ks[3], (E, E), jnp.float32) * se
    w1 = jax.random.normal(ks[4], (E, H), jnp.float32) * se
    w2 = jax.random.normal(ks[5], (H, E), jnp.float32) * sh
    bq = jax.random.normal(ks[6], (E,), jnp.float32) * 0.1
    bk = jax.random.normal(ks[7], (E,), jnp.float32) * 0.1
    bv = jax.random.normal(ks[8], (E,), jnp.float32) * 0.1
    bo = jax.random.normal(ks[9], (E,), jnp.float32) * 0.1
    b1 = jax.random.normal(ks[10], (H,), jnp.float32) * 0.1
    b2 = jax.random.normal(ks[11], (E,), jnp.float32) * 0.1
    g1 = 1.0 + 0.1 * jax.random.normal(ks[12], (E,), jnp.float32)
    be1 = jax.random.normal(ks[13], (E,), jnp.float32) * 0.1
    g2 = 1.0 + 0.1 * jax.random.normal(ks[14], (E,), jnp.float32)
    be2 = jax.random.normal(ks[15], (E,), jnp.float32) * 0.1
    return (wq, bq, wk, bk, wv, bv, wo, bo, g1, be1, w1, b1, w2, b2, g2, be2)


# ------------------------------ reference (JAX) --------------------------------

def _ref_block(x, params, heads):
    (wq, bq, wk, bk, wv, bv, wo, bo, g1, be1, w1, b1, w2, b2, g2, be2) = params
    B, S, E = x.shape
    dh = E // heads

    def ln(h, g, be):
        mu = jnp.mean(h, axis=-1, keepdims=True)
        var = jnp.mean((h - mu) ** 2, axis=-1, keepdims=True)
        return (h - mu) * lax.rsqrt(var + 1e-5) * g + be

    q = x @ wq + bq
    k = x @ wk + bk
    v = x @ wv + bv
    qh = q.reshape(B, S, heads, dh).transpose(0, 2, 1, 3)
    kh = k.reshape(B, S, heads, dh).transpose(0, 2, 1, 3)
    vh = v.reshape(B, S, heads, dh).transpose(0, 2, 1, 3)
    s = jnp.einsum("bhqd,bhkd->bhqk", qh, kh) / jnp.sqrt(jnp.float32(dh))
    p = jax.nn.softmax(s, axis=-1)
    o = jnp.einsum("bhqk,bhkd->bhqd", p, vh).transpose(0, 2, 1, 3).reshape(B, S, E)
    attn = o @ wo + bo
    h1 = ln(attn + x, g1, be1)
    f = jnp.maximum(h1 @ w1 + b1, 0.0) @ w2 + b2
    return ln(f + h1, g2, be2)


def _ref_model(x, all_params, heads):
    for params in all_params:
        x = _ref_block(x, params, heads)
    return x


# ---------------------------------- main ---------------------------------------

if __name__ == "__main__":
    layers = 2
    heads = 4
    embeddsize = 32
    # dropout = 0.1 -> identity at eval time (not applied)

    B, S = 2, 8
    key = jax.random.PRNGKey(0)
    kx, kp = jax.random.split(key)
    x = jax.random.normal(kx, (B, S, embeddsize), jnp.float32)

    layer_keys = jax.random.split(kp, layers)
    all_params = [init_decoder_block_params(layer_keys[i], embeddsize)
                  for i in range(layers)]

    out = multihead_attention_block3(x, all_params, heads)
    out = jax.block_until_ready(out)

    ref = _ref_model(x, all_params, heads)
    assert out.shape == (B, S, embeddsize)
    # Exact softmax (no approx reciprocal): kernel tracks the f32 reference to ~1e-6;
    # 1e-3 tolerance comfortably passes while still catching any structural bug.
    assert jnp.allclose(out, ref, atol=1e-3, rtol=1e-3), "mismatch vs JAX reference"

    print("KERNEL_OK")
</pallas_src>

<mosaic_0001>
module attributes {stable_mosaic.version = 11 : i64} {
  func.func @stacked_decoder_kernel(%arg0: memref<16x32xf32, #tpu.memory_space<vmem>>, %arg1: memref<2x32x416xf32, #tpu.memory_space<vmem>>, %arg2: memref<2x4x128xf32, #tpu.memory_space<vmem>>, %arg3: memref<16x32xf32, #tpu.memory_space<vmem>>, %arg4: memref<16x32xf32, #tpu.memory_space<vmem>>) attributes {dimension_semantics = [], scalar_prefetch = 0 : i64, scratch_operands = 1 : i64, tpu.core_type = #tpu.core_type<tc>} {
    %c0 = arith.constant 0 : index
    %c0_0 = arith.constant 0 : index
    %0 = vector.load %arg0[%c0, %c0_0] : memref<16x32xf32, #tpu.memory_space<vmem>>, vector<16x32xf32>
    %c0_1 = arith.constant 0 : index
    %c0_2 = arith.constant 0 : index
    %c0_3 = arith.constant 0 : index
    %1 = vector.load %arg1[%c0_1, %c0_2, %c0_3] : memref<2x32x416xf32, #tpu.memory_space<vmem>>, vector<1x32x416xf32>
    %2 = vector.shape_cast %1 : vector<1x32x416xf32> to vector<32x416xf32>
    %c0_4 = arith.constant 0 : index
    %c0_5 = arith.constant 0 : index
    %c0_6 = arith.constant 0 : index
    %3 = vector.load %arg2[%c0_4, %c0_5, %c0_6] : memref<2x4x128xf32, #tpu.memory_space<vmem>>, vector<1x4x128xf32>
    %4 = vector.shape_cast %3 : vector<1x4x128xf32> to vector<4x128xf32>
    %5 = vector.extract_strided_slice %2 {offsets = [0, 0], sizes = [32, 128], strides = [1, 1]} : vector<32x416xf32> to vector<32x128xf32>
    %6 = vector.extract_strided_slice %2 {offsets = [0, 128], sizes = [32, 128], strides = [1, 1]} : vector<32x416xf32> to vector<32x128xf32>
    %7 = vector.extract_strided_slice %2 {offsets = [0, 256], sizes = [32, 128], strides = [1, 1]} : vector<32x416xf32> to vector<32x128xf32>
    %8 = vector.extract_strided_slice %2 {offsets = [0, 384], sizes = [32, 32], strides = [1, 1]} : vector<32x416xf32> to vector<32x32xf32>
    %9 = vector.extract_strided_slice %4 {offsets = [0, 0], sizes = [1, 96], strides = [1, 1]} : vector<4x128xf32> to vector<1x96xf32>
    %10 = vector.extract_strided_slice %4 {offsets = [0, 96], sizes = [1, 32], strides = [1, 1]} : vector<4x128xf32> to vector<1x32xf32>
    %11 = vector.extract_strided_slice %4 {offsets = [1, 0], sizes = [1, 128], strides = [1, 1]} : vector<4x128xf32> to vector<1x128xf32>
    %12 = vector.extract_strided_slice %4 {offsets = [2, 0], sizes = [1, 32], strides = [1, 1]} : vector<4x128xf32> to vector<1x32xf32>
    %13 = vector.extract_strided_slice %4 {offsets = [2, 32], sizes = [1, 32], strides = [1, 1]} : vector<4x128xf32> to vector<1x32xf32>
    %14 = vector.extract_strided_slice %4 {offsets = [2, 64], sizes = [1, 32], strides = [1, 1]} : vector<4x128xf32> to vector<1x32xf32>
    %15 = vector.extract_strided_slice %4 {offsets = [2, 96], sizes = [1, 32], strides = [1, 1]} : vector<4x128xf32> to vector<1x32xf32>
    %16 = vector.extract_strided_slice %4 {offsets = [3, 0], sizes = [1, 32], strides = [1, 1]} : vector<4x128xf32> to vector<1x32xf32>
    %cst = arith.constant dense<0.000000e+00> : vector<16x128xf32>
    %17 = tpu.matmul %0, %5, %cst {dimension_numbers = #tpu.dot_dimension_numbers<[1], [0], [0], [1], [0, 0, 1, 1], [], []>} : vector<16x32xf32>, vector<32x128xf32>, vector<16x128xf32> -> vector<16x128xf32>
    %18 = vector.extract_strided_slice %17 {offsets = [0, 0], sizes = [16, 96], strides = [1, 1]} : vector<16x128xf32> to vector<16x96xf32>
    %19 = vector.broadcast %9 : vector<1x96xf32> to vector<16x96xf32>
    %20 = arith.addf %18, %19 : vector<16x96xf32>
    %21 = vector.extract_strided_slice %20 {offsets = [0, 0], sizes = [8, 8], strides = [1, 1]} : vector<16x96xf32> to vector<8x8xf32>
    %22 = vector.extract_strided_slice %20 {offsets = [0, 32], sizes = [8, 8], strides = [1, 1]} : vector<16x96xf32> to vector<8x8xf32>
    %23 = vector.extract_strided_slice %20 {offsets = [0, 64], sizes = [8, 8], strides = [1, 1]} : vector<16x96xf32> to vector<8x8xf32>
    %cst_7 = arith.constant dense<0.000000e+00> : vector<8x8xf32>
    %24 = tpu.matmul %21, %22, %cst_7 {dimension_numbers = #tpu.dot_dimension_numbers<[1], [1], [0], [0], [0, 0, 1, 0], [], []>} : vector<8x8xf32>, vector<8x8xf32>, vector<8x8xf32> -> vector<8x8xf32>
    %cst_8 = arith.constant 0.353553385 : f32
    %25 = vector.broadcast %cst_8 : f32 to vector<8x8xf32>
    %26 = arith.mulf %24, %25 : vector<8x8xf32>
    %cst_9 = arith.constant dense<0xFF800000> : vector<8xf32>
    %27 = vector.multi_reduction <maximumf>, %26, %cst_9 [1] : vector<8x8xf32> to vector<8xf32>
    %28 = vector.shape_cast %27 : vector<8xf32> to vector<8x1xf32>
    %29 = vector.broadcast %28 : vector<8x1xf32> to vector<8x8xf32>
    %30 = arith.subf %26, %29 : vector<8x8xf32>
    %31 = math.exp %30 : vector<8x8xf32>
    %cst_10 = arith.constant dense<0.000000e+00> : vector<8xf32>
    %32 = vector.multi_reduction <add>, %31, %cst_10 [1] : vector<8x8xf32> to vector<8xf32>
    %33 = vector.shape_cast %32 : vector<8xf32> to vector<8x1xf32>
    %34 = vector.broadcast %33 : vector<8x1xf32> to vector<8x8xf32>
    %35 = arith.divf %31, %34 : vector<8x8xf32>
    %cst_11 = arith.constant dense<0.000000e+00> : vector<8x8xf32>
    %36 = tpu.matmul %35, %23, %cst_11 {dimension_numbers = #tpu.dot_dimension_numbers<[1], [0], [0], [1], [0, 0, 1, 1], [], []>} : vector<8x8xf32>, vector<8x8xf32>, vector<8x8xf32> -> vector<8x8xf32>
    %c0_12 = arith.constant 0 : index
    %c0_13 = arith.constant 0 : index
    %37 = vector.load %arg4[%c0_12, %c0_13] : memref<16x32xf32, #tpu.memory_space<vmem>>, vector<8x8xf32>
    tpu.vector_store %arg4[%c0_12, %c0_13], %36 {strides = array<i32>} : memref<16x32xf32, #tpu.memory_space<vmem>>, vector<8x8xf32>,
    %38 = vector.extract_strided_slice %20 {offsets = [0, 8], sizes = [8, 8], strides = [1, 1]} : vector<16x96xf32> to vector<8x8xf32>
    %39 = vector.extract_strided_slice %20 {offsets = [0, 40], sizes = [8, 8], strides = [1, 1]} : vector<16x96xf32> to vector<8x8xf32>
    %40 = vector.extract_strided_slice %20 {offsets = [0, 72], sizes = [8, 8], strides = [1, 1]} : vector<16x96xf32> to vector<8x8xf32>
    %cst_14 = arith.constant dense<0.000000e+00> : vector<8x8xf32>
    %41 = tpu.matmul %38, %39, %cst_14 {dimension_numbers = #tpu.dot_dimension_numbers<[1], [1], [0], [0], [0, 0, 1, 0], [], []>} : vector<8x8xf32>, vector<8x8xf32>, vector<8x8xf32> -> vector<8x8xf32>
    %cst_15 = arith.constant 0.353553385 : f32
    %42 = vector.broadcast %cst_15 : f32 to vector<8x8xf32>
    %43 = arith.mulf %41, %42 : vector<8x8xf32>
    %cst_16 = arith.constant dense<0xFF800000> : vector<8xf32>
    %44 = vector.multi_reduction <maximumf>, %43, %cst_16 [1] : vector<8x8xf32> to vector<8xf32>
    %45 = vector.shape_cast %44 : vector<8xf32> to vector<8x1xf32>
    %46 = vector.broadcast %45 : vector<8x1xf32> to vector<8x8xf32>
    %47 = arith.subf %43, %46 : vector<8x8xf32>
    %48 = math.exp %47 : vector<8x8xf32>
    %cst_17 = arith.constant dense<0.000000e+00> : vector<8xf32>
    %49 = vector.multi_reduction <add>, %48, %cst_17 [1] : vector<8x8xf32> to vector<8xf32>
    %50 = vector.shape_cast %49 : vector<8xf32> to vector<8x1xf32>
    %51 = vector.broadcast %50 : vector<8x1xf32> to vector<8x8xf32>
    %52 = arith.divf %48, %51 : vector<8x8xf32>
    %cst_18 = arith.constant dense<0.000000e+00> : vector<8x8xf32>
    %53 = tpu.matmul %52, %40, %cst_18 {dimension_numbers = #tpu.dot_dimension_numbers<[1], [0], [0], [1], [0, 0, 1, 1], [], []>} : vector<8x8xf32>, vector<8x8xf32>, vector<8x8xf32> -> vector<8x8xf32>
    %c0_19 = arith.constant 0 : index
    %c8 = arith.constant 8 : index
    %54 = vector.load %arg4[%c0_19, %c8] : memref<16x32xf32, #tpu.memory_space<vmem>>, vector<8x8xf32>
    tpu.vector_store %arg4[%c0_19, %c8], %53 {strides = array<i32>} : memref<16x32xf32, #tpu.memory_space<vmem>>, vector<8x8xf32>,
    %55 = vector.extract_strided_slice %20 {offsets = [0, 16], sizes = [8, 8], strides = [1, 1]} : vector<16x96xf32> to vector<8x8xf32>
    %56 = vector.extract_strided_slice %20 {offsets = [0, 48], sizes = [8, 8], strides = [1, 1]} : vector<16x96xf32> to vector<8x8xf32>
    %57 = vector.extract_strided_slice %20 {offsets = [0, 80], sizes = [8, 8], strides = [1, 1]} : vector<16x96xf32> to vector<8x8xf32>
    %cst_20 = arith.constant dense<0.000000e+00> : vector<8x8xf32>
    %58 = tpu.matmul %55, %56, %cst_20 {dimension_numbers = #tpu.dot_dimension_numbers<[1], [1], [0], [0], [0, 0, 1, 0], [], []>} : vector<8x8xf32>, vector<8x8xf32>, vector<8x8xf32> -> vector<8x8xf32>
    %cst_21 = arith.constant 0.353553385 : f32
    %59 = vector.broadcast %cst_21 : f32 to vector<8x8xf32>
    %60 = arith.mulf %58, %59 : vector<8x8xf32>
    %cst_22 = arith.constant dense<0xFF800000> : vector<8xf32>
    %61 = vector.multi_reduction <maximumf>, %60, %cst_22 [1] : vector<8x8xf32> to vector<8xf32>
    %62 = vector.shape_cast %61 : vector<8xf32> to vector<8x1xf32>
    %63 = vector.broadcast %62 : vector<8x1xf32> to vector<8x8xf32>
    %64 = arith.subf %60, %63 : vector<8x8xf32>
    %65 = math.exp %64 : vector<8x8xf32>
    %cst_23 = arith.constant dense<0.000000e+00> : vector<8xf32>
    %66 = vector.multi_reduction <add>, %65, %cst_23 [1] : vector<8x8xf32> to vector<8xf32>
    %67 = vector.shape_cast %66 : vector<8xf32> to vector<8x1xf32>
    %68 = vector.broadcast %67 : vector<8x1xf32> to vector<8x8xf32>
    %69 = arith.divf %65, %68 : vector<8x8xf32>
    %cst_24 = arith.constant dense<0.000000e+00> : vector<8x8xf32>
    %70 = tpu.matmul %69, %57, %cst_24 {dimension_numbers = #tpu.dot_dimension_numbers<[1], [0], [0], [1], [0, 0, 1, 1], [], []>} : vector<8x8xf32>, vector<8x8xf32>, vector<8x8xf32> -> vector<8x8xf32>
    %c0_25 = arith.constant 0 : index
    %c16 = arith.constant 16 : index
    %71 = vector.load %arg4[%c0_25, %c16] : memref<16x32xf32, #tpu.memory_space<vmem>>, vector<8x8xf32>
    tpu.vector_store %arg4[%c0_25, %c16], %70 {strides = array<i32>} : memref<16x32xf32, #tpu.memory_space<vmem>>, vector<8x8xf32>,
    %72 = vector.extract_strided_slice %20 {offsets = [0, 24], sizes = [8, 8], strides = [1, 1]} : vector<16x96xf32> to vector<8x8xf32>
    %73 = vector.extract_strided_slice %20 {offsets = [0, 56], sizes = [8, 8], strides = [1, 1]} : vector<16x96xf32> to vector<8x8xf32>
    %74 = vector.extract_strided_slice %20 {offsets = [0, 88], sizes = [8, 8], strides = [1, 1]} : vector<16x96xf32> to vector<8x8xf32>
    %cst_26 = arith.constant dense<0.000000e+00> : vector<8x8xf32>
    %75 = tpu.matmul %72, %73, %cst_26 {dimension_numbers = #tpu.dot_dimension_numbers<[1], [1], [0], [0], [0, 0, 1, 0], [], []>} : vector<8x8xf32>, vector<8x8xf32>, vector<8x8xf32> -> vector<8x8xf32>
    %cst_27 = arith.constant 0.353553385 : f32
    %76 = vector.broadcast %cst_27 : f32 to vector<8x8xf32>
    %77 = arith.mulf %75, %76 : vector<8x8xf32>
    %cst_28 = arith.constant dense<0xFF800000> : vector<8xf32>
    %78 = vector.multi_reduction <maximumf>, %77, %cst_28 [1] : vector<8x8xf32> to vector<8xf32>
    %79 = vector.shape_cast %78 : vector<8xf32> to vector<8x1xf32>
    %80 = vector.broadcast %79 : vector<8x1xf32> to vector<8x8xf32>
    %81 = arith.subf %77, %80 : vector<8x8xf32>
    %82 = math.exp %81 : vector<8x8xf32>
    %cst_29 = arith.constant dense<0.000000e+00> : vector<8xf32>
    %83 = vector.multi_reduction <add>, %82, %cst_29 [1] : vector<8x8xf32> to vector<8xf32>
    %84 = vector.shape_cast %83 : vector<8xf32> to vector<8x1xf32>
    %85 = vector.broadcast %84 : vector<8x1xf32> to vector<8x8xf32>
    %86 = arith.divf %82, %85 : vector<8x8xf32>
    %cst_30 = arith.constant dense<0.000000e+00> : vector<8x8xf32>
    %87 = tpu.matmul %86, %74, %cst_30 {dimension_numbers = #tpu.dot_dimension_numbers<[1], [0], [0], [1], [0, 0, 1, 1], [], []>} : vector<8x8xf32>, vector<8x8xf32>, vector<8x8xf32> -> vector<8x8xf32>
    %c0_31 = arith.constant 0 : index
    %c24 = arith.constant 24 : index
    %88 = vector.load %arg4[%c0_31, %c24] : memref<16x32xf32, #tpu.memory_space<vmem>>, vector<8x8xf32>
    tpu.vector_store %arg4[%c0_31, %c24], %87 {strides = array<i32>} : memref<16x32xf32, #tpu.memory_space<vmem>>, vector<8x8xf32>,
    %89 = vector.extract_strided_slice %20 {offsets = [8, 0], sizes = [8, 8], strides = [1, 1]} : vector<16x96xf32> to vector<8x8xf32>
    %90 = vector.extract_strided_slice %20 {offsets = [8, 32], sizes = [8, 8], strides = [1, 1]} : vector<16x96xf32> to vector<8x8xf32>
    %91 = vector.extract_strided_slice %20 {offsets = [8, 64], sizes = [8, 8], strides = [1, 1]} : vector<16x96xf32> to vector<8x8xf32>
    %cst_32 = arith.constant dense<0.000000e+00> : vector<8x8xf32>
    %92 = tpu.matmul %89, %90, %cst_32 {dimension_numbers = #tpu.dot_dimension_numbers<[1], [1], [0], [0], [0, 0, 1, 0], [], []>} : vector<8x8xf32>, vector<8x8xf32>, vector<8x8xf32> -> vector<8x8xf32>
    %cst_33 = arith.constant 0.353553385 : f32
    %93 = vector.broadcast %cst_33 : f32 to vector<8x8xf32>
    %94 = arith.mulf %92, %93 : vector<8x8xf32>
    %cst_34 = arith.constant dense<0xFF800000> : vector<8xf32>
    %95 = vector.multi_reduction <maximumf>, %94, %cst_34 [1] : vector<8x8xf32> to vector<8xf32>
    %96 = vector.shape_cast %95 : vector<8xf32> to vector<8x1xf32>
    %97 = vector.broadcast %96 : vector<8x1xf32> to vector<8x8xf32>
    %98 = arith.subf %94, %97 : vector<8x8xf32>
    %99 = math.exp %98 : vector<8x8xf32>
    %cst_35 = arith.constant dense<0.000000e+00> : vector<8xf32>
    %100 = vector.multi_reduction <add>, %99, %cst_35 [1] : vector<8x8xf32> to vector<8xf32>
    %101 = vector.shape_cast %100 : vector<8xf32> to vector<8x1xf32>
    %102 = vector.broadcast %101 : vector<8x1xf32> to vector<8x8xf32>
    %103 = arith.divf %99, %102 : vector<8x8xf32>
    %cst_36 = arith.constant dense<0.000000e+00> : vector<8x8xf32>
    %104 = tpu.matmul %103, %91, %cst_36 {dimension_numbers = #tpu.dot_dimension_numbers<[1], [0], [0], [1], [0, 0, 1, 1], [], []>} : vector<8x8xf32>, vector<8x8xf32>, vector<8x8xf32> -> vector<8x8xf32>
    %c8_37 = arith.constant 8 : index
    %c0_38 = arith.constant 0 : index
    %105 = vector.load %arg4[%c8_37, %c0_38] : memref<16x32xf32, #tpu.memory_space<vmem>>, vector<8x8xf32>
    tpu.vector_store %arg4[%c8_37, %c0_38], %104 {strides = array<i32>} : memref<16x32xf32, #tpu.memory_space<vmem>>, vector<8x8xf32>,
    %106 = vector.extract_strided_slice %20 {offsets = [8, 8], sizes = [8, 8], strides = [1, 1]} : vector<16x96xf32> to vector<8x8xf32>
    %107 = vector.extract_strided_slice %20 {offsets = [8, 40], sizes = [8, 8], strides = [1, 1]} : vector<16x96xf32> to vector<8x8xf32>
    %108 = vector.extract_strided_slice %20 {offsets = [8, 72], sizes = [8, 8], strides = [1, 1]} : vector<16x96xf32> to vector<8x8xf32>
    %cst_39 = arith.constant dense<0.000000e+00> : vector<8x8xf32>
    %109 = tpu.matmul %106, %107, %cst_39 {dimension_numbers = #tpu.dot_dimension_numbers<[1], [1], [0], [0], [0, 0, 1, 0], [], []>} : vector<8x8xf32>, vector<8x8xf32>, vector<8x8xf32> -> vector<8x8xf32>
    %cst_40 = arith.constant 0.353553385 : f32
    %110 = vector.broadcast %cst_40 : f32 to vector<8x8xf32>
    %111 = arith.mulf %109, %110 : vector<8x8xf32>
    %cst_41 = arith.constant dense<0xFF800000> : vector<8xf32>
    %112 = vector.multi_reduction <maximumf>, %111, %cst_41 [1] : vector<8x8xf32> to vector<8xf32>
    %113 = vector.shape_cast %112 : vector<8xf32> to vector<8x1xf32>
    %114 = vector.broadcast %113 : vector<8x1xf32> to vector<8x8xf32>
    %115 = arith.subf %111, %114 : vector<8x8xf32>
    %116 = math.exp %115 : vector<8x8xf32>
    %cst_42 = arith.constant dense<0.000000e+00> : vector<8xf32>
    %117 = vector.multi_reduction <add>, %116, %cst_42 [1] : vector<8x8xf32> to vector<8xf32>
    %118 = vector.shape_cast %117 : vector<8xf32> to vector<8x1xf32>
    %119 = vector.broadcast %118 : vector<8x1xf32> to vector<8x8xf32>
    %120 = arith.divf %116, %119 : vector<8x8xf32>
    %cst_43 = arith.constant dense<0.000000e+00> : vector<8x8xf32>
    %121 = tpu.matmul %120, %108, %cst_43 {dimension_numbers = #tpu.dot_dimension_numbers<[1], [0], [0], [1], [0, 0, 1, 1], [], []>} : vector<8x8xf32>, vector<8x8xf32>, vector<8x8xf32> -> vector<8x8xf32>
    %c8_44 = arith.constant 8 : index
    %c8_45 = arith.constant 8 : index
    %122 = vector.load %arg4[%c8_44, %c8_45] : memref<16x32xf32, #tpu.memory_space<vmem>>, vector<8x8xf32>
    tpu.vector_store %arg4[%c8_44, %c8_45], %121 {strides = array<i32>} : memref<16x32xf32, #tpu.memory_space<vmem>>, vector<8x8xf32>,
    %123 = vector.extract_strided_slice %20 {offsets = [8, 16], sizes = [8, 8], strides = [1, 1]} : vector<16x96xf32> to vector<8x8xf32>
    %124 = vector.extract_strided_slice %20 {offsets = [8, 48], sizes = [8, 8], strides = [1, 1]} : vector<16x96xf32> to vector<8x8xf32>
    %125 = vector.extract_strided_slice %20 {offsets = [8, 80], sizes = [8, 8], strides = [1, 1]} : vector<16x96xf32> to vector<8x8xf32>
    %cst_46 = arith.constant dense<0.000000e+00> : vector<8x8xf32>
    %126 = tpu.matmul %123, %124, %cst_46 {dimension_numbers = #tpu.dot_dimension_numbers<[1], [1], [0], [0], [0, 0, 1, 0], [], []>} : vector<8x8xf32>, vector<8x8xf32>, vector<8x8xf32> -> vector<8x8xf32>
    %cst_47 = arith.constant 0.353553385 : f32
    %127 = vector.broadcast %cst_47 : f32 to vector<8x8xf32>
    %128 = arith.mulf %126, %127 : vector<8x8xf32>
    %cst_48 = arith.constant dense<0xFF800000> : vector<8xf32>
    %129 = vector.multi_reduction <maximumf>, %128, %cst_48 [1] : vector<8x8xf32> to vector<8xf32>
    %130 = vector.shape_cast %129 : vector<8xf32> to vector<8x1xf32>
    %131 = vector.broadcast %130 : vector<8x1xf32> to vector<8x8xf32>
    %132 = arith.subf %128, %131 : vector<8x8xf32>
    %133 = math.exp %132 : vector<8x8xf32>
    %cst_49 = arith.constant dense<0.000000e+00> : vector<8xf32>
    %134 = vector.multi_reduction <add>, %133, %cst_49 [1] : vector<8x8xf32> to vector<8xf32>
    %135 = vector.shape_cast %134 : vector<8xf32> to vector<8x1xf32>
    %136 = vector.broadcast %135 : vector<8x1xf32> to vector<8x8xf32>
    %137 = arith.divf %133, %136 : vector<8x8xf32>
    %cst_50 = arith.constant dense<0.000000e+00> : vector<8x8xf32>
    %138 = tpu.matmul %137, %125, %cst_50 {dimension_numbers = #tpu.dot_dimension_numbers<[1], [0], [0], [1], [0, 0, 1, 1], [], []>} : vector<8x8xf32>, vector<8x8xf32>, vector<8x8xf32> -> vector<8x8xf32>
    %c8_51 = arith.constant 8 : index
    %c16_52 = arith.constant 16 : index
    %139 = vector.load %arg4[%c8_51, %c16_52] : memref<16x32xf32, #tpu.memory_space<vmem>>, vector<8x8xf32>
    tpu.vector_store %arg4[%c8_51, %c16_52], %138 {strides = array<i32>} : memref<16x32xf32, #tpu.memory_space<vmem>>, vector<8x8xf32>,
    %140 = vector.extract_strided_slice %20 {offsets = [8, 24], sizes = [8, 8], strides = [1, 1]} : vector<16x96xf32> to vector<8x8xf32>
    %141 = vector.extract_strided_slice %20 {offsets = [8, 56], sizes = [8, 8], strides = [1, 1]} : vector<16x96xf32> to vector<8x8xf32>
    %142 = vector.extract_strided_slice %20 {offsets = [8, 88], sizes = [8, 8], strides = [1, 1]} : vector<16x96xf32> to vector<8x8xf32>
    %cst_53 = arith.constant dense<0.000000e+00> : vector<8x8xf32>
    %143 = tpu.matmul %140, %141, %cst_53 {dimension_numbers = #tpu.dot_dimension_numbers<[1], [1], [0], [0], [0, 0, 1, 0], [], []>} : vector<8x8xf32>, vector<8x8xf32>, vector<8x8xf32> -> vector<8x8xf32>
    %cst_54 = arith.constant 0.353553385 : f32
    %144 = vector.broadcast %cst_54 : f32 to vector<8x8xf32>
    %145 = arith.mulf %143, %144 : vector<8x8xf32>
    %cst_55 = arith.constant dense<0xFF800000> : vector<8xf32>
    %146 = vector.multi_reduction <maximumf>, %145, %cst_55 [1] : vector<8x8xf32> to vector<8xf32>
    %147 = vector.shape_cast %146 : vector<8xf32> to vector<8x1xf32>
    %148 = vector.broadcast %147 : vector<8x1xf32> to vector<8x8xf32>
    %149 = arith.subf %145, %148 : vector<8x8xf32>
    %150 = math.exp %149 : vector<8x8xf32>
    %cst_56 = arith.constant dense<0.000000e+00> : vector<8xf32>
    %151 = vector.multi_reduction <add>, %150, %cst_56 [1] : vector<8x8xf32> to vector<8xf32>
    %152 = vector.shape_cast %151 : vector<8xf32> to vector<8x1xf32>
    %153 = vector.broadcast %152 : vector<8x1xf32> to vector<8x8xf32>
    %154 = arith.divf %150, %153 : vector<8x8xf32>
    %cst_57 = arith.constant dense<0.000000e+00> : vector<8x8xf32>
    %155 = tpu.matmul %154, %142, %cst_57 {dimension_numbers = #tpu.dot_dimension_numbers<[1], [0], [0], [1], [0, 0, 1, 1], [], []>} : vector<8x8xf32>, vector<8x8xf32>, vector<8x8xf32> -> vector<8x8xf32>
    %c8_58 = arith.constant 8 : index
    %c24_59 = arith.constant 24 : index
    %156 = vector.load %arg4[%c8_58, %c24_59] : memref<16x32xf32, #tpu.memory_space<vmem>>, vector<8x8xf32>
    tpu.vector_store %arg4[%c8_58, %c24_59], %155 {strides = array<i32>} : memref<16x32xf32, #tpu.memory_space<vmem>>, vector<8x8xf32>,
    %c0_60 = arith.constant 0 : index
    %c0_61 = arith.constant 0 : index
    %157 = vector.load %arg4[%c0_60, %c0_61] : memref<16x32xf32, #tpu.memory_space<vmem>>, vector<16x32xf32>
    %cst_62 = arith.constant dense<0.000000e+00> : vector<16x32xf32>
    %158 = tpu.matmul %157, %8, %cst_62 {dimension_numbers = #tpu.dot_dimension_numbers<[1], [0], [0], [1], [0, 0, 1, 1], [], []>} : vector<16x32xf32>, vector<32x32xf32>, vector<16x32xf32> -> vector<16x32xf32>
    %159 = vector.broadcast %10 : vector<1x32xf32> to vector<16x32xf32>
    %160 = arith.addf %158, %159 : vector<16x32xf32>
    %161 = arith.addf %160, %0 : vector<16x32xf32>
    %cst_63 = arith.constant dense<0.000000e+00> : vector<16xf32>
    %162 = vector.multi_reduction <add>, %161, %cst_63 [1] : vector<16x32xf32> to vector<16xf32>
    %163 = vector.shape_cast %162 : vector<16xf32> to vector<16x1xf32>
    %cst_64 = arith.constant 3.200000e+01 : f32
    %164 = vector.broadcast %cst_64 : f32 to vector<16x1xf32>
    %165 = arith.divf %163, %164 : vector<16x1xf32>
    %166 = vector.broadcast %165 : vector<16x1xf32> to vector<16x32xf32>
    %167 = arith.subf %161, %166 : vector<16x32xf32>
    %168 = arith.mulf %167, %167 : vector<16x32xf32>
    %cst_65 = arith.constant dense<0.000000e+00> : vector<16xf32>
    %169 = vector.multi_reduction <add>, %168, %cst_65 [1] : vector<16x32xf32> to vector<16xf32>
    %170 = vector.shape_cast %169 : vector<16xf32> to vector<16x1xf32>
    %cst_66 = arith.constant 3.200000e+01 : f32
    %171 = vector.broadcast %cst_66 : f32 to vector<16x1xf32>
    %172 = arith.divf %170, %171 : vector<16x1xf32>
    %173 = vector.broadcast %165 : vector<16x1xf32> to vector<16x32xf32>
    %174 = arith.subf %161, %173 : vector<16x32xf32>
    %cst_67 = arith.constant 9.99999974E-6 : f32
    %175 = vector.broadcast %cst_67 : f32 to vector<16x1xf32>
    %176 = arith.addf %172, %175 : vector<16x1xf32>
    %177 = math.rsqrt %176 : vector<16x1xf32>
    %178 = vector.broadcast %177 : vector<16x1xf32> to vector<16x32xf32>
    %179 = arith.mulf %174, %178 : vector<16x32xf32>
    %180 = vector.broadcast %12 : vector<1x32xf32> to vector<16x32xf32>
    %181 = arith.mulf %179, %180 : vector<16x32xf32>
    %182 = vector.broadcast %13 : vector<1x32xf32> to vector<16x32xf32>
    %183 = arith.addf %181, %182 : vector<16x32xf32>
    %cst_68 = arith.constant dense<0.000000e+00> : vector<16x128xf32>
    %184 = tpu.matmul %183, %6, %cst_68 {dimension_numbers = #tpu.dot_dimension_numbers<[1], [0], [0], [1], [0, 0, 1, 1], [], []>} : vector<16x32xf32>, vector<32x128xf32>, vector<16x128xf32> -> vector<16x128xf32>
    %185 = vector.broadcast %11 : vector<1x128xf32> to vector<16x128xf32>
    %186 = arith.addf %184, %185 : vector<16x128xf32>
    %cst_69 = arith.constant 0.000000e+00 : f32
    %187 = vector.broadcast %cst_69 : f32 to vector<16x128xf32>
    %188 = arith.maximumf %186, %187 : vector<16x128xf32>
    %cst_70 = arith.constant dense<0.000000e+00> : vector<16x32xf32>
    %189 = tpu.matmul %188, %7, %cst_70 {dimension_numbers = #tpu.dot_dimension_numbers<[1], [1], [0], [0], [0, 0, 1, 0], [], []>} : vector<16x128xf32>, vector<32x128xf32>, vector<16x32xf32> -> vector<16x32xf32>
    %190 = vector.broadcast %16 : vector<1x32xf32> to vector<16x32xf32>
    %191 = arith.addf %189, %190 : vector<16x32xf32>
    %192 = arith.addf %191, %183 : vector<16x32xf32>
    %cst_71 = arith.constant dense<0.000000e+00> : vector<16xf32>
    %193 = vector.multi_reduction <add>, %192, %cst_71 [1] : vector<16x32xf32> to vector<16xf32>
    %194 = vector.shape_cast %193 : vector<16xf32> to vector<16x1xf32>
    %cst_72 = arith.constant 3.200000e+01 : f32
    %195 = vector.broadcast %cst_72 : f32 to vector<16x1xf32>
    %196 = arith.divf %194, %195 : vector<16x1xf32>
    %197 = vector.broadcast %196 : vector<16x1xf32> to vector<16x32xf32>
    %198 = arith.subf %192, %197 : vector<16x32xf32>
    %199 = arith.mulf %198, %198 : vector<16x32xf32>
    %cst_73 = arith.constant dense<0.000000e+00> : vector<16xf32>
    %200 = vector.multi_reduction <add>, %199, %cst_73 [1] : vector<16x32xf32> to vector<16xf32>
    %201 = vector.shape_cast %200 : vector<16xf32> to vector<16x1xf32>
    %cst_74 = arith.constant 3.200000e+01 : f32
    %202 = vector.broadcast %cst_74 : f32 to vector<16x1xf32>
    %203 = arith.divf %201, %202 : vector<16x1xf32>
    %204 = vector.broadcast %196 : vector<16x1xf32> to vector<16x32xf32>
    %205 = arith.subf %192, %204 : vector<16x32xf32>
    %cst_75 = arith.constant 9.99999974E-6 : f32
    %206 = vector.broadcast %cst_75 : f32 to vector<16x1xf32>
    %207 = arith.addf %203, %206 : vector<16x1xf32>
    %208 = math.rsqrt %207 : vector<16x1xf32>
    %209 = vector.broadcast %208 : vector<16x1xf32> to vector<16x32xf32>
    %210 = arith.mulf %205, %209 : vector<16x32xf32>
    %211 = vector.broadcast %14 : vector<1x32xf32> to vector<16x32xf32>
    %212 = arith.mulf %210, %211 : vector<16x32xf32>
    %213 = vector.broadcast %15 : vector<1x32xf32> to vector<16x32xf32>
    %214 = arith.addf %212, %213 : vector<16x32xf32>
    %c1 = arith.constant 1 : index
    %c0_76 = arith.constant 0 : index
    %c0_77 = arith.constant 0 : index
    %215 = vector.load %arg1[%c1, %c0_76, %c0_77] : memref<2x32x416xf32, #tpu.memory_space<vmem>>, vector<1x32x416xf32>
    %216 = vector.shape_cast %215 : vector<1x32x416xf32> to vector<32x416xf32>
    %c1_78 = arith.constant 1 : index
    %c0_79 = arith.constant 0 : index
    %c0_80 = arith.constant 0 : index
    %217 = vector.load %arg2[%c1_78, %c0_79, %c0_80] : memref<2x4x128xf32, #tpu.memory_space<vmem>>, vector<1x4x128xf32>
    %218 = vector.shape_cast %217 : vector<1x4x128xf32> to vector<4x128xf32>
    %219 = vector.extract_strided_slice %216 {offsets = [0, 0], sizes = [32, 128], strides = [1, 1]} : vector<32x416xf32> to vector<32x128xf32>
    %220 = vector.extract_strided_slice %216 {offsets = [0, 128], sizes = [32, 128], strides = [1, 1]} : vector<32x416xf32> to vector<32x128xf32>
    %221 = vector.extract_strided_slice %216 {offsets = [0, 256], sizes = [32, 128], strides = [1, 1]} : vector<32x416xf32> to vector<32x128xf32>
    %222 = vector.extract_strided_slice %216 {offsets = [0, 384], sizes = [32, 32], strides = [1, 1]} : vector<32x416xf32> to vector<32x32xf32>
    %223 = vector.extract_strided_slice %218 {offsets = [0, 0], sizes = [1, 96], strides = [1, 1]} : vector<4x128xf32> to vector<1x96xf32>
    %224 = vector.extract_strided_slice %218 {offsets = [0, 96], sizes = [1, 32], strides = [1, 1]} : vector<4x128xf32> to vector<1x32xf32>
    %225 = vector.extract_strided_slice %218 {offsets = [1, 0], sizes = [1, 128], strides = [1, 1]} : vector<4x128xf32> to vector<1x128xf32>
    %226 = vector.extract_strided_slice %218 {offsets = [2, 0], sizes = [1, 32], strides = [1, 1]} : vector<4x128xf32> to vector<1x32xf32>
    %227 = vector.extract_strided_slice %218 {offsets = [2, 32], sizes = [1, 32], strides = [1, 1]} : vector<4x128xf32> to vector<1x32xf32>
    %228 = vector.extract_strided_slice %218 {offsets = [2, 64], sizes = [1, 32], strides = [1, 1]} : vector<4x128xf32> to vector<1x32xf32>
    %229 = vector.extract_strided_slice %218 {offsets = [2, 96], sizes = [1, 32], strides = [1, 1]} : vector<4x128xf32> to vector<1x32xf32>
    %230 = vector.extract_strided_slice %218 {offsets = [3, 0], sizes = [1, 32], strides = [1, 1]} : vector<4x128xf32> to vector<1x32xf32>
    %cst_81 = arith.constant dense<0.000000e+00> : vector<16x128xf32>
    %231 = tpu.matmul %214, %219, %cst_81 {dimension_numbers = #tpu.dot_dimension_numbers<[1], [0], [0], [1], [0, 0, 1, 1], [], []>} : vector<16x32xf32>, vector<32x128xf32>, vector<16x128xf32> -> vector<16x128xf32>
    %232 = vector.extract_strided_slice %231 {offsets = [0, 0], sizes = [16, 96], strides = [1, 1]} : vector<16x128xf32> to vector<16x96xf32>
    %233 = vector.broadcast %223 : vector<1x96xf32> to vector<16x96xf32>
    %234 = arith.addf %232, %233 : vector<16x96xf32>
    %235 = vector.extract_strided_slice %234 {offsets = [0, 0], sizes = [8, 8], strides = [1, 1]} : vector<16x96xf32> to vector<8x8xf32>
    %236 = vector.extract_strided_slice %234 {offsets = [0, 32], sizes = [8, 8], strides = [1, 1]} : vector<16x96xf32> to vector<8x8xf32>
    %237 = vector.extract_strided_slice %234 {offsets = [0, 64], sizes = [8, 8], strides = [1, 1]} : vector<16x96xf32> to vector<8x8xf32>
    %cst_82 = arith.constant dense<0.000000e+00> : vector<8x8xf32>
    %238 = tpu.matmul %235, %236, %cst_82 {dimension_numbers = #tpu.dot_dimension_numbers<[1], [1], [0], [0], [0, 0, 1, 0], [], []>} : vector<8x8xf32>, vector<8x8xf32>, vector<8x8xf32> -> vector<8x8xf32>
    %cst_83 = arith.constant 0.353553385 : f32
    %239 = vector.broadcast %cst_83 : f32 to vector<8x8xf32>
    %240 = arith.mulf %238, %239 : vector<8x8xf32>
    %cst_84 = arith.constant dense<0xFF800000> : vector<8xf32>
    %241 = vector.multi_reduction <maximumf>, %240, %cst_84 [1] : vector<8x8xf32> to vector<8xf32>
    %242 = vector.shape_cast %241 : vector<8xf32> to vector<8x1xf32>
    %243 = vector.broadcast %242 : vector<8x1xf32> to vector<8x8xf32>
    %244 = arith.subf %240, %243 : vector<8x8xf32>
    %245 = math.exp %244 : vector<8x8xf32>
    %cst_85 = arith.constant dense<0.000000e+00> : vector<8xf32>
    %246 = vector.multi_reduction <add>, %245, %cst_85 [1] : vector<8x8xf32> to vector<8xf32>
    %247 = vector.shape_cast %246 : vector<8xf32> to vector<8x1xf32>
    %248 = vector.broadcast %247 : vector<8x1xf32> to vector<8x8xf32>
    %249 = arith.divf %245, %248 : vector<8x8xf32>
    %cst_86 = arith.constant dense<0.000000e+00> : vector<8x8xf32>
    %250 = tpu.matmul %249, %237, %cst_86 {dimension_numbers = #tpu.dot_dimension_numbers<[1], [0], [0], [1], [0, 0, 1, 1], [], []>} : vector<8x8xf32>, vector<8x8xf32>, vector<8x8xf32> -> vector<8x8xf32>
    %c0_87 = arith.constant 0 : index
    %c0_88 = arith.constant 0 : index
    %251 = vector.load %arg4[%c0_87, %c0_88] : memref<16x32xf32, #tpu.memory_space<vmem>>, vector<8x8xf32>
    tpu.vector_store %arg4[%c0_87, %c0_88], %250 {strides = array<i32>} : memref<16x32xf32, #tpu.memory_space<vmem>>, vector<8x8xf32>,
    %252 = vector.extract_strided_slice %234 {offsets = [0, 8], sizes = [8, 8], strides = [1, 1]} : vector<16x96xf32> to vector<8x8xf32>
    %253 = vector.extract_strided_slice %234 {offsets = [0, 40], sizes = [8, 8], strides = [1, 1]} : vector<16x96xf32> to vector<8x8xf32>
    %254 = vector.extract_strided_slice %234 {offsets = [0, 72], sizes = [8, 8], strides = [1, 1]} : vector<16x96xf32> to vector<8x8xf32>
    %cst_89 = arith.constant dense<0.000000e+00> : vector<8x8xf32>
    %255 = tpu.matmul %252, %253, %cst_89 {dimension_numbers = #tpu.dot_dimension_numbers<[1], [1], [0], [0], [0, 0, 1, 0], [], []>} : vector<8x8xf32>, vector<8x8xf32>, vector<8x8xf32> -> vector<8x8xf32>
    %cst_90 = arith.constant 0.353553385 : f32
    %256 = vector.broadcast %cst_90 : f32 to vector<8x8xf32>
    %257 = arith.mulf %255, %256 : vector<8x8xf32>
    %cst_91 = arith.constant dense<0xFF800000> : vector<8xf32>
    %258 = vector.multi_reduction <maximumf>, %257, %cst_91 [1] : vector<8x8xf32> to vector<8xf32>
    %259 = vector.shape_cast %258 : vector<8xf32> to vector<8x1xf32>
    %260 = vector.broadcast %259 : vector<8x1xf32> to vector<8x8xf32>
    %261 = arith.subf %257, %260 : vector<8x8xf32>
    %262 = math.exp %261 : vector<8x8xf32>
    %cst_92 = arith.constant dense<0.000000e+00> : vector<8xf32>
    %263 = vector.multi_reduction <add>, %262, %cst_92 [1] : vector<8x8xf32> to vector<8xf32>
    %264 = vector.shape_cast %263 : vector<8xf32> to vector<8x1xf32>
    %265 = vector.broadcast %264 : vector<8x1xf32> to vector<8x8xf32>
    %266 = arith.divf %262, %265 : vector<8x8xf32>
    %cst_93 = arith.constant dense<0.000000e+00> : vector<8x8xf32>
    %267 = tpu.matmul %266, %254, %cst_93 {dimension_numbers = #tpu.dot_dimension_numbers<[1], [0], [0], [1], [0, 0, 1, 1], [], []>} : vector<8x8xf32>, vector<8x8xf32>, vector<8x8xf32> -> vector<8x8xf32>
    %c0_94 = arith.constant 0 : index
    %c8_95 = arith.constant 8 : index
    %268 = vector.load %arg4[%c0_94, %c8_95] : memref<16x32xf32, #tpu.memory_space<vmem>>, vector<8x8xf32>
    tpu.vector_store %arg4[%c0_94, %c8_95], %267 {strides = array<i32>} : memref<16x32xf32, #tpu.memory_space<vmem>>, vector<8x8xf32>,
    %269 = vector.extract_strided_slice %234 {offsets = [0, 16], sizes = [8, 8], strides = [1, 1]} : vector<16x96xf32> to vector<8x8xf32>
    %270 = vector.extract_strided_slice %234 {offsets = [0, 48], sizes = [8, 8], strides = [1, 1]} : vector<16x96xf32> to vector<8x8xf32>
    %271 = vector.extract_strided_slice %234 {offsets = [0, 80], sizes = [8, 8], strides = [1, 1]} : vector<16x96xf32> to vector<8x8xf32>
    %cst_96 = arith.constant dense<0.000000e+00> : vector<8x8xf32>
    %272 = tpu.matmul %269, %270, %cst_96 {dimension_numbers = #tpu.dot_dimension_numbers<[1], [1], [0], [0], [0, 0, 1, 0], [], []>} : vector<8x8xf32>, vector<8x8xf32>, vector<8x8xf32> -> vector<8x8xf32>
    %cst_97 = arith.constant 0.353553385 : f32
    %273 = vector.broadcast %cst_97 : f32 to vector<8x8xf32>
    %274 = arith.mulf %272, %273 : vector<8x8xf32>
    %cst_98 = arith.constant dense<0xFF800000> : vector<8xf32>
    %275 = vector.multi_reduction <maximumf>, %274, %cst_98 [1] : vector<8x8xf32> to vector<8xf32>
    %276 = vector.shape_cast %275 : vector<8xf32> to vector<8x1xf32>
    %277 = vector.broadcast %276 : vector<8x1xf32> to vector<8x8xf32>
    %278 = arith.subf %274, %277 : vector<8x8xf32>
    %279 = math.exp %278 : vector<8x8xf32>
    %cst_99 = arith.constant dense<0.000000e+00> : vector<8xf32>
    %280 = vector.multi_reduction <add>, %279, %cst_99 [1] : vector<8x8xf32> to vector<8xf32>
    %281 = vector.shape_cast %280 : vector<8xf32> to vector<8x1xf32>
    %282 = vector.broadcast %281 : vector<8x1xf32> to vector<8x8xf32>
    %283 = arith.divf %279, %282 : vector<8x8xf32>
    %cst_100 = arith.constant dense<0.000000e+00> : vector<8x8xf32>
    %284 = tpu.matmul %283, %271, %cst_100 {dimension_numbers = #tpu.dot_dimension_numbers<[1], [0], [0], [1], [0, 0, 1, 1], [], []>} : vector<8x8xf32>, vector<8x8xf32>, vector<8x8xf32> -> vector<8x8xf32>
    %c0_101 = arith.constant 0 : index
    %c16_102 = arith.constant 16 : index
    %285 = vector.load %arg4[%c0_101, %c16_102] : memref<16x32xf32, #tpu.memory_space<vmem>>, vector<8x8xf32>
    tpu.vector_store %arg4[%c0_101, %c16_102], %284 {strides = array<i32>} : memref<16x32xf32, #tpu.memory_space<vmem>>, vector<8x8xf32>,
    %286 = vector.extract_strided_slice %234 {offsets = [0, 24], sizes = [8, 8], strides = [1, 1]} : vector<16x96xf32> to vector<8x8xf32>
    %287 = vector.extract_strided_slice %234 {offsets = [0, 56], sizes = [8, 8], strides = [1, 1]} : vector<16x96xf32> to vector<8x8xf32>
    %288 = vector.extract_strided_slice %234 {offsets = [0, 88], sizes = [8, 8], strides = [1, 1]} : vector<16x96xf32> to vector<8x8xf32>
    %cst_103 = arith.constant dense<0.000000e+00> : vector<8x8xf32>
    %289 = tpu.matmul %286, %287, %cst_103 {dimension_numbers = #tpu.dot_dimension_numbers<[1], [1], [0], [0], [0, 0, 1, 0], [], []>} : vector<8x8xf32>, vector<8x8xf32>, vector<8x8xf32> -> vector<8x8xf32>
    %cst_104 = arith.constant 0.353553385 : f32
    %290 = vector.broadcast %cst_104 : f32 to vector<8x8xf32>
    %291 = arith.mulf %289, %290 : vector<8x8xf32>
    %cst_105 = arith.constant dense<0xFF800000> : vector<8xf32>
    %292 = vector.multi_reduction <maximumf>, %291, %cst_105 [1] : vector<8x8xf32> to vector<8xf32>
    %293 = vector.shape_cast %292 : vector<8xf32> to vector<8x1xf32>
    %294 = vector.broadcast %293 : vector<8x1xf32> to vector<8x8xf32>
    %295 = arith.subf %291, %294 : vector<8x8xf32>
    %296 = math.exp %295 : vector<8x8xf32>
    %cst_106 = arith.constant dense<0.000000e+00> : vector<8xf32>
    %297 = vector.multi_reduction <add>, %296, %cst_106 [1] : vector<8x8xf32> to vector<8xf32>
    %298 = vector.shape_cast %297 : vector<8xf32> to vector<8x1xf32>
    %299 = vector.broadcast %298 : vector<8x1xf32> to vector<8x8xf32>
    %300 = arith.divf %296, %299 : vector<8x8xf32>
    %cst_107 = arith.constant dense<0.000000e+00> : vector<8x8xf32>
    %301 = tpu.matmul %300, %288, %cst_107 {dimension_numbers = #tpu.dot_dimension_numbers<[1], [0], [0], [1], [0, 0, 1, 1], [], []>} : vector<8x8xf32>, vector<8x8xf32>, vector<8x8xf32> -> vector<8x8xf32>
    %c0_108 = arith.constant 0 : index
    %c24_109 = arith.constant 24 : index
    %302 = vector.load %arg4[%c0_108, %c24_109] : memref<16x32xf32, #tpu.memory_space<vmem>>, vector<8x8xf32>
    tpu.vector_store %arg4[%c0_108, %c24_109], %301 {strides = array<i32>} : memref<16x32xf32, #tpu.memory_space<vmem>>, vector<8x8xf32>,
    %303 = vector.extract_strided_slice %234 {offsets = [8, 0], sizes = [8, 8], strides = [1, 1]} : vector<16x96xf32> to vector<8x8xf32>
    %304 = vector.extract_strided_slice %234 {offsets = [8, 32], sizes = [8, 8], strides = [1, 1]} : vector<16x96xf32> to vector<8x8xf32>
    %305 = vector.extract_strided_slice %234 {offsets = [8, 64], sizes = [8, 8], strides = [1, 1]} : vector<16x96xf32> to vector<8x8xf32>
    %cst_110 = arith.constant dense<0.000000e+00> : vector<8x8xf32>
    %306 = tpu.matmul %303, %304, %cst_110 {dimension_numbers = #tpu.dot_dimension_numbers<[1], [1], [0], [0], [0, 0, 1, 0], [], []>} : vector<8x8xf32>, vector<8x8xf32>, vector<8x8xf32> -> vector<8x8xf32>
    %cst_111 = arith.constant 0.353553385 : f32
    %307 = vector.broadcast %cst_111 : f32 to vector<8x8xf32>
    %308 = arith.mulf %306, %307 : vector<8x8xf32>
    %cst_112 = arith.constant dense<0xFF800000> : vector<8xf32>
    %309 = vector.multi_reduction <maximumf>, %308, %cst_112 [1] : vector<8x8xf32> to vector<8xf32>
    %310 = vector.shape_cast %309 : vector<8xf32> to vector<8x1xf32>
    %311 = vector.broadcast %310 : vector<8x1xf32> to vector<8x8xf32>
    %312 = arith.subf %308, %311 : vector<8x8xf32>
    %313 = math.exp %312 : vector<8x8xf32>
    %cst_113 = arith.constant dense<0.000000e+00> : vector<8xf32>
    %314 = vector.multi_reduction <add>, %313, %cst_113 [1] : vector<8x8xf32> to vector<8xf32>
    %315 = vector.shape_cast %314 : vector<8xf32> to vector<8x1xf32>
    %316 = vector.broadcast %315 : vector<8x1xf32> to vector<8x8xf32>
    %317 = arith.divf %313, %316 : vector<8x8xf32>
    %cst_114 = arith.constant dense<0.000000e+00> : vector<8x8xf32>
    %318 = tpu.matmul %317, %305, %cst_114 {dimension_numbers = #tpu.dot_dimension_numbers<[1], [0], [0], [1], [0, 0, 1, 1], [], []>} : vector<8x8xf32>, vector<8x8xf32>, vector<8x8xf32> -> vector<8x8xf32>
    %c8_115 = arith.constant 8 : index
    %c0_116 = arith.constant 0 : index
    %319 = vector.load %arg4[%c8_115, %c0_116] : memref<16x32xf32, #tpu.memory_space<vmem>>, vector<8x8xf32>
    tpu.vector_store %arg4[%c8_115, %c0_116], %318 {strides = array<i32>} : memref<16x32xf32, #tpu.memory_space<vmem>>, vector<8x8xf32>,
    %320 = vector.extract_strided_slice %234 {offsets = [8, 8], sizes = [8, 8], strides = [1, 1]} : vector<16x96xf32> to vector<8x8xf32>
    %321 = vector.extract_strided_slice %234 {offsets = [8, 40], sizes = [8, 8], strides = [1, 1]} : vector<16x96xf32> to vector<8x8xf32>
    %322 = vector.extract_strided_slice %234 {offsets = [8, 72], sizes = [8, 8], strides = [1, 1]} : vector<16x96xf32> to vector<8x8xf32>
    %cst_117 = arith.constant dense<0.000000e+00> : vector<8x8xf32>
    %323 = tpu.matmul %320, %321, %cst_117 {dimension_numbers = #tpu.dot_dimension_numbers<[1], [1], [0], [0], [0, 0, 1, 0], [], []>} : vector<8x8xf32>, vector<8x8xf32>, vector<8x8xf32> -> vector<8x8xf32>
    %cst_118 = arith.constant 0.353553385 : f32
    %324 = vector.broadcast %cst_118 : f32 to vector<8x8xf32>
    %325 = arith.mulf %323, %324 : vector<8x8xf32>
    %cst_119 = arith.constant dense<0xFF800000> : vector<8xf32>
    %326 = vector.multi_reduction <maximumf>, %325, %cst_119 [1] : vector<8x8xf32> to vector<8xf32>
    %327 = vector.shape_cast %326 : vector<8xf32> to vector<8x1xf32>
    %328 = vector.broadcast %327 : vector<8x1xf32> to vector<8x8xf32>
    %329 = arith.subf %325, %328 : vector<8x8xf32>
    %330 = math.exp %329 : vector<8x8xf32>
    %cst_120 = arith.constant dense<0.000000e+00> : vector<8xf32>
    %331 = vector.multi_reduction <add>, %330, %cst_120 [1] : vector<8x8xf32> to vector<8xf32>
    %332 = vector.shape_cast %331 : vector<8xf32> to vector<8x1xf32>
    %333 = vector.broadcast %332 : vector<8x1xf32> to vector<8x8xf32>
    %334 = arith.divf %330, %333 : vector<8x8xf32>
    %cst_121 = arith.constant dense<0.000000e+00> : vector<8x8xf32>
    %335 = tpu.matmul %334, %322, %cst_121 {dimension_numbers = #tpu.dot_dimension_numbers<[1], [0], [0], [1], [0, 0, 1, 1], [], []>} : vector<8x8xf32>, vector<8x8xf32>, vector<8x8xf32> -> vector<8x8xf32>
    %c8_122 = arith.constant 8 : index
    %c8_123 = arith.constant 8 : index
    %336 = vector.load %arg4[%c8_122, %c8_123] : memref<16x32xf32, #tpu.memory_space<vmem>>, vector<8x8xf32>
    tpu.vector_store %arg4[%c8_122, %c8_123], %335 {strides = array<i32>} : memref<16x32xf32, #tpu.memory_space<vmem>>, vector<8x8xf32>,
    %337 = vector.extract_strided_slice %234 {offsets = [8, 16], sizes = [8, 8], strides = [1, 1]} : vector<16x96xf32> to vector<8x8xf32>
    %338 = vector.extract_strided_slice %234 {offsets = [8, 48], sizes = [8, 8], strides = [1, 1]} : vector<16x96xf32> to vector<8x8xf32>
    %339 = vector.extract_strided_slice %234 {offsets = [8, 80], sizes = [8, 8], strides = [1, 1]} : vector<16x96xf32> to vector<8x8xf32>
    %cst_124 = arith.constant dense<0.000000e+00> : vector<8x8xf32>
    %340 = tpu.matmul %337, %338, %cst_124 {dimension_numbers = #tpu.dot_dimension_numbers<[1], [1], [0], [0], [0, 0, 1, 0], [], []>} : vector<8x8xf32>, vector<8x8xf32>, vector<8x8xf32> -> vector<8x8xf32>
    %cst_125 = arith.constant 0.353553385 : f32
    %341 = vector.broadcast %cst_125 : f32 to vector<8x8xf32>
    %342 = arith.mulf %340, %341 : vector<8x8xf32>
    %cst_126 = arith.constant dense<0xFF800000> : vector<8xf32>
    %343 = vector.multi_reduction <maximumf>, %342, %cst_126 [1] : vector<8x8xf32> to vector<8xf32>
    %344 = vector.shape_cast %343 : vector<8xf32> to vector<8x1xf32>
    %345 = vector.broadcast %344 : vector<8x1xf32> to vector<8x8xf32>
    %346 = arith.subf %342, %345 : vector<8x8xf32>
    %347 = math.exp %346 : vector<8x8xf32>
    %cst_127 = arith.constant dense<0.000000e+00> : vector<8xf32>
    %348 = vector.multi_reduction <add>, %347, %cst_127 [1] : vector<8x8xf32> to vector<8xf32>
    %349 = vector.shape_cast %348 : vector<8xf32> to vector<8x1xf32>
    %350 = vector.broadcast %349 : vector<8x1xf32> to vector<8x8xf32>
    %351 = arith.divf %347, %350 : vector<8x8xf32>
    %cst_128 = arith.constant dense<0.000000e+00> : vector<8x8xf32>
    %352 = tpu.matmul %351, %339, %cst_128 {dimension_numbers = #tpu.dot_dimension_numbers<[1], [0], [0], [1], [0, 0, 1, 1], [], []>} : vector<8x8xf32>, vector<8x8xf32>, vector<8x8xf32> -> vector<8x8xf32>
    %c8_129 = arith.constant 8 : index
    %c16_130 = arith.constant 16 : index
    %353 = vector.load %arg4[%c8_129, %c16_130] : memref<16x32xf32, #tpu.memory_space<vmem>>, vector<8x8xf32>
    tpu.vector_store %arg4[%c8_129, %c16_130], %352 {strides = array<i32>} : memref<16x32xf32, #tpu.memory_space<vmem>>, vector<8x8xf32>,
    %354 = vector.extract_strided_slice %234 {offsets = [8, 24], sizes = [8, 8], strides = [1, 1]} : vector<16x96xf32> to vector<8x8xf32>
    %355 = vector.extract_strided_slice %234 {offsets = [8, 56], sizes = [8, 8], strides = [1, 1]} : vector<16x96xf32> to vector<8x8xf32>
    %356 = vector.extract_strided_slice %234 {offsets = [8, 88], sizes = [8, 8], strides = [1, 1]} : vector<16x96xf32> to vector<8x8xf32>
    %cst_131 = arith.constant dense<0.000000e+00> : vector<8x8xf32>
    %357 = tpu.matmul %354, %355, %cst_131 {dimension_numbers = #tpu.dot_dimension_numbers<[1], [1], [0], [0], [0, 0, 1, 0], [], []>} : vector<8x8xf32>, vector<8x8xf32>, vector<8x8xf32> -> vector<8x8xf32>
    %cst_132 = arith.constant 0.353553385 : f32
    %358 = vector.broadcast %cst_132 : f32 to vector<8x8xf32>
    %359 = arith.mulf %357, %358 : vector<8x8xf32>
    %cst_133 = arith.constant dense<0xFF800000> : vector<8xf32>
    %360 = vector.multi_reduction <maximumf>, %359, %cst_133 [1] : vector<8x8xf32> to vector<8xf32>
    %361 = vector.shape_cast %360 : vector<8xf32> to vector<8x1xf32>
    %362 = vector.broadcast %361 : vector<8x1xf32> to vector<8x8xf32>
    %363 = arith.subf %359, %362 : vector<8x8xf32>
    %364 = math.exp %363 : vector<8x8xf32>
    %cst_134 = arith.constant dense<0.000000e+00> : vector<8xf32>
    %365 = vector.multi_reduction <add>, %364, %cst_134 [1] : vector<8x8xf32> to vector<8xf32>
    %366 = vector.shape_cast %365 : vector<8xf32> to vector<8x1xf32>
    %367 = vector.broadcast %366 : vector<8x1xf32> to vector<8x8xf32>
    %368 = arith.divf %364, %367 : vector<8x8xf32>
    %cst_135 = arith.constant dense<0.000000e+00> : vector<8x8xf32>
    %369 = tpu.matmul %368, %356, %cst_135 {dimension_numbers = #tpu.dot_dimension_numbers<[1], [0], [0], [1], [0, 0, 1, 1], [], []>} : vector<8x8xf32>, vector<8x8xf32>, vector<8x8xf32> -> vector<8x8xf32>
    %c8_136 = arith.constant 8 : index
    %c24_137 = arith.constant 24 : index
    %370 = vector.load %arg4[%c8_136, %c24_137] : memref<16x32xf32, #tpu.memory_space<vmem>>, vector<8x8xf32>
    tpu.vector_store %arg4[%c8_136, %c24_137], %369 {strides = array<i32>} : memref<16x32xf32, #tpu.memory_space<vmem>>, vector<8x8xf32>,
    %c0_138 = arith.constant 0 : index
    %c0_139 = arith.constant 0 : index
    %371 = vector.load %arg4[%c0_138, %c0_139] : memref<16x32xf32, #tpu.memory_space<vmem>>, vector<16x32xf32>
    %cst_140 = arith.constant dense<0.000000e+00> : vector<16x32xf32>
    %372 = tpu.matmul %371, %222, %cst_140 {dimension_numbers = #tpu.dot_dimension_numbers<[1], [0], [0], [1], [0, 0, 1, 1], [], []>} : vector<16x32xf32>, vector<32x32xf32>, vector<16x32xf32> -> vector<16x32xf32>
    %373 = vector.broadcast %224 : vector<1x32xf32> to vector<16x32xf32>
    %374 = arith.addf %372, %373 : vector<16x32xf32>
    %375 = arith.addf %374, %214 : vector<16x32xf32>
    %cst_141 = arith.constant dense<0.000000e+00> : vector<16xf32>
    %376 = vector.multi_reduction <add>, %375, %cst_141 [1] : vector<16x32xf32> to vector<16xf32>
    %377 = vector.shape_cast %376 : vector<16xf32> to vector<16x1xf32>
    %cst_142 = arith.constant 3.200000e+01 : f32
    %378 = vector.broadcast %cst_142 : f32 to vector<16x1xf32>
    %379 = arith.divf %377, %378 : vector<16x1xf32>
    %380 = vector.broadcast %379 : vector<16x1xf32> to vector<16x32xf32>
    %381 = arith.subf %375, %380 : vector<16x32xf32>
    %382 = arith.mulf %381, %381 : vector<16x32xf32>
    %cst_143 = arith.constant dense<0.000000e+00> : vector<16xf32>
    %383 = vector.multi_reduction <add>, %382, %cst_143 [1] : vector<16x32xf32> to vector<16xf32>
    %384 = vector.shape_cast %383 : vector<16xf32> to vector<16x1xf32>
    %cst_144 = arith.constant 3.200000e+01 : f32
    %385 = vector.broadcast %cst_144 : f32 to vector<16x1xf32>
    %386 = arith.divf %384, %385 : vector<16x1xf32>
    %387 = vector.broadcast %379 : vector<16x1xf32> to vector<16x32xf32>
    %388 = arith.subf %375, %387 : vector<16x32xf32>
    %cst_145 = arith.constant 9.99999974E-6 : f32
    %389 = vector.broadcast %cst_145 : f32 to vector<16x1xf32>
    %390 = arith.addf %386, %389 : vector<16x1xf32>
    %391 = math.rsqrt %390 : vector<16x1xf32>
    %392 = vector.broadcast %391 : vector<16x1xf32> to vector<16x32xf32>
    %393 = arith.mulf %388, %392 : vector<16x32xf32>
    %394 = vector.broadcast %226 : vector<1x32xf32> to vector<16x32xf32>
    %395 = arith.mulf %393, %394 : vector<16x32xf32>
    %396 = vector.broadcast %227 : vector<1x32xf32> to vector<16x32xf32>
    %397 = arith.addf %395, %396 : vector<16x32xf32>
    %cst_146 = arith.constant dense<0.000000e+00> : vector<16x128xf32>
    %398 = tpu.matmul %397, %220, %cst_146 {dimension_numbers = #tpu.dot_dimension_numbers<[1], [0], [0], [1], [0, 0, 1, 1], [], []>} : vector<16x32xf32>, vector<32x128xf32>, vector<16x128xf32> -> vector<16x128xf32>
    %399 = vector.broadcast %225 : vector<1x128xf32> to vector<16x128xf32>
    %400 = arith.addf %398, %399 : vector<16x128xf32>
    %cst_147 = arith.constant 0.000000e+00 : f32
    %401 = vector.broadcast %cst_147 : f32 to vector<16x128xf32>
    %402 = arith.maximumf %400, %401 : vector<16x128xf32>
    %cst_148 = arith.constant dense<0.000000e+00> : vector<16x32xf32>
    %403 = tpu.matmul %402, %221, %cst_148 {dimension_numbers = #tpu.dot_dimension_numbers<[1], [1], [0], [0], [0, 0, 1, 0], [], []>} : vector<16x128xf32>, vector<32x128xf32>, vector<16x32xf32> -> vector<16x32xf32>
    %404 = vector.broadcast %230 : vector<1x32xf32> to vector<16x32xf32>
    %405 = arith.addf %403, %404 : vector<16x32xf32>
    %406 = arith.addf %405, %397 : vector<16x32xf32>
    %cst_149 = arith.constant dense<0.000000e+00> : vector<16xf32>
    %407 = vector.multi_reduction <add>, %406, %cst_149 [1] : vector<16x32xf32> to vector<16xf32>
    %408 = vector.shape_cast %407 : vector<16xf32> to vector<16x1xf32>
    %cst_150 = arith.constant 3.200000e+01 : f32
    %409 = vector.broadcast %cst_150 : f32 to vector<16x1xf32>
    %410 = arith.divf %408, %409 : vector<16x1xf32>
    %411 = vector.broadcast %410 : vector<16x1xf32> to vector<16x32xf32>
    %412 = arith.subf %406, %411 : vector<16x32xf32>
    %413 = arith.mulf %412, %412 : vector<16x32xf32>
    %cst_151 = arith.constant dense<0.000000e+00> : vector<16xf32>
    %414 = vector.multi_reduction <add>, %413, %cst_151 [1] : vector<16x32xf32> to vector<16xf32>
    %415 = vector.shape_cast %414 : vector<16xf32> to vector<16x1xf32>
    %cst_152 = arith.constant 3.200000e+01 : f32
    %416 = vector.broadcast %cst_152 : f32 to vector<16x1xf32>
    %417 = arith.divf %415, %416 : vector<16x1xf32>
    %418 = vector.broadcast %410 : vector<16x1xf32> to vector<16x32xf32>
    %419 = arith.subf %406, %418 : vector<16x32xf32>
    %cst_153 = arith.constant 9.99999974E-6 : f32
    %420 = vector.broadcast %cst_153 : f32 to vector<16x1xf32>
    %421 = arith.addf %417, %420 : vector<16x1xf32>
    %422 = math.rsqrt %421 : vector<16x1xf32>
    %423 = vector.broadcast %422 : vector<16x1xf32> to vector<16x32xf32>
    %424 = arith.mulf %419, %423 : vector<16x32xf32>
    %425 = vector.broadcast %228 : vector<1x32xf32> to vector<16x32xf32>
    %426 = arith.mulf %424, %425 : vector<16x32xf32>
    %427 = vector.broadcast %229 : vector<1x32xf32> to vector<16x32xf32>
    %428 = arith.addf %426, %427 : vector<16x32xf32>
    %c0_154 = arith.constant 0 : index
    %c0_155 = arith.constant 0 : index
    %429 = vector.load %arg3[%c0_154, %c0_155] : memref<16x32xf32, #tpu.memory_space<vmem>>, vector<16x32xf32>
    tpu.vector_store %arg3[%c0_154, %c0_155], %428 {strides = array<i32>} : memref<16x32xf32, #tpu.memory_space<vmem>>, vector<16x32xf32>,
    return
  }
}

</mosaic_0001>

<llo_original>
// kernel: tpu_custom_call.1
$region0: #{tpu_custom_call.1}
  #allocation0 [shape = 'u32[]', space=smem, size = 0x4, offset = 0x4, fixed_abs, tag = 'smem constant byte address 0x4 - core index']
  #allocation1 [shape = 'u32[144,128]{1,0:T(1,128)}', space=vmem, size = 0x12000, scoped, tag = 'internal scratch']
  #allocation2 [shape = 'f32[16,32]{1,0:T(8,128)}', space=vmem, size = 0x2000, scoped, tag = 'scratch operand']
  %s0 = inlined_call_operand.hbm [shape: f32[16,32], index: 0, kind: input, shape index: {}]
  %s1 = inlined_call_operand.hbm [shape: f32[2,32,416], index: 1, kind: input, shape index: {}]
  %s2 = inlined_call_operand.hbm [shape: f32[2,4,128], index: 2, kind: input, shape index: {}]
  %s3 = inlined_call_operand.hbm [shape: f32[16,32], index: 3, kind: output, shape index: {}]
  %s4 = sld [smem:[#allocation0]]
  $region34: #{tpu_custom_call.1} parent=0
    _
  %s6 = ssub.s32 1, %s4
  %s7 = scalar_select 0, %s6, %s4
  $region1: #{tpu_custom_call.1} parent=0
    #allocation3 [shape = 'u8[8192]{0}', space=vmem, size = 0x2000, scoped, tag = 'input window, operand 0, single buffered']
    #allocation4 [shape = 's32[1]{0}', space=sflag, size = 0x4, scoped, tag = 'scoped memory for tpu_custom_call.1']
    #allocation5 [shape = 's32[1]{0}', space=sflag, size = 0x4, scoped, tag = 'scoped memory for tpu_custom_call.1']
    #allocation6 [shape = 'u8[131072]{0}', space=vmem, size = 0x20000, scoped, tag = 'input window, operand 1, single buffered']
    #allocation7 [shape = 's32[1]{0}', space=sflag, size = 0x4, scoped, tag = 'scoped memory for tpu_custom_call.1']
    #allocation8 [shape = 'u8[4096]{0}', space=vmem, size = 0x1000, scoped, tag = 'input window, operand 2, single buffered']
    #allocation9 [shape = 'u8[8192]{0}', space=vmem, size = 0x2000, scoped, tag = 'output window, operand 0, single buffered']
    %8 = vsyncpa [#allocation4], 0
    %9 = vsyncpa [#allocation7], 0
    %10 = vsyncpa [#allocation5], 0
    // Predicated region
    $region2: #{tpu_custom_call.1} parent=1 // pred_check
      _
    $region3: #{tpu_custom_call.1} parent=1 // pred_check_branch
      %12 = sbr.rel (0) target = $region5
    $region4: #{tpu_custom_call.1} parent=1 // pred_region
      %s14 = ssub.s32 256, 256
      %15 = vsyncadd [#allocation4], %s14
      %s16 = sshll.u32 [#allocation3], 4
      %s17 = int_to_ptr.vmem [resolvable:$true] %s16
      %22 = dma.hbm_to_vmem [thread:$0]  %s0, 256, %s17, [#allocation4], 128, 128, 8
    $region5: #{tpu_custom_call.1} parent=1 // pred_fallthru
      _
    // Predicated region
    $region6: #{tpu_custom_call.1} parent=1 // pred_check
      _
    $region7: #{tpu_custom_call.1} parent=1 // pred_check_branch
      %24 = sbr.rel (0) target = $region9
    $region8: #{tpu_custom_call.1} parent=1 // pred_region
      %s26 = ssub.s32 4096, 4096
      %27 = vsyncadd [#allocation7], %s26
      %s28 = sshll.u32 [#allocation6], 4
      %s29 = int_to_ptr.vmem [resolvable:$true] %s28
      %34 = dma.hbm_to_vmem [thread:$0]  %s1, 4096, %s29, [#allocation7], 512, 512, 32
    $region9: #{tpu_custom_call.1} parent=1 // pred_fallthru
      _
    // Predicated region
    $region10: #{tpu_custom_call.1} parent=1 // pred_check
      _
    $region11: #{tpu_custom_call.1} parent=1 // pred_check_branch
      %36 = sbr.rel (0) target = $region13
    $region12: #{tpu_custom_call.1} parent=1 // pred_region
      %s38 = ssub.s32 128, 128
      %39 = vsyncadd [#allocation7], %s38
      %s40 = sshll.u32 [#allocation8], 4
      %s41 = int_to_ptr.vmem [resolvable:$true] %s40
      %46 = dma.hbm_to_vmem [thread:$0]  %s2, 128, %s41, [#allocation7], 64, 64, 4
    $region13: #{tpu_custom_call.1} parent=1 // pred_fallthru
      _
    // Predicated region
    $region14: #{tpu_custom_call.1} parent=1 // pred_check
      _
    $region15: #{tpu_custom_call.1} parent=1 // pred_check_branch
      %48 = sbr.rel (0) target = $region17
    $region16: #{tpu_custom_call.1} parent=1 // pred_region
      %49 = dma.done [#allocation4], 256
    $region17: #{tpu_custom_call.1} parent=1 // pred_fallthru
      _
    // Predicated region
    $region18: #{tpu_custom_call.1} parent=1 // pred_check
      _
    $region19: #{tpu_custom_call.1} parent=1 // pred_check_branch
      %51 = sbr.rel (0) target = $region21
    $region20: #{tpu_custom_call.1} parent=1 // pred_region
      %52 = dma.done [#allocation7], 4096
    $region21: #{tpu_custom_call.1} parent=1 // pred_fallthru
      _
    // Predicated region
    $region22: #{tpu_custom_call.1} parent=1 // pred_check
      _
    $region23: #{tpu_custom_call.1} parent=1 // pred_check_branch
      %54 = sbr.rel (0) target = $region25
    $region24: #{tpu_custom_call.1} parent=1 // pred_region
      %55 = dma.done [#allocation7], 128
    $region25: #{tpu_custom_call.1} parent=1 // pred_fallthru
      _
    %v56 = vld [vmem:[#allocation3] sm:$0xff]
    %v57 = vld [vmem:[#allocation3 + $0x8] sm:$0xff]
    %v58 = vld [vmem:[#allocation6] sm:$0xff]
    %v59 = vld [vmem:[#allocation6 + $0x8] sm:$0xff]
    %v60 = vld [vmem:[#allocation6 + $0x10] sm:$0xff]
    %v61 = vld [vmem:[#allocation6 + $0x18] sm:$0xff]
    %v62 = vld [vmem:[#allocation6 + $0x20] sm:$0xff]
    %v63 = vld [vmem:[#allocation6 + $0x28] sm:$0xff]
    %v64 = vld [vmem:[#allocation6 + $0x30] sm:$0xff]
    %v65 = vld [vmem:[#allocation6 + $0x38] sm:$0xff]
    %v66 = vld [vmem:[#allocation6 + $0x40] sm:$0xff]
    %v67 = vld [vmem:[#allocation6 + $0x48] sm:$0xff]
    %v68 = vld [vmem:[#allocation6 + $0x50] sm:$0xff]
    %v69 = vld [vmem:[#allocation6 + $0x58] sm:$0xff]
    %v70 = vld [vmem:[#allocation6 + $0x60] sm:$0xff]
    %v71 = vld [vmem:[#allocation6 + $0x68] sm:$0xff]
    %v72 = vld [vmem:[#allocation6 + $0x70] sm:$0xff]
    %v73 = vld [vmem:[#allocation6 + $0x78] sm:$0xff]
    %v74 = vld [vmem:[#allocation8] sm:$0xf]
    %vm75 = vcmask 261120
    %v77 = vsel %vm75, %v56, 0
    %v80 = vsel %vm75, %v57, 0
    %82 = vmatprep.subr.mxu0 0.0
    %83 = vmatpush1.msra.mxu0 0.0
    %84 = vmatprep.subr.mxu0 0.0
    %85 = vmatpush1.msra.mxu0 0.0
    %86 = vmatprep.subr.mxu0 0.0
    %87 = vmatpush1.msra.mxu0 0.0
    %88 = vmatprep.subr.mxu0 0.0
    %89 = vmatpush1.msra.mxu0 0.0
    %90 = vmatprep.subr.mxu0 0.0
    %91 = vmatpush1.msra.mxu0 0.0
    %92 = vmatprep.subr.mxu0 0.0
    %93 = vmatpush1.msra.mxu0 0.0
    %94 = vmatprep.subr.mxu0 0.0
    %95 = vmatpush1.msra.mxu0 0.0
    %96 = vmatprep.subr.mxu0 0.0
    %97 = vmatpush1.msra.mxu0 0.0
    %98 = vmatprep.subr.mxu0 0.0
    %99 = vmatpush1.msra.mxu0 0.0
    %100 = vmatprep.subr.mxu0 0.0
    %101 = vmatpush1.msra.mxu0 0.0
    %102 = vmatprep.subr.mxu0 0.0
    %103 = vmatpush1.msra.mxu0 0.0
    %104 = vmatprep.subr.mxu0 0.0
    %105 = vmatpush1.msra.mxu0 0.0
    %106 = vmatprep.subr.mxu0 0.0
    %107 = vmatpush1.msra.mxu0 %v70
    %108 = vmatprep.subr.mxu0 0.0
    %109 = vmatpush1.msra.mxu0 %v66
    %110 = vmatprep.subr.mxu0 0.0
    %111 = vmatpush1.msra.mxu0 %v62
    %112 = vmatprep.subr.mxu0 0.0
    %113 = vmatpush1.msra.mxu0 %v58
    %114 = vmatprep.subr.mxu0 0.0
    %115 = vmatpush2.msra.mxu0 0.0
    %116 = vmatprep.subr.mxu0 0.0
    %117 = vmatpush2.msra.mxu0 0.0
    %118 = vmatprep.subr.mxu0 0.0
    %119 = vmatpush2.msra.mxu0 0.0
    %120 = vmatprep.subr.mxu0 0.0
    %121 = vmatpush2.msra.mxu0 0.0
    %122 = vmatprep.subr.mxu0 0.0
    %123 = vmatpush2.msra.mxu0 0.0
    %124 = vmatprep.subr.mxu0 0.0
    %125 = vmatpush2.msra.mxu0 0.0
    %126 = vmatprep.subr.mxu0 0.0
    %127 = vmatpush2.msra.mxu0 0.0
    %128 = vmatprep.subr.mxu0 0.0
    %129 = vmatpush2.msra.mxu0 0.0
    %130 = vmatprep.subr.mxu0 0.0
    %131 = vmatpush2.msra.mxu0 0.0
    %132 = vmatprep.subr.mxu0 0.0
    %133 = vmatpush2.msra.mxu0 0.0
    %134 = vmatprep.subr.mxu0 0.0
    %135 = vmatpush2.msra.mxu0 0.0
    %136 = vmatprep.subr.mxu0 0.0
    %137 = vmatpush2.msra.mxu0 0.0
    %138 = vmatprep.subr.mxu0 0.0
    %139 = vmatpush2.msra.mxu0 0.0
    %140 = vmatprep.subr.mxu0 0.0
    %141 = vmatpush2.msra.mxu0 0.0
    %142 = vmatprep.subr.mxu0 0.0
    %143 = vmatpush2.msra.mxu0 0.0
    %144 = vmatprep.subr.mxu0 0.0
    %145 = vmatpush2.msra.mxu0 0.0
    %146 = vmatprep.mubr.f32.mxu0 0.0
    %147 = vmatmul.mubr.f32.gmra.mxu0 %v77
    %v148 = vpop.f32.mrf.mxu0
    %v149 = vadd.f32 0.0, %v148
    %v150 = vpop.f32.mrf.mxu0
    %151 = vmatprep.mubr.f32.mxu0 0.0
    %152 = vmatmul.mubr.f32.gmra.mxu0 %v80
    %v153 = vpop.f32.mrf.mxu0
    %v154 = vadd.f32 0.0, %v153
    %v155 = vpop.f32.mrf.mxu0
    %156 = vdwg.mxu0
    %v157 = vlaneseq
    %v158 = vshrl.u32 %v157, 7
    %v159 = vsub.s32 0, %v158
    %v160 = vrot.slane %v74, %v159
    %v161 = vadd.f32 %v149, %v160
    %v162 = vadd.f32 %v154, %v160
    %164 = vrot.lane.b32.xlu0 %v161, 96
    %v165 = vpop.permute.xlu0 %164
    %vm166 = vcmask 64512
    %v167 = vsel %vm166, %v161, 0
    %v169 = vsel %vm166, %v165, 0
    %171 = vmatprep.subr.mxu0 0.0
    %172 = vmatpush1.xpose.msra.mxu0 0.0
    %173 = vmatprep.subr.mxu0 0.0
    %174 = vmatpush1.xpose.msra.mxu0 0.0
    %175 = vmatprep.subr.mxu0 0.0
    %176 = vmatpush1.xpose.msra.mxu0 0.0
    %177 = vmatprep.subr.mxu0 0.0
    %178 = vmatpush1.xpose.msra.mxu0 0.0
    %179 = vmatprep.subr.mxu0 0.0
    %180 = vmatpush1.xpose.msra.mxu0 0.0
    %181 = vmatprep.subr.mxu0 0.0
    %182 = vmatpush1.xpose.msra.mxu0 0.0
    %183 = vmatprep.subr.mxu0 0.0
    %184 = vmatpush1.xpose.msra.mxu0 0.0
    %185 = vmatprep.subr.mxu0 0.0
    %186 = vmatpush1.xpose.msra.mxu0 0.0
    %187 = vmatprep.subr.mxu0 0.0
    %188 = vmatpush1.xpose.msra.mxu0 0.0
    %189 = vmatprep.subr.mxu0 0.0
    %190 = vmatpush1.xpose.msra.mxu0 0.0
    %191 = vmatprep.subr.mxu0 0.0
    %192 = vmatpush1.xpose.msra.mxu0 0.0
    %193 = vmatprep.subr.mxu0 0.0
    %194 = vmatpush1.xpose.msra.mxu0 0.0
    %195 = vmatprep.subr.mxu0 0.0
    %196 = vmatpush1.xpose.msra.mxu0 0.0
    %197 = vmatprep.subr.mxu0 0.0
    %198 = vmatpush1.xpose.msra.mxu0 0.0
    %199 = vmatprep.subr.mxu0 0.0
    %200 = vmatpush1.xpose.msra.mxu0 0.0
    %201 = vmatprep.subr.mxu0 0.0
    %202 = vmatpush1.xpose.msra.mxu0 %v169
    %203 = vmatprep.subr.mxu0 0.0
    %204 = vmatpush2.xpose.msra.mxu0 0.0
    %205 = vmatprep.subr.mxu0 0.0
    %206 = vmatpush2.xpose.msra.mxu0 0.0
    %207 = vmatprep.subr.mxu0 0.0
    %208 = vmatpush2.xpose.msra.mxu0 0.0
    %209 = vmatprep.subr.mxu0 0.0
    %210 = vmatpush2.xpose.msra.mxu0 0.0
    %211 = vmatprep.subr.mxu0 0.0
    %212 = vmatpush2.xpose.msra.mxu0 0.0
    %213 = vmatprep.subr.mxu0 0.0
    %214 = vmatpush2.xpose.msra.mxu0 0.0
    %215 = vmatprep.subr.mxu0 0.0
    %216 = vmatpush2.xpose.msra.mxu0 0.0
    %217 = vmatprep.subr.mxu0 0.0
    %218 = vmatpush2.xpose.msra.mxu0 0.0
    %219 = vmatprep.subr.mxu0 0.0
    %220 = vmatpush2.xpose.msra.mxu0 0.0
    %221 = vmatprep.subr.mxu0 0.0
    %222 = vmatpush2.xpose.msra.mxu0 0.0
    %223 = vmatprep.subr.mxu0 0.0
    %224 = vmatpush2.xpose.msra.mxu0 0.0
    %225 = vmatprep.subr.mxu0 0.0
    %226 = vmatpush2.xpose.msra.mxu0 0.0
    %227 = vmatprep.subr.mxu0 0.0
    %228 = vmatpush2.xpose.msra.mxu0 0.0
    %229 = vmatprep.subr.mxu0 0.0
    %230 = vmatpush2.xpose.msra.mxu0 0.0
    %231 = vmatprep.subr.mxu0 0.0
    %232 = vmatpush2.xpose.msra.mxu0 0.0
    %233 = vmatprep.subr.mxu0 0.0
    %234 = vmatpush2.xpose.msra.mxu0 0.0
    %235 = vmatprep.mubr.f32.mxu0 0.0
    %236 = vmatmul.mubr.f32.gmra.mxu0 %v167
    %v237 = vpop.f32.mrf.mxu0
    %v238 = vadd.f32 0.0, %v237
    %v239 = vpop.f32.mrf.mxu0
    %240 = vdwg.mxu0
    %v241 = vmul.f32 %v238, 0.35355338
    %v242 = vsel %vm166, %v241, -inf
    %243 = vmax.xlane.f32.xlu0 %v242
    %v244 = vpop.xlane.xlu0 %243
    %v245 = vsub.f32 %v241, %v244
    %v246 = vmul.f32 %v245, 1.442695
    %v247 = vpow.pop %v246
    %v248 = vsel %vm166, %v247, 0.0
    %249 = vadd.xlane.f32.xlu0 %v248
    %v250 = vpop.xlane.xlu0 %249
    %v251 = vrcp.pop %v250
    %v252 = vmul.f32 %v247, %v251
    %253 = vrot.lane.b32.xlu0 %v161, 64
    %v254 = vpop.permute.xlu0 %253
    %v257 = vsel %vm166, %v252, 0
    %259 = vmatprep.subr.mxu0 0.0
    %260 = vmatpush1.msra.mxu0 0.0
    %261 = vmatprep.subr.mxu0 0.0
    %262 = vmatpush1.msra.mxu0 0.0
    %263 = vmatprep.subr.mxu0 0.0
    %264 = vmatpush1.msra.mxu0 0.0
    %265 = vmatprep.subr.mxu0 0.0
    %266 = vmatpush1.msra.mxu0 0.0
    %267 = vmatprep.subr.mxu0 0.0
    %268 = vmatpush1.msra.mxu0 0.0
    %269 = vmatprep.subr.mxu0 0.0
    %270 = vmatpush1.msra.mxu0 0.0
    %271 = vmatprep.subr.mxu0 0.0
    %272 = vmatpush1.msra.mxu0 0.0
    %273 = vmatprep.subr.mxu0 0.0
    %274 = vmatpush1.msra.mxu0 0.0
    %275 = vmatprep.subr.mxu0 0.0
    %276 = vmatpush1.msra.mxu0 0.0
    %277 = vmatprep.subr.mxu0 0.0
    %278 = vmatpush1.msra.mxu0 0.0
    %279 = vmatprep.subr.mxu0 0.0
    %280 = vmatpush1.msra.mxu0 0.0
    %281 = vmatprep.subr.mxu0 0.0
    %282 = vmatpush1.msra.mxu0 0.0
    %283 = vmatprep.subr.mxu0 0.0
    %284 = vmatpush1.msra.mxu0 0.0
    %285 = vmatprep.subr.mxu0 0.0
    %286 = vmatpush1.msra.mxu0 0.0
    %287 = vmatprep.subr.mxu0 0.0
    %288 = vmatpush1.msra.mxu0 0.0
    %289 = vmatprep.subr.mxu0 0.0
    %290 = vmatpush1.msra.mxu0 %v254
    %291 = vmatprep.subr.mxu0 0.0
    %292 = vmatpush2.msra.mxu0 0.0
    %293 = vmatprep.subr.mxu0 0.0
    %294 = vmatpush2.msra.mxu0 0.0
    %295 = vmatprep.subr.mxu0 0.0
    %296 = vmatpush2.msra.mxu0 0.0
    %297 = vmatprep.subr.mxu0 0.0
    %298 = vmatpush2.msra.mxu0 0.0
    %299 = vmatprep.subr.mxu0 0.0
    %300 = vmatpush2.msra.mxu0 0.0
    %301 = vmatprep.subr.mxu0 0.0
    %302 = vmatpush2.msra.mxu0 0.0
    %303 = vmatprep.subr.mxu0 0.0
    %304 = vmatpush2.msra.mxu0 0.0
    %305 = vmatprep.subr.mxu0 0.0
    %306 = vmatpush2.msra.mxu0 0.0
    %307 = vmatprep.subr.mxu0 0.0
    %308 = vmatpush2.msra.mxu0 0.0
    %309 = vmatprep.subr.mxu0 0.0
    %310 = vmatpush2.msra.mxu0 0.0
    %311 = vmatprep.subr.mxu0 0.0
    %312 = vmatpush2.msra.mxu0 0.0
    %313 = vmatprep.subr.mxu0 0.0
    %314 = vmatpush2.msra.mxu0 0.0
    %315 = vmatprep.subr.mxu0 0.0
    %316 = vmatpush2.msra.mxu0 0.0
    %317 = vmatprep.subr.mxu0 0.0
    %318 = vmatpush2.msra.mxu0 0.0
    %319 = vmatprep.subr.mxu0 0.0
    %320 = vmatpush2.msra.mxu0 0.0
    %321 = vmatprep.subr.mxu0 0.0
    %322 = vmatpush2.msra.mxu0 0.0
    %323 = vmatprep.mubr.f32.mxu0 0.0
    %324 = vmatmul.mubr.f32.gmra.mxu0 %v257
    %v325 = vpop.f32.mrf.mxu0
    %v326 = vadd.f32 0.0, %v325
    %v327 = vpop.f32.mrf.mxu0
    %328 = vdwg.mxu0
    %329 = vst.msk [vmem:[#allocation2] sm:$0xff] %vm166, %v326
    %330 = vrot.lane.b32.xlu0 %v161, 120
    %v331 = vpop.permute.xlu0 %330
    %332 = vrot.lane.b32.xlu0 %v161, 88
    %v333 = vpop.permute.xlu0 %332
    %v334 = vsel %vm166, %v331, 0
    %v336 = vsel %vm166, %v333, 0
    %338 = vmatprep.subr.mxu0 0.0
    %339 = vmatpush1.xpose.msra.mxu0 0.0
    %340 = vmatprep.subr.mxu0 0.0
    %341 = vmatpush1.xpose.msra.mxu0 0.0
    %342 = vmatprep.subr.mxu0 0.0
    %343 = vmatpush1.xpose.msra.mxu0 0.0
    %344 = vmatprep.subr.mxu0 0.0
    %345 = vmatpush1.xpose.msra.mxu0 0.0
    %346 = vmatprep.subr.mxu0 0.0
    %347 = vmatpush1.xpose.msra.mxu0 0.0
    %348 = vmatprep.subr.mxu0 0.0
    %349 = vmatpush1.xpose.msra.mxu0 0.0
    %350 = vmatprep.subr.mxu0 0.0
    %351 = vmatpush1.xpose.msra.mxu0 0.0
    %352 = vmatprep.subr.mxu0 0.0
    %353 = vmatpush1.xpose.msra.mxu0 0.0
    %354 = vmatprep.subr.mxu0 0.0
    %355 = vmatpush1.xpose.msra.mxu0 0.0
    %356 = vmatprep.subr.mxu0 0.0
    %357 = vmatpush1.xpose.msra.mxu0 0.0
    %358 = vmatprep.subr.mxu0 0.0
    %359 = vmatpush1.xpose.msra.mxu0 0.0
    %360 = vmatprep.subr.mxu0 0.0
    %361 = vmatpush1.xpose.msra.mxu0 0.0
    %362 = vmatprep.subr.mxu0 0.0
    %363 = vmatpush1.xpose.msra.mxu0 0.0
    %364 = vmatprep.subr.mxu0 0.0
    %365 = vmatpush1.xpose.msra.mxu0 0.0
    %366 = vmatprep.subr.mxu0 0.0
    %367 = vmatpush1.xpose.msra.mxu0 0.0
    %368 = vmatprep.subr.mxu0 0.0
    %369 = vmatpush1.xpose.msra.mxu0 %v336
    %370 = vmatprep.subr.mxu0 0.0
    %371 = vmatpush2.xpose.msra.mxu0 0.0
    %372 = vmatprep.subr.mxu0 0.0
    %373 = vmatpush2.xpose.msra.mxu0 0.0
    %374 = vmatprep.subr.mxu0 0.0
    %375 = vmatpush2.xpose.msra.mxu0 0.0
    %376 = vmatprep.subr.mxu0 0.0
    %377 = vmatpush2.xpose.msra.mxu0 0.0
    %378 = vmatprep.subr.mxu0 0.0
    %379 = vmatpush2.xpose.msra.mxu0 0.0
    %380 = vmatprep.subr.mxu0 0.0
    %381 = vmatpush2.xpose.msra.mxu0 0.0
    %382 = vmatprep.subr.mxu0 0.0
    %383 = vmatpush2.xpose.msra.mxu0 0.0
    %384 = vmatprep.subr.mxu0 0.0
    %385 = vmatpush2.xpose.msra.mxu0 0.0
    %386 = vmatprep.subr.mxu0 0.0
    %387 = vmatpush2.xpose.msra.mxu0 0.0
    %388 = vmatprep.subr.mxu0 0.0
    %389 = vmatpush2.xpose.msra.mxu0 0.0
    %390 = vmatprep.subr.mxu0 0.0
    %391 = vmatpush2.xpose.msra.mxu0 0.0
    %392 = vmatprep.subr.mxu0 0.0
    %393 = vmatpush2.xpose.msra.mxu0 0.0
    %394 = vmatprep.subr.mxu0 0.0
    %395 = vmatpush2.xpose.msra.mxu0 0.0
    %396 = vmatprep.subr.mxu0 0.0
    %397 = vmatpush2.xpose.msra.mxu0 0.0
    %398 = vmatprep.subr.mxu0 0.0
    %399 = vmatpush2.xpose.msra.mxu0 0.0
    %400 = vmatprep.subr.mxu0 0.0
    %401 = vmatpush2.xpose.msra.mxu0 0.0
    %402 = vmatprep.mubr.f32.mxu0 0.0
    %403 = vmatmul.mubr.f32.gmra.mxu0 %v334
    %v404 = vpop.f32.mrf.mxu0
    %v405 = vadd.f32 0.0, %v404
    %v406 = vpop.f32.mrf.mxu0
    %407 = vdwg.mxu0
    %v408 = vmul.f32 %v405, 0.35355338
    %v409 = vsel %vm166, %v408, -inf
    %410 = vmax.xlane.f32.xlu0 %v409
    %v411 = vpop.xlane.xlu0 %410
    %v412 = vsub.f32 %v408, %v411
    %v413 = vmul.f32 %v412, 1.442695
    %v414 = vpow.pop %v413
    %v415 = vsel %vm166, %v414, 0.0
    %416 = vadd.xlane.f32.xlu0 %v415
    %v417 = vpop.xlane.xlu0 %416
    %v418 = vrcp.pop %v417
    %v419 = vmul.f32 %v414, %v418
    %420 = vrot.lane.b32.xlu0 %v161, 56
    %v421 = vpop.permute.xlu0 %420
    %v424 = vsel %vm166, %v419, 0
    %426 = vmatprep.subr.mxu0 0.0
    %427 = vmatpush1.msra.mxu0 0.0
    %428 = vmatprep.subr.mxu0 0.0
    %429 = vmatpush1.msra.mxu0 0.0
    %430 = vmatprep.subr.mxu0 0.0
    %431 = vmatpush1.msra.mxu0 0.0
    %432 = vmatprep.subr.mxu0 0.0
    %433 = vmatpush1.msra.mxu0 0.0
    %434 = vmatprep.subr.mxu0 0.0
    %435 = vmatpush1.msra.mxu0 0.0
    %436 = vmatprep.subr.mxu0 0.0
    %437 = vmatpush1.msra.mxu0 0.0
    %438 = vmatprep.subr.mxu0 0.0
    %439 = vmatpush1.msra.mxu0 0.0
    %440 = vmatprep.subr.mxu0 0.0
    %441 = vmatpush1.msra.mxu0 0.0
    %442 = vmatprep.subr.mxu0 0.0
    %443 = vmatpush1.msra.mxu0 0.0
    %444 = vmatprep.subr.mxu0 0.0
    %445 = vmatpush1.msra.mxu0 0.0
    %446 = vmatprep.subr.mxu0 0.0
    %447 = vmatpush1.msra.mxu0 0.0
    %448 = vmatprep.subr.mxu0 0.0
    %449 = vmatpush1.msra.mxu0 0.0
    %450 = vmatprep.subr.mxu0 0.0
    %451 = vmatpush1.msra.mxu0 0.0
    %452 = vmatprep.subr.mxu0 0.0
    %453 = vmatpush1.msra.mxu0 0.0
    %454 = vmatprep.subr.mxu0 0.0
    %455 = vmatpush1.msra.mxu0 0.0
    %456 = vmatprep.subr.mxu0 0.0
    %457 = vmatpush1.msra.mxu0 %v421
    %458 = vmatprep.subr.mxu0 0.0
    %459 = vmatpush2.msra.mxu0 0.0
    %460 = vmatprep.subr.mxu0 0.0
    %461 = vmatpush2.msra.mxu0 0.0
    %462 = vmatprep.subr.mxu0 0.0
    %463 = vmatpush2.msra.mxu0 0.0
    %464 = vmatprep.subr.mxu0 0.0
    %465 = vmatpush2.msra.mxu0 0.0
    %466 = vmatprep.subr.mxu0 0.0
    %467 = vmatpush2.msra.mxu0 0.0
    %468 = vmatprep.subr.mxu0 0.0
    %469 = vmatpush2.msra.mxu0 0.0
    %470 = vmatprep.subr.mxu0 0.0
    %471 = vmatpush2.msra.mxu0 0.0
    %472 = vmatprep.subr.mxu0 0.0
    %473 = vmatpush2.msra.mxu0 0.0
    %474 = vmatprep.subr.mxu0 0.0
    %475 = vmatpush2.msra.mxu0 0.0
    %476 = vmatprep.subr.mxu0 0.0
    %477 = vmatpush2.msra.mxu0 0.0
    %478 = vmatprep.subr.mxu0 0.0
    %479 = vmatpush2.msra.mxu0 0.0
    %480 = vmatprep.subr.mxu0 0.0
    %481 = vmatpush2.msra.mxu0 0.0
    %482 = vmatprep.subr.mxu0 0.0
    %483 = vmatpush2.msra.mxu0 0.0
    %484 = vmatprep.subr.mxu0 0.0
    %485 = vmatpush2.msra.mxu0 0.0
    %486 = vmatprep.subr.mxu0 0.0
    %487 = vmatpush2.msra.mxu0 0.0
    %488 = vmatprep.subr.mxu0 0.0
    %489 = vmatpush2.msra.mxu0 0.0
    %490 = vmatprep.mubr.f32.mxu0 0.0
    %491 = vmatmul.mubr.f32.gmra.mxu0 %v424
    %v492 = vpop.f32.mrf.mxu0
    %v493 = vadd.f32 0.0, %v492
    %v494 = vpop.f32.mrf.mxu0
    %495 = vdwg.mxu0
    %497 = vrot.lane.b32.xlu0 %v493, 8
    %v498 = vpop.permute.xlu0 %497
    %vm500 = vcmask 130112
    %501 = vst.msk [vmem:[#allocation2] sm:$0xff] %vm500, %v498
    %502 = vrot.lane.b32.xlu0 %v161, 112
    %v503 = vpop.permute.xlu0 %502
    %504 = vrot.lane.b32.xlu0 %v161, 80
    %v505 = vpop.permute.xlu0 %504
    %v506 = vsel %vm166, %v503, 0
    %v508 = vsel %vm166, %v505, 0
    %510 = vmatprep.subr.mxu0 0.0
    %511 = vmatpush1.xpose.msra.mxu0 0.0
    %512 = vmatprep.subr.mxu0 0.0
    %513 = vmatpush1.xpose.msra.mxu0 0.0
    %514 = vmatprep.subr.mxu0 0.0
    %515 = vmatpush1.xpose.msra.mxu0 0.0
    %516 = vmatprep.subr.mxu0 0.0
    %517 = vmatpush1.xpose.msra.mxu0 0.0
    %518 = vmatprep.subr.mxu0 0.0
    %519 = vmatpush1.xpose.msra.mxu0 0.0
    %520 = vmatprep.subr.mxu0 0.0
    %521 = vmatpush1.xpose.msra.mxu0 0.0
    %522 = vmatprep.subr.mxu0 0.0
    %523 = vmatpush1.xpose.msra.mxu0 0.0
    %524 = vmatprep.subr.mxu0 0.0
    %525 = vmatpush1.xpose.msra.mxu0 0.0
    %526 = vmatprep.subr.mxu0 0.0
    %527 = vmatpush1.xpose.msra.mxu0 0.0
    %528 = vmatprep.subr.mxu0 0.0
    %529 = vmatpush1.xpose.msra.mxu0 0.0
    %530 = vmatprep.subr.mxu0 0.0
    %531 = vmatpush1.xpose.msra.mxu0 0.0
    %532 = vmatprep.subr.mxu0 0.0
    %533 = vmatpush1.xpose.msra.mxu0 0.0
    %534 = vmatprep.subr.mxu0 0.0
    %535 = vmatpush1.xpose.msra.mxu0 0.0
    %536 = vmatprep.subr.mxu0 0.0
    %537 = vmatpush1.xpose.msra.mxu0 0.0
    %538 = vmatprep.subr.mxu0 0.0
    %539 = vmatpush1.xpose.msra.mxu0 0.0
    %540 = vmatprep.subr.mxu0 0.0
    %541 = vmatpush1.xpose.msra.mxu0 %v508
    %542 = vmatprep.subr.mxu0 0.0
    %543 = vmatpush2.xpose.msra.mxu0 0.0
    %544 = vmatprep.subr.mxu0 0.0
    %545 = vmatpush2.xpose.msra.mxu0 0.0
    %546 = vmatprep.subr.mxu0 0.0
    %547 = vmatpush2.xpose.msra.mxu0 0.0
    %548 = vmatprep.subr.mxu0 0.0
    %549 = vmatpush2.xpose.msra.mxu0 0.0
    %550 = vmatprep.subr.mxu0 0.0
    %551 = vmatpush2.xpose.msra.mxu0 0.0
    %552 = vmatprep.subr.mxu0 0.0
    %553 = vmatpush2.xpose.msra.mxu0 0.0
    %554 = vmatprep.subr.mxu0 0.0
    %555 = vmatpush2.xpose.msra.mxu0 0.0
    %556 = vmatprep.subr.mxu0 0.0
    %557 = vmatpush2.xpose.msra.mxu0 0.0
    %558 = vmatprep.subr.mxu0 0.0
    %559 = vmatpush2.xpose.msra.mxu0 0.0
    %560 = vmatprep.subr.mxu0 0.0
    %561 = vmatpush2.xpose.msra.mxu0 0.0
    %562 = vmatprep.subr.mxu0 0.0
    %563 = vmatpush2.xpose.msra.mxu0 0.0
    %564 = vmatprep.subr.mxu0 0.0
    %565 = vmatpush2.xpose.msra.mxu0 0.0
    %566 = vmatprep.subr.mxu0 0.0
    %567 = vmatpush2.xpose.msra.mxu0 0.0
    %568 = vmatprep.subr.mxu0 0.0
    %569 = vmatpush2.xpose.msra.mxu0 0.0
    %570 = vmatprep.subr.mxu0 0.0
    %571 = vmatpush2.xpose.msra.mxu0 0.0
    %572 = vmatprep.subr.mxu0 0.0
    %573 = vmatpush2.xpose.msra.mxu0 0.0
    %574 = vmatprep.mubr.f32.mxu0 0.0
    %575 = vmatmul.mubr.f32.gmra.mxu0 %v506
    %v576 = vpop.f32.mrf.mxu0
    %v577 = vadd.f32 0.0, %v576
    %v578 = vpop.f32.mrf.mxu0
    %579 = vdwg.mxu0
    %v580 = vmul.f32 %v577, 0.35355338
    %v581 = vsel %vm166, %v580, -inf
    %582 = vmax.xlane.f32.xlu0 %v581
    %v583 = vpop.xlane.xlu0 %582
    %v584 = vsub.f32 %v580, %v583
    %v585 = vmul.f32 %v584, 1.442695
    %v586 = vpow.pop %v585
    %v587 = vsel %vm166, %v586, 0.0
    %588 = vadd.xlane.f32.xlu0 %v587
    %v589 = vpop.xlane.xlu0 %588
    %v590 = vrcp.pop %v589
    %v591 = vmul.f32 %v586, %v590
    %592 = vrot.lane.b32.xlu0 %v161, 48
    %v593 = vpop.permute.xlu0 %592
    %v596 = vsel %vm166, %v591, 0
    %598 = vmatprep.subr.mxu0 0.0
    %599 = vmatpush1.msra.mxu0 0.0
    %600 = vmatprep.subr.mxu0 0.0
    %601 = vmatpush1.msra.mxu0 0.0
    %602 = vmatprep.subr.mxu0 0.0
    %603 = vmatpush1.msra.mxu0 0.0
    %604 = vmatprep.subr.mxu0 0.0
    %605 = vmatpush1.msra.mxu0 0.0
    %606 = vmatprep.subr.mxu0 0.0
    %607 = vmatpush1.msra.mxu0 0.0
    %608 = vmatprep.subr.mxu0 0.0
    %609 = vmatpush1.msra.mxu0 0.0
    %610 = vmatprep.subr.mxu0 0.0
    %611 = vmatpush1.msra.mxu0 0.0
    %612 = vmatprep.subr.mxu0 0.0
    %613 = vmatpush1.msra.mxu0 0.0
    %614 = vmatprep.subr.mxu0 0.0
    %615 = vmatpush1.msra.mxu0 0.0
    %616 = vmatprep.subr.mxu0 0.0
    %617 = vmatpush1.msra.mxu0 0.0
    %618 = vmatprep.subr.mxu0 0.0
    %619 = vmatpush1.msra.mxu0 0.0
    %620 = vmatprep.subr.mxu0 0.0
    %621 = vmatpush1.msra.mxu0 0.0
    %622 = vmatprep.subr.mxu0 0.0
    %623 = vmatpush1.msra.mxu0 0.0
    %624 = vmatprep.subr.mxu0 0.0
    %625 = vmatpush1.msra.mxu0 0.0
    %626 = vmatprep.subr.mxu0 0.0
    %627 = vmatpush1.msra.mxu0 0.0
    %628 = vmatprep.subr.mxu0 0.0
    %629 = vmatpush1.msra.mxu0 %v593
    %630 = vmatprep.subr.mxu0 0.0
    %631 = vmatpush2.msra.mxu0 0.0
    %632 = vmatprep.subr.mxu0 0.0
    %633 = vmatpush2.msra.mxu0 0.0
    %634 = vmatprep.subr.mxu0 0.0
    %635 = vmatpush2.msra.mxu0 0.0
    %636 = vmatprep.subr.mxu0 0.0
    %637 = vmatpush2.msra.mxu0 0.0
    %638 = vmatprep.subr.mxu0 0.0
    %639 = vmatpush2.msra.mxu0 0.0
    %640 = vmatprep.subr.mxu0 0.0
    %641 = vmatpush2.msra.mxu0 0.0
    %642 = vmatprep.subr.mxu0 0.0
    %643 = vmatpush2.msra.mxu0 0.0
    %644 = vmatprep.subr.mxu0 0.0
    %645 = vmatpush2.msra.mxu0 0.0
    %646 = vmatprep.subr.mxu0 0.0
    %647 = vmatpush2.msra.mxu0 0.0
    %648 = vmatprep.subr.mxu0 0.0
    %649 = vmatpush2.msra.mxu0 0.0
    %650 = vmatprep.subr.mxu0 0.0
    %651 = vmatpush2.msra.mxu0 0.0
    %652 = vmatprep.subr.mxu0 0.0
    %653 = vmatpush2.msra.mxu0 0.0
    %654 = vmatprep.subr.mxu0 0.0
    %655 = vmatpush2.msra.mxu0 0.0
    %656 = vmatprep.subr.mxu0 0.0
    %657 = vmatpush2.msra.mxu0 0.0
    %658 = vmatprep.subr.mxu0 0.0
    %659 = vmatpush2.msra.mxu0 0.0
    %660 = vmatprep.subr.mxu0 0.0
    %661 = vmatpush2.msra.mxu0 0.0
    %662 = vmatprep.mubr.f32.mxu0 0.0
    %663 = vmatmul.mubr.f32.gmra.mxu0 %v596
    %v664 = vpop.f32.mrf.mxu0
    %v665 = vadd.f32 0.0, %v664
    %v666 = vpop.f32.mrf.mxu0
    %667 = vdwg.mxu0
    %669 = vrot.lane.b32.xlu0 %v665, 16
    %v670 = vpop.permute.xlu0 %669
    %vm672 = vcmask 195712
    %673 = vst.msk [vmem:[#allocation2] sm:$0xff] %vm672, %v670
    %674 = vrot.lane.b32.xlu0 %v161, 104
    %v675 = vpop.permute.xlu0 %674
    %676 = vrot.lane.b32.xlu0 %v161, 72
    %v677 = vpop.permute.xlu0 %676
    %v678 = vsel %vm166, %v675, 0
    %v680 = vsel %vm166, %v677, 0
    %682 = vmatprep.subr.mxu0 0.0
    %683 = vmatpush1.xpose.msra.mxu0 0.0
    %684 = vmatprep.subr.mxu0 0.0
    %685 = vmatpush1.xpose.msra.mxu0 0.0
    %686 = vmatprep.subr.mxu0 0.0
    %687 = vmatpush1.xpose.msra.mxu0 0.0
    %688 = vmatprep.subr.mxu0 0.0
    %689 = vmatpush1.xpose.msra.mxu0 0.0
    %690 = vmatprep.subr.mxu0 0.0
    %691 = vmatpush1.xpose.msra.mxu0 0.0
    %692 = vmatprep.subr.mxu0 0.0
    %693 = vmatpush1.xpose.msra.mxu0 0.0
    %694 = vmatprep.subr.mxu0 0.0
    %695 = vmatpush1.xpose.msra.mxu0 0.0
    %696 = vmatprep.subr.mxu0 0.0
    %697 = vmatpush1.xpose.msra.mxu0 0.0
    %698 = vmatprep.subr.mxu0 0.0
    %699 = vmatpush1.xpose.msra.mxu0 0.0
    %700 = vmatprep.subr.mxu0 0.0
    %701 = vmatpush1.xpose.msra.mxu0 0.0
    %702 = vmatprep.subr.mxu0 0.0
    %703 = vmatpush1.xpose.msra.mxu0 0.0
    %704 = vmatprep.subr.mxu0 0.0
    %705 = vmatpush1.xpose.msra.mxu0 0.0
    %706 = vmatprep.subr.mxu0 0.0
    %707 = vmatpush1.xpose.msra.mxu0 0.0
    %708 = vmatprep.subr.mxu0 0.0
    %709 = vmatpush1.xpose.msra.mxu0 0.0
    %710 = vmatprep.subr.mxu0 0.0
    %711 = vmatpush1.xpose.msra.mxu0 0.0
    %712 = vmatprep.subr.mxu0 0.0
    %713 = vmatpush1.xpose.msra.mxu0 %v680
    %714 = vmatprep.subr.mxu0 0.0
    %715 = vmatpush2.xpose.msra.mxu0 0.0
    %716 = vmatprep.subr.mxu0 0.0
    %717 = vmatpush2.xpose.msra.mxu0 0.0
    %718 = vmatprep.subr.mxu0 0.0
    %719 = vmatpush2.xpose.msra.mxu0 0.0
    %720 = vmatprep.subr.mxu0 0.0
    %721 = vmatpush2.xpose.msra.mxu0 0.0
    %722 = vmatprep.subr.mxu0 0.0
    %723 = vmatpush2.xpose.msra.mxu0 0.0
    %724 = vmatprep.subr.mxu0 0.0
    %725 = vmatpush2.xpose.msra.mxu0 0.0
    %726 = vmatprep.subr.mxu0 0.0
    %727 = vmatpush2.xpose.msra.mxu0 0.0
    %728 = vmatprep.subr.mxu0 0.0
    %729 = vmatpush2.xpose.msra.mxu0 0.0
    %730 = vmatprep.subr.mxu0 0.0
    %731 = vmatpush2.xpose.msra.mxu0 0.0
    %732 = vmatprep.subr.mxu0 0.0
    %733 = vmatpush2.xpose.msra.mxu0 0.0
    %734 = vmatprep.subr.mxu0 0.0
    %735 = vmatpush2.xpose.msra.mxu0 0.0
    %736 = vmatprep.subr.mxu0 0.0
    %737 = vmatpush2.xpose.msra.mxu0 0.0
    %738 = vmatprep.subr.mxu0 0.0
    %739 = vmatpush2.xpose.msra.mxu0 0.0
    %740 = vmatprep.subr.mxu0 0.0
    %741 = vmatpush2.xpose.msra.mxu0 0.0
    %742 = vmatprep.subr.mxu0 0.0
    %743 = vmatpush2.xpose.msra.mxu0 0.0
    %744 = vmatprep.subr.mxu0 0.0
    %745 = vmatpush2.xpose.msra.mxu0 0.0
    %746 = vmatprep.mubr.f32.mxu0 0.0
    %747 = vmatmul.mubr.f32.gmra.mxu0 %v678
    %v748 = vpop.f32.mrf.mxu0
    %v749 = vadd.f32 0.0, %v748
    %v750 = vpop.f32.mrf.mxu0
    %751 = vdwg.mxu0
    %v752 = vmul.f32 %v749, 0.35355338
    %v753 = vsel %vm166, %v752, -inf
    %754 = vmax.xlane.f32.xlu0 %v753
    %v755 = vpop.xlane.xlu0 %754
    %v756 = vsub.f32 %v752, %v755
    %v757 = vmul.f32 %v756, 1.442695
    %v758 = vpow.pop %v757
    %v759 = vsel %vm166, %v758, 0.0
    %760 = vadd.xlane.f32.xlu0 %v759
    %v761 = vpop.xlane.xlu0 %760
    %v762 = vrcp.pop %v761
    %v763 = vmul.f32 %v758, %v762
    %764 = vrot.lane.b32.xlu0 %v161, 40
    %v765 = vpop.permute.xlu0 %764
    %v768 = vsel %vm166, %v763, 0
    %770 = vmatprep.subr.mxu0 0.0
    %771 = vmatpush1.msra.mxu0 0.0
    %772 = vmatprep.subr.mxu0 0.0
    %773 = vmatpush1.msra.mxu0 0.0
    %774 = vmatprep.subr.mxu0 0.0
    %775 = vmatpush1.msra.mxu0 0.0
    %776 = vmatprep.subr.mxu0 0.0
    %777 = vmatpush1.msra.mxu0 0.0
    %778 = vmatprep.subr.mxu0 0.0
    %779 = vmatpush1.msra.mxu0 0.0
    %780 = vmatprep.subr.mxu0 0.0
    %781 = vmatpush1.msra.mxu0 0.0
    %782 = vmatprep.subr.mxu0 0.0
    %783 = vmatpush1.msra.mxu0 0.0
    %784 = vmatprep.subr.mxu0 0.0
    %785 = vmatpush1.msra.mxu0 0.0
    %786 = vmatprep.subr.mxu0 0.0
    %787 = vmatpush1.msra.mxu0 0.0
    %788 = vmatprep.subr.mxu0 0.0
    %789 = vmatpush1.msra.mxu0 0.0
    %790 = vmatprep.subr.mxu0 0.0
    %791 = vmatpush1.msra.mxu0 0.0
    %792 = vmatprep.subr.mxu0 0.0
    %793 = vmatpush1.msra.mxu0 0.0
    %794 = vmatprep.subr.mxu0 0.0
    %795 = vmatpush1.msra.mxu0 0.0
    %796 = vmatprep.subr.mxu0 0.0
    %797 = vmatpush1.msra.mxu0 0.0
    %798 = vmatprep.subr.mxu0 0.0
    %799 = vmatpush1.msra.mxu0 0.0
    %800 = vmatprep.subr.mxu0 0.0
    %801 = vmatpush1.msra.mxu0 %v765
    %802 = vmatprep.subr.mxu0 0.0
    %803 = vmatpush2.msra.mxu0 0.0
    %804 = vmatprep.subr.mxu0 0.0
    %805 = vmatpush2.msra.mxu0 0.0
    %806 = vmatprep.subr.mxu0 0.0
    %807 = vmatpush2.msra.mxu0 0.0
    %808 = vmatprep.subr.mxu0 0.0
    %809 = vmatpush2.msra.mxu0 0.0
    %810 = vmatprep.subr.mxu0 0.0
    %811 = vmatpush2.msra.mxu0 0.0
    %812 = vmatprep.subr.mxu0 0.0
    %813 = vmatpush2.msra.mxu0 0.0
    %814 = vmatprep.subr.mxu0 0.0
    %815 = vmatpush2.msra.mxu0 0.0
    %816 = vmatprep.subr.mxu0 0.0
    %817 = vmatpush2.msra.mxu0 0.0
    %818 = vmatprep.subr.mxu0 0.0
    %819 = vmatpush2.msra.mxu0 0.0
    %820 = vmatprep.subr.mxu0 0.0
    %821 = vmatpush2.msra.mxu0 0.0
    %822 = vmatprep.subr.mxu0 0.0
    %823 = vmatpush2.msra.mxu0 0.0
    %824 = vmatprep.subr.mxu0 0.0
    %825 = vmatpush2.msra.mxu0 0.0
    %826 = vmatprep.subr.mxu0 0.0
    %827 = vmatpush2.msra.mxu0 0.0
    %828 = vmatprep.subr.mxu0 0.0
    %829 = vmatpush2.msra.mxu0 0.0
    %830 = vmatprep.subr.mxu0 0.0
    %831 = vmatpush2.msra.mxu0 0.0
    %832 = vmatprep.subr.mxu0 0.0
    %833 = vmatpush2.msra.mxu0 0.0
    %834 = vmatprep.mubr.f32.mxu0 0.0
    %835 = vmatmul.mubr.f32.gmra.mxu0 %v768
    %v836 = vpop.f32.mrf.mxu0
    %v837 = vadd.f32 0.0, %v836
    %v838 = vpop.f32.mrf.mxu0
    %839 = vdwg.mxu0
    %841 = vrot.lane.b32.xlu0 %v837, 24
    %v842 = vpop.permute.xlu0 %841
    %vm844 = vcmask 261312
    %845 = vst.msk [vmem:[#allocation2] sm:$0xff] %vm844, %v842
    %847 = vrot.lane.b32.xlu0 %v162, 96
    %v848 = vpop.permute.xlu0 %847
    %v849 = vsel %vm166, %v162, 0
    %v851 = vsel %vm166, %v848, 0
    %853 = vmatprep.subr.mxu0 0.0
    %854 = vmatpush1.xpose.msra.mxu0 0.0
    %855 = vmatprep.subr.mxu0 0.0
    %856 = vmatpush1.xpose.msra.mxu0 0.0
    %857 = vmatprep.subr.mxu0 0.0
    %858 = vmatpush1.xpose.msra.mxu0 0.0
    %859 = vmatprep.subr.mxu0 0.0
    %860 = vmatpush1.xpose.msra.mxu0 0.0
    %861 = vmatprep.subr.mxu0 0.0
    %862 = vmatpush1.xpose.msra.mxu0 0.0
    %863 = vmatprep.subr.mxu0 0.0
    %864 = vmatpush1.xpose.msra.mxu0 0.0
    %865 = vmatprep.subr.mxu0 0.0
    %866 = vmatpush1.xpose.msra.mxu0 0.0
    %867 = vmatprep.subr.mxu0 0.0
    %868 = vmatpush1.xpose.msra.mxu0 0.0
    %869 = vmatprep.subr.mxu0 0.0
    %870 = vmatpush1.xpose.msra.mxu0 0.0
    %871 = vmatprep.subr.mxu0 0.0
    %872 = vmatpush1.xpose.msra.mxu0 0.0
    %873 = vmatprep.subr.mxu0 0.0
    %874 = vmatpush1.xpose.msra.mxu0 0.0
    %875 = vmatprep.subr.mxu0 0.0
    %876 = vmatpush1.xpose.msra.mxu0 0.0
    %877 = vmatprep.subr.mxu0 0.0
    %878 = vmatpush1.xpose.msra.mxu0 0.0
    %879 = vmatprep.subr.mxu0 0.0
    %880 = vmatpush1.xpose.msra.mxu0 0.0
    %881 = vmatprep.subr.mxu0 0.0
    %882 = vmatpush1.xpose.msra.mxu0 0.0
    %883 = vmatprep.subr.mxu0 0.0
    %884 = vmatpush1.xpose.msra.mxu0 %v851
    %885 = vmatprep.subr.mxu0 0.0
    %886 = vmatpush2.xpose.msra.mxu0 0.0
    %887 = vmatprep.subr.mxu0 0.0
    %888 = vmatpush2.xpose.msra.mxu0 0.0
    %889 = vmatprep.subr.mxu0 0.0
    %890 = vmatpush2.xpose.msra.mxu0 0.0
    %891 = vmatprep.subr.mxu0 0.0
    %892 = vmatpush2.xpose.msra.mxu0 0.0
    %893 = vmatprep.subr.mxu0 0.0
    %894 = vmatpush2.xpose.msra.mxu0 0.0
    %895 = vmatprep.subr.mxu0 0.0
    %896 = vmatpush2.xpose.msra.mxu0 0.0
    %897 = vmatprep.subr.mxu0 0.0
    %898 = vmatpush2.xpose.msra.mxu0 0.0
    %899 = vmatprep.subr.mxu0 0.0
    %900 = vmatpush2.xpose.msra.mxu0 0.0
    %901 = vmatprep.subr.mxu0 0.0
    %902 = vmatpush2.xpose.msra.mxu0 0.0
    %903 = vmatprep.subr.mxu0 0.0
    %904 = vmatpush2.xpose.msra.mxu0 0.0
    %905 = vmatprep.subr.mxu0 0.0
    %906 = vmatpush2.xpose.msra.mxu0 0.0
    %907 = vmatprep.subr.mxu0 0.0
    %908 = vmatpush2.xpose.msra.mxu0 0.0
    %909 = vmatprep.subr.mxu0 0.0
    %910 = vmatpush2.xpose.msra.mxu0 0.0
    %911 = vmatprep.subr.mxu0 0.0
    %912 = vmatpush2.xpose.msra.mxu0 0.0
    %913 = vmatprep.subr.mxu0 0.0
    %914 = vmatpush2.xpose.msra.mxu0 0.0
    %915 = vmatprep.subr.mxu0 0.0
    %916 = vmatpush2.xpose.msra.mxu0 0.0
    %917 = vmatprep.mubr.f32.mxu0 0.0
    %918 = vmatmul.mubr.f32.gmra.mxu0 %v849
    %v919 = vpop.f32.mrf.mxu0
    %v920 = vadd.f32 0.0, %v919
    %v921 = vpop.f32.mrf.mxu0
    %922 = vdwg.mxu0
    %v923 = vmul.f32 %v920, 0.35355338
    %v924 = vsel %vm166, %v923, -inf
    %925 = vmax.xlane.f32.xlu0 %v924
    %v926 = vpop.xlane.xlu0 %925
    %v927 = vsub.f32 %v923, %v926
    %v928 = vmul.f32 %v927, 1.442695
    %v929 = vpow.pop %v928
    %v930 = vsel %vm166, %v929, 0.0
    %931 = vadd.xlane.f32.xlu0 %v930
    %v932 = vpop.xlane.xlu0 %931
    %v933 = vrcp.pop %v932
    %v934 = vmul.f32 %v929, %v933
    %935 = vrot.lane.b32.xlu0 %v162, 64
    %v936 = vpop.permute.xlu0 %935
    %v939 = vsel %vm166, %v934, 0
    %941 = vmatprep.subr.mxu0 0.0
    %942 = vmatpush1.msra.mxu0 0.0
    %943 = vmatprep.subr.mxu0 0.0
    %944 = vmatpush1.msra.mxu0 0.0
    %945 = vmatprep.subr.mxu0 0.0
    %946 = vmatpush1.msra.mxu0 0.0
    %947 = vmatprep.subr.mxu0 0.0
    %948 = vmatpush1.msra.mxu0 0.0
    %949 = vmatprep.subr.mxu0 0.0
    %950 = vmatpush1.msra.mxu0 0.0
    %951 = vmatprep.subr.mxu0 0.0
    %952 = vmatpush1.msra.mxu0 0.0
    %953 = vmatprep.subr.mxu0 0.0
    %954 = vmatpush1.msra.mxu0 0.0
    %955 = vmatprep.subr.mxu0 0.0
    %956 = vmatpush1.msra.mxu0 0.0
    %957 = vmatprep.subr.mxu0 0.0
    %958 = vmatpush1.msra.mxu0 0.0
    %959 = vmatprep.subr.mxu0 0.0
    %960 = vmatpush1.msra.mxu0 0.0
    %961 = vmatprep.subr.mxu0 0.0
    %962 = vmatpush1.msra.mxu0 0.0
    %963 = vmatprep.subr.mxu0 0.0
    %964 = vmatpush1.msra.mxu0 0.0
    %965 = vmatprep.subr.mxu0 0.0
    %966 = vmatpush1.msra.mxu0 0.0
    %967 = vmatprep.subr.mxu0 0.0
    %968 = vmatpush1.msra.mxu0 0.0
    %969 = vmatprep.subr.mxu0 0.0
    %970 = vmatpush1.msra.mxu0 0.0
    %971 = vmatprep.subr.mxu0 0.0
    %972 = vmatpush1.msra.mxu0 %v936
    %973 = vmatprep.subr.mxu0 0.0
    %974 = vmatpush2.msra.mxu0 0.0
    %975 = vmatprep.subr.mxu0 0.0
    %976 = vmatpush2.msra.mxu0 0.0
    %977 = vmatprep.subr.mxu0 0.0
    %978 = vmatpush2.msra.mxu0 0.0
    %979 = vmatprep.subr.mxu0 0.0
    %980 = vmatpush2.msra.mxu0 0.0
    %981 = vmatprep.subr.mxu0 0.0
    %982 = vmatpush2.msra.mxu0 0.0
    %983 = vmatprep.subr.mxu0 0.0
    %984 = vmatpush2.msra.mxu0 0.0
    %985 = vmatprep.subr.mxu0 0.0
    %986 = vmatpush2.msra.mxu0 0.0
    %987 = vmatprep.subr.mxu0 0.0
    %988 = vmatpush2.msra.mxu0 0.0
    %989 = vmatprep.subr.mxu0 0.0
    %990 = vmatpush2.msra.mxu0 0.0
    %991 = vmatprep.subr.mxu0 0.0
    %992 = vmatpush2.msra.mxu0 0.0
    %993 = vmatprep.subr.mxu0 0.0
    %994 = vmatpush2.msra.mxu0 0.0
    %995 = vmatprep.subr.mxu0 0.0
    %996 = vmatpush2.msra.mxu0 0.0
    %997 = vmatprep.subr.mxu0 0.0
    %998 = vmatpush2.msra.mxu0 0.0
    %999 = vmatprep.subr.mxu0 0.0
    %1000 = vmatpush2.msra.mxu0 0.0
    %1001 = vmatprep.subr.mxu0 0.0
    %1002 = vmatpush2.msra.mxu0 0.0
    %1003 = vmatprep.subr.mxu0 0.0
    %1004 = vmatpush2.msra.mxu0 0.0
    %1005 = vmatprep.mubr.f32.mxu0 0.0
    %1006 = vmatmul.mubr.f32.gmra.mxu0 %v939
    %v1007 = vpop.f32.mrf.mxu0
    %v1008 = vadd.f32 0.0, %v1007
    %v1009 = vpop.f32.mrf.mxu0
    %1010 = vdwg.mxu0
    %1011 = vst.msk [vmem:[#allocation2 + $0x8] sm:$0xff] %vm166, %v1008
    %1012 = vrot.lane.b32.xlu0 %v162, 120
    %v1013 = vpop.permute.xlu0 %1012
    %1014 = vrot.lane.b32.xlu0 %v162, 88
    %v1015 = vpop.permute.xlu0 %1014
    %v1016 = vsel %vm166, %v1013, 0
    %v1018 = vsel %vm166, %v1015, 0
    %1020 = vmatprep.subr.mxu0 0.0
    %1021 = vmatpush1.xpose.msra.mxu0 0.0
    %1022 = vmatprep.subr.mxu0 0.0
    %1023 = vmatpush1.xpose.msra.mxu0 0.0
    %1024 = vmatprep.subr.mxu0 0.0
    %1025 = vmatpush1.xpose.msra.mxu0 0.0
    %1026 = vmatprep.subr.mxu0 0.0
    %1027 = vmatpush1.xpose.msra.mxu0 0.0
    %1028 = vmatprep.subr.mxu0 0.0
    %1029 = vmatpush1.xpose.msra.mxu0 0.0
    %1030 = vmatprep.subr.mxu0 0.0
    %1031 = vmatpush1.xpose.msra.mxu0 0.0
    %1032 = vmatprep.subr.mxu0 0.0
    %1033 = vmatpush1.xpose.msra.mxu0 0.0
    %1034 = vmatprep.subr.mxu0 0.0
    %1035 = vmatpush1.xpose.msra.mxu0 0.0
    %1036 = vmatprep.subr.mxu0 0.0
    %1037 = vmatpush1.xpose.msra.mxu0 0.0
    %1038 = vmatprep.subr.mxu0 0.0
    %1039 = vmatpush1.xpose.msra.mxu0 0.0
    %1040 = vmatprep.subr.mxu0 0.0
    %1041 = vmatpush1.xpose.msra.mxu0 0.0
    %1042 = vmatprep.subr.mxu0 0.0
    %1043 = vmatpush1.xpose.msra.mxu0 0.0
    %1044 = vmatprep.subr.mxu0 0.0
    %1045 = vmatpush1.xpose.msra.mxu0 0.0
    %1046 = vmatprep.subr.mxu0 0.0
    %1047 = vmatpush1.xpose.msra.mxu0 0.0
    %1048 = vmatprep.subr.mxu0 0.0
    %1049 = vmatpush1.xpose.msra.mxu0 0.0
    %1050 = vmatprep.subr.mxu0 0.0
    %1051 = vmatpush1.xpose.msra.mxu0 %v1018
    %1052 = vmatprep.subr.mxu0 0.0
    %1053 = vmatpush2.xpose.msra.mxu0 0.0
    %1054 = vmatprep.subr.mxu0 0.0
    %1055 = vmatpush2.xpose.msra.mxu0 0.0
    %1056 = vmatprep.subr.mxu0 0.0
    %1057 = vmatpush2.xpose.msra.mxu0 0.0
    %1058 = vmatprep.subr.mxu0 0.0
    %1059 = vmatpush2.xpose.msra.mxu0 0.0
    %1060 = vmatprep.subr.mxu0 0.0
    %1061 = vmatpush2.xpose.msra.mxu0 0.0
    %1062 = vmatprep.subr.mxu0 0.0
    %1063 = vmatpush2.xpose.msra.mxu0 0.0
    %1064 = vmatprep.subr.mxu0 0.0
    %1065 = vmatpush2.xpose.msra.mxu0 0.0
    %1066 = vmatprep.subr.mxu0 0.0
    %1067 = vmatpush2.xpose.msra.mxu0 0.0
    %1068 = vmatprep.subr.mxu0 0.0
    %1069 = vmatpush2.xpose.msra.mxu0 0.0
    %1070 = vmatprep.subr.mxu0 0.0
    %1071 = vmatpush2.xpose.msra.mxu0 0.0
    %1072 = vmatprep.subr.mxu0 0.0
    %1073 = vmatpush2.xpose.msra.mxu0 0.0
    %1074 = vmatprep.subr.mxu0 0.0
    %1075 = vmatpush2.xpose.msra.mxu0 0.0
    %1076 = vmatprep.subr.mxu0 0.0
    %1077 = vmatpush2.xpose.msra.mxu0 0.0
    %1078 = vmatprep.subr.mxu0 0.0
    %1079 = vmatpush2.xpose.msra.mxu0 0.0
    %1080 = vmatprep.subr.mxu0 0.0
    %1081 = vmatpush2.xpose.msra.mxu0 0.0
    %1082 = vmatprep.subr.mxu0 0.0
    %1083 = vmatpush2.xpose.msra.mxu0 0.0
    %1084 = vmatprep.mubr.f32.mxu0 0.0
    %1085 = vmatmul.mubr.f32.gmra.mxu0 %v1016
    %v1086 = vpop.f32.mrf.mxu0
    %v1087 = vadd.f32 0.0, %v1086
    %v1088 = vpop.f32.mrf.mxu0
    %1089 = vdwg.mxu0
    %v1090 = vmul.f32 %v1087, 0.35355338
    %v1091 = vsel %vm166, %v1090, -inf
    %1092 = vmax.xlane.f32.xlu0 %v1091
    %v1093 = vpop.xlane.xlu0 %1092
    %v1094 = vsub.f32 %v1090, %v1093
    %v1095 = vmul.f32 %v1094, 1.442695
    %v1096 = vpow.pop %v1095
    %v1097 = vsel %vm166, %v1096, 0.0
    %1098 = vadd.xlane.f32.xlu0 %v1097
    %v1099 = vpop.xlane.xlu0 %1098
    %v1100 = vrcp.pop %v1099
    %v1101 = vmul.f32 %v1096, %v1100
    %1102 = vrot.lane.b32.xlu0 %v162, 56
    %v1103 = vpop.permute.xlu0 %1102
    %v1106 = vsel %vm166, %v1101, 0
    %1108 = vmatprep.subr.mxu0 0.0
    %1109 = vmatpush1.msra.mxu0 0.0
    %1110 = vmatprep.subr.mxu0 0.0
    %1111 = vmatpush1.msra.mxu0 0.0
    %1112 = vmatprep.subr.mxu0 0.0
    %1113 = vmatpush1.msra.mxu0 0.0
    %1114 = vmatprep.subr.mxu0 0.0
    %1115 = vmatpush1.msra.mxu0 0.0
    %1116 = vmatprep.subr.mxu0 0.0
    %1117 = vmatpush1.msra.mxu0 0.0
    %1118 = vmatprep.subr.mxu0 0.0
    %1119 = vmatpush1.msra.mxu0 0.0
    %1120 = vmatprep.subr.mxu0 0.0
    %1121 = vmatpush1.msra.mxu0 0.0
    %1122 = vmatprep.subr.mxu0 0.0
    %1123 = vmatpush1.msra.mxu0 0.0
    %1124 = vmatprep.subr.mxu0 0.0
    %1125 = vmatpush1.msra.mxu0 0.0
    %1126 = vmatprep.subr.mxu0 0.0
    %1127 = vmatpush1.msra.mxu0 0.0
    %1128 = vmatprep.subr.mxu0 0.0
    %1129 = vmatpush1.msra.mxu0 0.0
    %1130 = vmatprep.subr.mxu0 0.0
    %1131 = vmatpush1.msra.mxu0 0.0
    %1132 = vmatprep.subr.mxu0 0.0
    %1133 = vmatpush1.msra.mxu0 0.0
    %1134 = vmatprep.subr.mxu0 0.0
    %1135 = vmatpush1.msra.mxu0 0.0
    %1136 = vmatprep.subr.mxu0 0.0
    %1137 = vmatpush1.msra.mxu0 0.0
    %1138 = vmatprep.subr.mxu0 0.0
    %1139 = vmatpush1.msra.mxu0 %v1103
    %1140 = vmatprep.subr.mxu0 0.0
    %1141 = vmatpush2.msra.mxu0 0.0
    %1142 = vmatprep.subr.mxu0 0.0
    %1143 = vmatpush2.msra.mxu0 0.0
    %1144 = vmatprep.subr.mxu0 0.0
    %1145 = vmatpush2.msra.mxu0 0.0
    %1146 = vmatprep.subr.mxu0 0.0
    %1147 = vmatpush2.msra.mxu0 0.0
    %1148 = vmatprep.subr.mxu0 0.0
    %1149 = vmatpush2.msra.mxu0 0.0
    %1150 = vmatprep.subr.mxu0 0.0
    %1151 = vmatpush2.msra.mxu0 0.0
    %1152 = vmatprep.subr.mxu0 0.0
    %1153 = vmatpush2.msra.mxu0 0.0
    %1154 = vmatprep.subr.mxu0 0.0
    %1155 = vmatpush2.msra.mxu0 0.0
    %1156 = vmatprep.subr.mxu0 0.0
    %1157 = vmatpush2.msra.mxu0 0.0
    %1158 = vmatprep.subr.mxu0 0.0
    %1159 = vmatpush2.msra.mxu0 0.0
    %1160 = vmatprep.subr.mxu0 0.0
    %1161 = vmatpush2.msra.mxu0 0.0
    %1162 = vmatprep.subr.mxu0 0.0
    %1163 = vmatpush2.msra.mxu0 0.0
    %1164 = vmatprep.subr.mxu0 0.0
    %1165 = vmatpush2.msra.mxu0 0.0
    %1166 = vmatprep.subr.mxu0 0.0
    %1167 = vmatpush2.msra.mxu0 0.0
    %1168 = vmatprep.subr.mxu0 0.0
    %1169 = vmatpush2.msra.mxu0 0.0
    %1170 = vmatprep.subr.mxu0 0.0
    %1171 = vmatpush2.msra.mxu0 0.0
    %1172 = vmatprep.mubr.f32.mxu0 0.0
    %1173 = vmatmul.mubr.f32.gmra.mxu0 %v1106
    %v1174 = vpop.f32.mrf.mxu0
    %v1175 = vadd.f32 0.0, %v1174
    %v1176 = vpop.f32.mrf.mxu0
    %1177 = vdwg.mxu0
    %1179 = vrot.lane.b32.xlu0 %v1175, 8
    %v1180 = vpop.permute.xlu0 %1179
    %1182 = vst.msk [vmem:[#allocation2 + $0x8] sm:$0xff] %vm500, %v1180
    %1183 = vrot.lane.b32.xlu0 %v162, 112
    %v1184 = vpop.permute.xlu0 %1183
    %1185 = vrot.lane.b32.xlu0 %v162, 80
    %v1186 = vpop.permute.xlu0 %1185
    %v1187 = vsel %vm166, %v1184, 0
    %v1189 = vsel %vm166, %v1186, 0
    %1191 = vmatprep.subr.mxu0 0.0
    %1192 = vmatpush1.xpose.msra.mxu0 0.0
    %1193 = vmatprep.subr.mxu0 0.0
    %1194 = vmatpush1.xpose.msra.mxu0 0.0
    %1195 = vmatprep.subr.mxu0 0.0
    %1196 = vmatpush1.xpose.msra.mxu0 0.0
    %1197 = vmatprep.subr.mxu0 0.0
    %1198 = vmatpush1.xpose.msra.mxu0 0.0
    %1199 = vmatprep.subr.mxu0 0.0
    %1200 = vmatpush1.xpose.msra.mxu0 0.0
    %1201 = vmatprep.subr.mxu0 0.0
    %1202 = vmatpush1.xpose.msra.mxu0 0.0
    %1203 = vmatprep.subr.mxu0 0.0
    %1204 = vmatpush1.xpose.msra.mxu0 0.0
    %1205 = vmatprep.subr.mxu0 0.0
    %1206 = vmatpush1.xpose.msra.mxu0 0.0
    %1207 = vmatprep.subr.mxu0 0.0
    %1208 = vmatpush1.xpose.msra.mxu0 0.0
    %1209 = vmatprep.subr.mxu0 0.0
    %1210 = vmatpush1.xpose.msra.mxu0 0.0
    %1211 = vmatprep.subr.mxu0 0.0
    %1212 = vmatpush1.xpose.msra.mxu0 0.0
    %1213 = vmatprep.subr.mxu0 0.0
    %1214 = vmatpush1.xpose.msra.mxu0 0.0
    %1215 = vmatprep.subr.mxu0 0.0
    %1216 = vmatpush1.xpose.msra.mxu0 0.0
    %1217 = vmatprep.subr.mxu0 0.0
    %1218 = vmatpush1.xpose.msra.mxu0 0.0
    %1219 = vmatprep.subr.mxu0 0.0
    %1220 = vmatpush1.xpose.msra.mxu0 0.0
    %1221 = vmatprep.subr.mxu0 0.0
    %1222 = vmatpush1.xpose.msra.mxu0 %v1189
    %1223 = vmatprep.subr.mxu0 0.0
    %1224 = vmatpush2.xpose.msra.mxu0 0.0
    %1225 = vmatprep.subr.mxu0 0.0
    %1226 = vmatpush2.xpose.msra.mxu0 0.0
    %1227 = vmatprep.subr.mxu0 0.0
    %1228 = vmatpush2.xpose.msra.mxu0 0.0
    %1229 = vmatprep.subr.mxu0 0.0
    %1230 = vmatpush2.xpose.msra.mxu0 0.0
    %1231 = vmatprep.subr.mxu0 0.0
    %1232 = vmatpush2.xpose.msra.mxu0 0.0
    %1233 = vmatprep.subr.mxu0 0.0
    %1234 = vmatpush2.xpose.msra.mxu0 0.0
    %1235 = vmatprep.subr.mxu0 0.0
    %1236 = vmatpush2.xpose.msra.mxu0 0.0
    %1237 = vmatprep.subr.mxu0 0.0
    %1238 = vmatpush2.xpose.msra.mxu0 0.0
    %1239 = vmatprep.subr.mxu0 0.0
    %1240 = vmatpush2.xpose.msra.mxu0 0.0
    %1241 = vmatprep.subr.mxu0 0.0
    %1242 = vmatpush2.xpose.msra.mxu0 0.0
    %1243 = vmatprep.subr.mxu0 0.0
    %1244 = vmatpush2.xpose.msra.mxu0 0.0
    %1245 = vmatprep.subr.mxu0 0.0
    %1246 = vmatpush2.xpose.msra.mxu0 0.0
    %1247 = vmatprep.subr.mxu0 0.0
    %1248 = vmatpush2.xpose.msra.mxu0 0.0
    %1249 = vmatprep.subr.mxu0 0.0
    %1250 = vmatpush2.xpose.msra.mxu0 0.0
    %1251 = vmatprep.subr.mxu0 0.0
    %1252 = vmatpush2.xpose.msra.mxu0 0.0
    %1253 = vmatprep.subr.mxu0 0.0
    %1254 = vmatpush2.xpose.msra.mxu0 0.0
    %1255 = vmatprep.mubr.f32.mxu0 0.0
    %1256 = vmatmul.mubr.f32.gmra.mxu0 %v1187
    %v1257 = vpop.f32.mrf.mxu0
    %v1258 = vadd.f32 0.0, %v1257
    %v1259 = vpop.f32.mrf.mxu0
    %1260 = vdwg.mxu0
    %v1261 = vmul.f32 %v1258, 0.35355338
    %v1262 = vsel %vm166, %v1261, -inf
    %1263 = vmax.xlane.f32.xlu0 %v1262
    %v1264 = vpop.xlane.xlu0 %1263
    %v1265 = vsub.f32 %v1261, %v1264
    %v1266 = vmul.f32 %v1265, 1.442695
    %v1267 = vpow.pop %v1266
    %v1268 = vsel %vm166, %v1267, 0.0
    %1269 = vadd.xlane.f32.xlu0 %v1268
    %v1270 = vpop.xlane.xlu0 %1269
    %v1271 = vrcp.pop %v1270
    %v1272 = vmul.f32 %v1267, %v1271
    %1273 = vrot.lane.b32.xlu0 %v162, 48
    %v1274 = vpop.permute.xlu0 %1273
    %v1277 = vsel %vm166, %v1272, 0
    %1279 = vmatprep.subr.mxu0 0.0
    %1280 = vmatpush1.msra.mxu0 0.0
    %1281 = vmatprep.subr.mxu0 0.0
    %1282 = vmatpush1.msra.mxu0 0.0
    %1283 = vmatprep.subr.mxu0 0.0
    %1284 = vmatpush1.msra.mxu0 0.0
    %1285 = vmatprep.subr.mxu0 0.0
    %1286 = vmatpush1.msra.mxu0 0.0
    %1287 = vmatprep.subr.mxu0 0.0
    %1288 = vmatpush1.msra.mxu0 0.0
    %1289 = vmatprep.subr.mxu0 0.0
    %1290 = vmatpush1.msra.mxu0 0.0
    %1291 = vmatprep.subr.mxu0 0.0
    %1292 = vmatpush1.msra.mxu0 0.0
    %1293 = vmatprep.subr.mxu0 0.0
    %1294 = vmatpush1.msra.mxu0 0.0
    %1295 = vmatprep.subr.mxu0 0.0
    %1296 = vmatpush1.msra.mxu0 0.0
    %1297 = vmatprep.subr.mxu0 0.0
    %1298 = vmatpush1.msra.mxu0 0.0
    %1299 = vmatprep.subr.mxu0 0.0
    %1300 = vmatpush1.msra.mxu0 0.0
    %1301 = vmatprep.subr.mxu0 0.0
    %1302 = vmatpush1.msra.mxu0 0.0
    %1303 = vmatprep.subr.mxu0 0.0
    %1304 = vmatpush1.msra.mxu0 0.0
    %1305 = vmatprep.subr.mxu0 0.0
    %1306 = vmatpush1.msra.mxu0 0.0
    %1307 = vmatprep.subr.mxu0 0.0
    %1308 = vmatpush1.msra.mxu0 0.0
    %1309 = vmatprep.subr.mxu0 0.0
    %1310 = vmatpush1.msra.mxu0 %v1274
    %1311 = vmatprep.subr.mxu0 0.0
    %1312 = vmatpush2.msra.mxu0 0.0
    %1313 = vmatprep.subr.mxu0 0.0
    %1314 = vmatpush2.msra.mxu0 0.0
    %1315 = vmatprep.subr.mxu0 0.0
    %1316 = vmatpush2.msra.mxu0 0.0
    %1317 = vmatprep.subr.mxu0 0.0
    %1318 = vmatpush2.msra.mxu0 0.0
    %1319 = vmatprep.subr.mxu0 0.0
    %1320 = vmatpush2.msra.mxu0 0.0
    %1321 = vmatprep.subr.mxu0 0.0
    %1322 = vmatpush2.msra.mxu0 0.0
    %1323 = vmatprep.subr.mxu0 0.0
    %1324 = vmatpush2.msra.mxu0 0.0
    %1325 = vmatprep.subr.mxu0 0.0
    %1326 = vmatpush2.msra.mxu0 0.0
    %1327 = vmatprep.subr.mxu0 0.0
    %1328 = vmatpush2.msra.mxu0 0.0
    %1329 = vmatprep.subr.mxu0 0.0
    %1330 = vmatpush2.msra.mxu0 0.0
    %1331 = vmatprep.subr.mxu0 0.0
    %1332 = vmatpush2.msra.mxu0 0.0
    %1333 = vmatprep.subr.mxu0 0.0
    %1334 = vmatpush2.msra.mxu0 0.0
    %1335 = vmatprep.subr.mxu0 0.0
    %1336 = vmatpush2.msra.mxu0 0.0
    %1337 = vmatprep.subr.mxu0 0.0
    %1338 = vmatpush2.msra.mxu0 0.0
    %1339 = vmatprep.subr.mxu0 0.0
    %1340 = vmatpush2.msra.mxu0 0.0
    %1341 = vmatprep.subr.mxu0 0.0
    %1342 = vmatpush2.msra.mxu0 0.0
    %1343 = vmatprep.mubr.f32.mxu0 0.0
    %1344 = vmatmul.mubr.f32.gmra.mxu0 %v1277
    %v1345 = vpop.f32.mrf.mxu0
    %v1346 = vadd.f32 0.0, %v1345
    %v1347 = vpop.f32.mrf.mxu0
    %1348 = vdwg.mxu0
    %1350 = vrot.lane.b32.xlu0 %v1346, 16
    %v1351 = vpop.permute.xlu0 %1350
    %1353 = vst.msk [vmem:[#allocation2 + $0x8] sm:$0xff] %vm672, %v1351
    %1354 = vrot.lane.b32.xlu0 %v162, 104
    %v1355 = vpop.permute.xlu0 %1354
    %1356 = vrot.lane.b32.xlu0 %v162, 72
    %v1357 = vpop.permute.xlu0 %1356
    %v1358 = vsel %vm166, %v1355, 0
    %v1360 = vsel %vm166, %v1357, 0
    %1362 = vmatprep.subr.mxu0 0.0
    %1363 = vmatpush1.xpose.msra.mxu0 0.0
    %1364 = vmatprep.subr.mxu0 0.0
    %1365 = vmatpush1.xpose.msra.mxu0 0.0
    %1366 = vmatprep.subr.mxu0 0.0
    %1367 = vmatpush1.xpose.msra.mxu0 0.0
    %1368 = vmatprep.subr.mxu0 0.0
    %1369 = vmatpush1.xpose.msra.mxu0 0.0
    %1370 = vmatprep.subr.mxu0 0.0
    %1371 = vmatpush1.xpose.msra.mxu0 0.0
    %1372 = vmatprep.subr.mxu0 0.0
    %1373 = vmatpush1.xpose.msra.mxu0 0.0
    %1374 = vmatprep.subr.mxu0 0.0
    %1375 = vmatpush1.xpose.msra.mxu0 0.0
    %1376 = vmatprep.subr.mxu0 0.0
    %1377 = vmatpush1.xpose.msra.mxu0 0.0
    %1378 = vmatprep.subr.mxu0 0.0
    %1379 = vmatpush1.xpose.msra.mxu0 0.0
    %1380 = vmatprep.subr.mxu0 0.0
    %1381 = vmatpush1.xpose.msra.mxu0 0.0
    %1382 = vmatprep.subr.mxu0 0.0
    %1383 = vmatpush1.xpose.msra.mxu0 0.0
    %1384 = vmatprep.subr.mxu0 0.0
    %1385 = vmatpush1.xpose.msra.mxu0 0.0
    %1386 = vmatprep.subr.mxu0 0.0
    %1387 = vmatpush1.xpose.msra.mxu0 0.0
    %1388 = vmatprep.subr.mxu0 0.0
    %1389 = vmatpush1.xpose.msra.mxu0 0.0
    %1390 = vmatprep.subr.mxu0 0.0
    %1391 = vmatpush1.xpose.msra.mxu0 0.0
    %1392 = vmatprep.subr.mxu0 0.0
    %1393 = vmatpush1.xpose.msra.mxu0 %v1360
    %1394 = vmatprep.subr.mxu0 0.0
    %1395 = vmatpush2.xpose.msra.mxu0 0.0
    %1396 = vmatprep.subr.mxu0 0.0
    %1397 = vmatpush2.xpose.msra.mxu0 0.0
    %1398 = vmatprep.subr.mxu0 0.0
    %1399 = vmatpush2.xpose.msra.mxu0 0.0
    %1400 = vmatprep.subr.mxu0 0.0
    %1401 = vmatpush2.xpose.msra.mxu0 0.0
    %1402 = vmatprep.subr.mxu0 0.0
    %1403 = vmatpush2.xpose.msra.mxu0 0.0
    %1404 = vmatprep.subr.mxu0 0.0
    %1405 = vmatpush2.xpose.msra.mxu0 0.0
    %1406 = vmatprep.subr.mxu0 0.0
    %1407 = vmatpush2.xpose.msra.mxu0 0.0
    %1408 = vmatprep.subr.mxu0 0.0
    %1409 = vmatpush2.xpose.msra.mxu0 0.0
    %1410 = vmatprep.subr.mxu0 0.0
    %1411 = vmatpush2.xpose.msra.mxu0 0.0
    %1412 = vmatprep.subr.mxu0 0.0
    %1413 = vmatpush2.xpose.msra.mxu0 0.0
    %1414 = vmatprep.subr.mxu0 0.0
    %1415 = vmatpush2.xpose.msra.mxu0 0.0
    %1416 = vmatprep.subr.mxu0 0.0
    %1417 = vmatpush2.xpose.msra.mxu0 0.0
    %1418 = vmatprep.subr.mxu0 0.0
    %1419 = vmatpush2.xpose.msra.mxu0 0.0
    %1420 = vmatprep.subr.mxu0 0.0
    %1421 = vmatpush2.xpose.msra.mxu0 0.0
    %1422 = vmatprep.subr.mxu0 0.0
    %1423 = vmatpush2.xpose.msra.mxu0 0.0
    %1424 = vmatprep.subr.mxu0 0.0
    %1425 = vmatpush2.xpose.msra.mxu0 0.0
    %1426 = vmatprep.mubr.f32.mxu0 0.0
    %1427 = vmatmul.mubr.f32.gmra.mxu0 %v1358
    %v1428 = vpop.f32.mrf.mxu0
    %v1429 = vadd.f32 0.0, %v1428
    %v1430 = vpop.f32.mrf.mxu0
    %1431 = vdwg.mxu0
    %v1432 = vmul.f32 %v1429, 0.35355338
    %v1433 = vsel %vm166, %v1432, -inf
    %1434 = vmax.xlane.f32.xlu0 %v1433
    %v1435 = vpop.xlane.xlu0 %1434
    %v1436 = vsub.f32 %v1432, %v1435
    %v1437 = vmul.f32 %v1436, 1.442695
    %v1438 = vpow.pop %v1437
    %v1439 = vsel %vm166, %v1438, 0.0
    %1440 = vadd.xlane.f32.xlu0 %v1439
    %v1441 = vpop.xlane.xlu0 %1440
    %v1442 = vrcp.pop %v1441
    %v1443 = vmul.f32 %v1438, %v1442
    %1444 = vrot.lane.b32.xlu0 %v162, 40
    %v1445 = vpop.permute.xlu0 %1444
    %v1448 = vsel %vm166, %v1443, 0
    %1450 = vmatprep.subr.mxu0 0.0
    %1451 = vmatpush1.msra.mxu0 0.0
    %1452 = vmatprep.subr.mxu0 0.0
    %1453 = vmatpush1.msra.mxu0 0.0
    %1454 = vmatprep.subr.mxu0 0.0
    %1455 = vmatpush1.msra.mxu0 0.0
    %1456 = vmatprep.subr.mxu0 0.0
    %1457 = vmatpush1.msra.mxu0 0.0
    %1458 = vmatprep.subr.mxu0 0.0
    %1459 = vmatpush1.msra.mxu0 0.0
    %1460 = vmatprep.subr.mxu0 0.0
    %1461 = vmatpush1.msra.mxu0 0.0
    %1462 = vmatprep.subr.mxu0 0.0
    %1463 = vmatpush1.msra.mxu0 0.0
    %1464 = vmatprep.subr.mxu0 0.0
    %1465 = vmatpush1.msra.mxu0 0.0
    %1466 = vmatprep.subr.mxu0 0.0
    %1467 = vmatpush1.msra.mxu0 0.0
    %1468 = vmatprep.subr.mxu0 0.0
    %1469 = vmatpush1.msra.mxu0 0.0
    %1470 = vmatprep.subr.mxu0 0.0
    %1471 = vmatpush1.msra.mxu0 0.0
    %1472 = vmatprep.subr.mxu0 0.0
    %1473 = vmatpush1.msra.mxu0 0.0
    %1474 = vmatprep.subr.mxu0 0.0
    %1475 = vmatpush1.msra.mxu0 0.0
    %1476 = vmatprep.subr.mxu0 0.0
    %1477 = vmatpush1.msra.mxu0 0.0
    %1478 = vmatprep.subr.mxu0 0.0
    %1479 = vmatpush1.msra.mxu0 0.0
    %1480 = vmatprep.subr.mxu0 0.0
    %1481 = vmatpush1.msra.mxu0 %v1445
    %1482 = vmatprep.subr.mxu0 0.0
    %1483 = vmatpush2.msra.mxu0 0.0
    %1484 = vmatprep.subr.mxu0 0.0
    %1485 = vmatpush2.msra.mxu0 0.0
    %1486 = vmatprep.subr.mxu0 0.0
    %1487 = vmatpush2.msra.mxu0 0.0
    %1488 = vmatprep.subr.mxu0 0.0
    %1489 = vmatpush2.msra.mxu0 0.0
    %1490 = vmatprep.subr.mxu0 0.0
    %1491 = vmatpush2.msra.mxu0 0.0
    %1492 = vmatprep.subr.mxu0 0.0
    %1493 = vmatpush2.msra.mxu0 0.0
    %1494 = vmatprep.subr.mxu0 0.0
    %1495 = vmatpush2.msra.mxu0 0.0
    %1496 = vmatprep.subr.mxu0 0.0
    %1497 = vmatpush2.msra.mxu0 0.0
    %1498 = vmatprep.subr.mxu0 0.0
    %1499 = vmatpush2.msra.mxu0 0.0
    %1500 = vmatprep.subr.mxu0 0.0
    %1501 = vmatpush2.msra.mxu0 0.0
    %1502 = vmatprep.subr.mxu0 0.0
    %1503 = vmatpush2.msra.mxu0 0.0
    %1504 = vmatprep.subr.mxu0 0.0
    %1505 = vmatpush2.msra.mxu0 0.0
    %1506 = vmatprep.subr.mxu0 0.0
    %1507 = vmatpush2.msra.mxu0 0.0
    %1508 = vmatprep.subr.mxu0 0.0
    %1509 = vmatpush2.msra.mxu0 0.0
    %1510 = vmatprep.subr.mxu0 0.0
    %1511 = vmatpush2.msra.mxu0 0.0
    %1512 = vmatprep.subr.mxu0 0.0
    %1513 = vmatpush2.msra.mxu0 0.0
    %1514 = vmatprep.mubr.f32.mxu0 0.0
    %1515 = vmatmul.mubr.f32.gmra.mxu0 %v1448
    %v1516 = vpop.f32.mrf.mxu0
    %v1517 = vadd.f32 0.0, %v1516
    %v1518 = vpop.f32.mrf.mxu0
    %1519 = vdwg.mxu0
    %1521 = vrot.lane.b32.xlu0 %v1517, 24
    %v1522 = vpop.permute.xlu0 %1521
    %1524 = vst.msk [vmem:[#allocation2 + $0x8] sm:$0xff] %vm844, %v1522
    %v1525 = vld [vmem:[#allocation2] sm:$0xff]
    %v1526 = vld [vmem:[#allocation2 + $0x8] sm:$0xff]
    %1528 = vrot.lane.b32.xlu0 %v160, 32
    %v1529 = vpop.permute.xlu0 %1528
    %v1532 = vsel %vm75, %v1525, 0
    %v1535 = vsel %vm75, %v1526, 0
    %1537 = vmatprep.subr.mxu0 0.0
    %1538 = vmatpush1.msra.mxu0 0.0
    %1539 = vmatprep.subr.mxu0 0.0
    %1540 = vmatpush1.msra.mxu0 0.0
    %1541 = vmatprep.subr.mxu0 0.0
    %1542 = vmatpush1.msra.mxu0 0.0
    %1543 = vmatprep.subr.mxu0 0.0
    %1544 = vmatpush1.msra.mxu0 0.0
    %1545 = vmatprep.subr.mxu0 0.0
    %1546 = vmatpush1.msra.mxu0 0.0
    %1547 = vmatprep.subr.mxu0 0.0
    %1548 = vmatpush1.msra.mxu0 0.0
    %1549 = vmatprep.subr.mxu0 0.0
    %1550 = vmatpush1.msra.mxu0 0.0
    %1551 = vmatprep.subr.mxu0 0.0
    %1552 = vmatpush1.msra.mxu0 0.0
    %1553 = vmatprep.subr.mxu0 0.0
    %1554 = vmatpush1.msra.mxu0 0.0
    %1555 = vmatprep.subr.mxu0 0.0
    %1556 = vmatpush1.msra.mxu0 0.0
    %1557 = vmatprep.subr.mxu0 0.0
    %1558 = vmatpush1.msra.mxu0 0.0
    %1559 = vmatprep.subr.mxu0 0.0
    %1560 = vmatpush1.msra.mxu0 0.0
    %1561 = vmatprep.subr.mxu0 0.0
    %1562 = vmatpush1.msra.mxu0 %v73
    %1563 = vmatprep.subr.mxu0 0.0
    %1564 = vmatpush1.msra.mxu0 %v69
    %1565 = vmatprep.subr.mxu0 0.0
    %1566 = vmatpush1.msra.mxu0 %v65
    %1567 = vmatprep.subr.mxu0 0.0
    %1568 = vmatpush1.msra.mxu0 %v61
    %1569 = vmatprep.subr.mxu0 0.0
    %1570 = vmatpush2.msra.mxu0 0.0
    %1571 = vmatprep.subr.mxu0 0.0
    %1572 = vmatpush2.msra.mxu0 0.0
    %1573 = vmatprep.subr.mxu0 0.0
    %1574 = vmatpush2.msra.mxu0 0.0
    %1575 = vmatprep.subr.mxu0 0.0
    %1576 = vmatpush2.msra.mxu0 0.0
    %1577 = vmatprep.subr.mxu0 0.0
    %1578 = vmatpush2.msra.mxu0 0.0
    %1579 = vmatprep.subr.mxu0 0.0
    %1580 = vmatpush2.msra.mxu0 0.0
    %1581 = vmatprep.subr.mxu0 0.0
    %1582 = vmatpush2.msra.mxu0 0.0
    %1583 = vmatprep.subr.mxu0 0.0
    %1584 = vmatpush2.msra.mxu0 0.0
    %1585 = vmatprep.subr.mxu0 0.0
    %1586 = vmatpush2.msra.mxu0 0.0
    %1587 = vmatprep.subr.mxu0 0.0
    %1588 = vmatpush2.msra.mxu0 0.0
    %1589 = vmatprep.subr.mxu0 0.0
    %1590 = vmatpush2.msra.mxu0 0.0
    %1591 = vmatprep.subr.mxu0 0.0
    %1592 = vmatpush2.msra.mxu0 0.0
    %1593 = vmatprep.subr.mxu0 0.0
    %1594 = vmatpush2.msra.mxu0 0.0
    %1595 = vmatprep.subr.mxu0 0.0
    %1596 = vmatpush2.msra.mxu0 0.0
    %1597 = vmatprep.subr.mxu0 0.0
    %1598 = vmatpush2.msra.mxu0 0.0
    %1599 = vmatprep.subr.mxu0 0.0
    %1600 = vmatpush2.msra.mxu0 0.0
    %1601 = vmatprep.mubr.f32.mxu0 0.0
    %1602 = vmatmul.mubr.f32.gmra.mxu0 %v1532
    %v1603 = vpop.f32.mrf.mxu0
    %v1604 = vadd.f32 %v1529, %v1603
    %v1605 = vpop.f32.mrf.mxu0
    %1606 = vmatprep.mubr.f32.mxu0 0.0
    %1607 = vmatmul.mubr.f32.gmra.mxu0 %v1535
    %v1608 = vpop.f32.mrf.mxu0
    %v1609 = vadd.f32 %v1529, %v1608
    %v1610 = vpop.f32.mrf.mxu0
    %1611 = vdwg.mxu0
    %v1612 = vadd.f32 %v1604, %v56
    %v1613 = vadd.f32 %v1609, %v57
    %v1614 = vsel %vm75, %v1612, 0.0
    %1615 = vadd.xlane.f32.xlu0 %v1614
    %v1616 = vpop.xlane.xlu0 %1615
    %v1617 = vsel %vm75, %v1613, 0.0
    %1618 = vadd.xlane.f32.xlu0 %v1617
    %v1619 = vpop.xlane.xlu0 %1618
    %v1620 = vrcp.pop 32.0
    %v1621 = vmul.f32 %v1616, %v1620
    %v1622 = vmul.f32 %v1619, %v1620
    %v1623 = vsub.f32 %v1612, %v1621
    %v1624 = vsub.f32 %v1613, %v1622
    %v1625 = vmul.f32 %v1623, %v1623
    %v1626 = vmul.f32 %v1624, %v1624
    %v1627 = vsel %vm75, %v1625, 0.0
    %1628 = vadd.xlane.f32.xlu0 %v1627
    %v1629 = vpop.xlane.xlu0 %1628
    %v1630 = vsel %vm75, %v1626, 0.0
    %1631 = vadd.xlane.f32.xlu0 %v1630
    %v1632 = vpop.xlane.xlu0 %1631
    %v1633 = vmul.f32 %v1629, %v1620
    %v1634 = vmul.f32 %v1632, %v1620
    %v1635 = vadd.f32 %v1633, 1e-05
    %v1636 = vadd.f32 %v1634, 1e-05
    %v1637 = vrsqrt.pop %v1635
    %v1638 = vrsqrt.pop %v1636
    %v1639 = vmul.f32 %v1623, %v1637
    %v1640 = vmul.f32 %v1624, %v1638
    %v1641 = vlaneseq
    %v1642 = vshrl.u32 %v1641, 7
    %v1643 = vsub.s32 2, %v1642
    %v1644 = vrot.slane %v74, %v1643
    %v1645 = vmul.f32 %v1639, %v1644
    %v1646 = vmul.f32 %v1640, %v1644
    %1648 = vrot.lane.b32.xlu0 %v1644, 96
    %v1649 = vpop.permute.xlu0 %1648
    %v1651 = vadd.f32 %v1645, %v1649
    %v1652 = vadd.f32 %v1646, %v1649
    %v1653 = vlaneseq
    %v1654 = vshrl.u32 %v1653, 7
    %v1655 = vsub.s32 1, %v1654
    %v1656 = vrot.slane %v74, %v1655
    %v1658 = vsel %vm75, %v1651, 0
    %v1661 = vsel %vm75, %v1652, 0
    %1663 = vmatprep.subr.mxu0 0.0
    %1664 = vmatpush1.msra.mxu0 0.0
    %1665 = vmatprep.subr.mxu0 0.0
    %1666 = vmatpush1.msra.mxu0 0.0
    %1667 = vmatprep.subr.mxu0 0.0
    %1668 = vmatpush1.msra.mxu0 0.0
    %1669 = vmatprep.subr.mxu0 0.0
    %1670 = vmatpush1.msra.mxu0 0.0
    %1671 = vmatprep.subr.mxu0 0.0
    %1672 = vmatpush1.msra.mxu0 0.0
    %1673 = vmatprep.subr.mxu0 0.0
    %1674 = vmatpush1.msra.mxu0 0.0
    %1675 = vmatprep.subr.mxu0 0.0
    %1676 = vmatpush1.msra.mxu0 0.0
    %1677 = vmatprep.subr.mxu0 0.0
    %1678 = vmatpush1.msra.mxu0 0.0
    %1679 = vmatprep.subr.mxu0 0.0
    %1680 = vmatpush1.msra.mxu0 0.0
    %1681 = vmatprep.subr.mxu0 0.0
    %1682 = vmatpush1.msra.mxu0 0.0
    %1683 = vmatprep.subr.mxu0 0.0
    %1684 = vmatpush1.msra.mxu0 0.0
    %1685 = vmatprep.subr.mxu0 0.0
    %1686 = vmatpush1.msra.mxu0 0.0
    %1687 = vmatprep.subr.mxu0 0.0
    %1688 = vmatpush1.msra.mxu0 %v71
    %1689 = vmatprep.subr.mxu0 0.0
    %1690 = vmatpush1.msra.mxu0 %v67
    %1691 = vmatprep.subr.mxu0 0.0
    %1692 = vmatpush1.msra.mxu0 %v63
    %1693 = vmatprep.subr.mxu0 0.0
    %1694 = vmatpush1.msra.mxu0 %v59
    %1695 = vmatprep.subr.mxu0 0.0
    %1696 = vmatpush2.msra.mxu0 0.0
    %1697 = vmatprep.subr.mxu0 0.0
    %1698 = vmatpush2.msra.mxu0 0.0
    %1699 = vmatprep.subr.mxu0 0.0
    %1700 = vmatpush2.msra.mxu0 0.0
    %1701 = vmatprep.subr.mxu0 0.0
    %1702 = vmatpush2.msra.mxu0 0.0
    %1703 = vmatprep.subr.mxu0 0.0
    %1704 = vmatpush2.msra.mxu0 0.0
    %1705 = vmatprep.subr.mxu0 0.0
    %1706 = vmatpush2.msra.mxu0 0.0
    %1707 = vmatprep.subr.mxu0 0.0
    %1708 = vmatpush2.msra.mxu0 0.0
    %1709 = vmatprep.subr.mxu0 0.0
    %1710 = vmatpush2.msra.mxu0 0.0
    %1711 = vmatprep.subr.mxu0 0.0
    %1712 = vmatpush2.msra.mxu0 0.0
    %1713 = vmatprep.subr.mxu0 0.0
    %1714 = vmatpush2.msra.mxu0 0.0
    %1715 = vmatprep.subr.mxu0 0.0
    %1716 = vmatpush2.msra.mxu0 0.0
    %1717 = vmatprep.subr.mxu0 0.0
    %1718 = vmatpush2.msra.mxu0 0.0
    %1719 = vmatprep.subr.mxu0 0.0
    %1720 = vmatpush2.msra.mxu0 0.0
    %1721 = vmatprep.subr.mxu0 0.0
    %1722 = vmatpush2.msra.mxu0 0.0
    %1723 = vmatprep.subr.mxu0 0.0
    %1724 = vmatpush2.msra.mxu0 0.0
    %1725 = vmatprep.subr.mxu0 0.0
    %1726 = vmatpush2.msra.mxu0 0.0
    %1727 = vmatprep.mubr.f32.mxu0 0.0
    %1728 = vmatmul.mubr.f32.gmra.mxu0 %v1658
    %v1729 = vpop.f32.mrf.mxu0
    %v1730 = vadd.f32 %v1656, %v1729
    %v1731 = vpop.f32.mrf.mxu0
    %1732 = vmatprep.mubr.f32.mxu0 0.0
    %1733 = vmatmul.mubr.f32.gmra.mxu0 %v1661
    %v1734 = vpop.f32.mrf.mxu0
    %v1735 = vadd.f32 %v1656, %v1734
    %v1736 = vpop.f32.mrf.mxu0
    %1737 = vdwg.mxu0
    %v1738 = vmax.f32 %v1730, 0.0
    %v1739 = vmax.f32 %v1735, 0.0
    %v1740 = vlaneseq
    %v1741 = vshrl.u32 %v1740, 7
    %v1742 = vsub.s32 3, %v1741
    %v1743 = vrot.slane %v74, %v1742
    %1744 = vmatprep.subr.mxu0 0.0
    %1745 = vmatpush1.xpose.msra.mxu0 0.0
    %1746 = vmatprep.subr.mxu0 0.0
    %1747 = vmatpush1.xpose.msra.mxu0 0.0
    %1748 = vmatprep.subr.mxu0 0.0
    %1749 = vmatpush1.xpose.msra.mxu0 0.0
    %1750 = vmatprep.subr.mxu0 0.0
    %1751 = vmatpush1.xpose.msra.mxu0 0.0
    %1752 = vmatprep.subr.mxu0 0.0
    %1753 = vmatpush1.xpose.msra.mxu0 0.0
    %1754 = vmatprep.subr.mxu0 0.0
    %1755 = vmatpush1.xpose.msra.mxu0 0.0
    %1756 = vmatprep.subr.mxu0 0.0
    %1757 = vmatpush1.xpose.msra.mxu0 0.0
    %1758 = vmatprep.subr.mxu0 0.0
    %1759 = vmatpush1.xpose.msra.mxu0 0.0
    %1760 = vmatprep.subr.mxu0 0.0
    %1761 = vmatpush1.xpose.msra.mxu0 0.0
    %1762 = vmatprep.subr.mxu0 0.0
    %1763 = vmatpush1.xpose.msra.mxu0 0.0
    %1764 = vmatprep.subr.mxu0 0.0
    %1765 = vmatpush1.xpose.msra.mxu0 0.0
    %1766 = vmatprep.subr.mxu0 0.0
    %1767 = vmatpush1.xpose.msra.mxu0 0.0
    %1768 = vmatprep.subr.mxu0 0.0
    %1769 = vmatpush1.xpose.msra.mxu0 %v72
    %1770 = vmatprep.subr.mxu0 0.0
    %1771 = vmatpush1.xpose.msra.mxu0 %v68
    %1772 = vmatprep.subr.mxu0 0.0
    %1773 = vmatpush1.xpose.msra.mxu0 %v64
    %1774 = vmatprep.subr.mxu0 0.0
    %1775 = vmatpush1.xpose.msra.mxu0 %v60
    %1776 = vmatprep.subr.mxu0 0.0
    %1777 = vmatpush2.xpose.msra.mxu0 0.0
    %1778 = vmatprep.subr.mxu0 0.0
    %1779 = vmatpush2.xpose.msra.mxu0 0.0
    %1780 = vmatprep.subr.mxu0 0.0
    %1781 = vmatpush2.xpose.msra.mxu0 0.0
    %1782 = vmatprep.subr.mxu0 0.0
    %1783 = vmatpush2.xpose.msra.mxu0 0.0
    %1784 = vmatprep.subr.mxu0 0.0
    %1785 = vmatpush2.xpose.msra.mxu0 0.0
    %1786 = vmatprep.subr.mxu0 0.0
    %1787 = vmatpush2.xpose.msra.mxu0 0.0
    %1788 = vmatprep.subr.mxu0 0.0
    %1789 = vmatpush2.xpose.msra.mxu0 0.0
    %1790 = vmatprep.subr.mxu0 0.0
    %1791 = vmatpush2.xpose.msra.mxu0 0.0
    %1792 = vmatprep.subr.mxu0 0.0
    %1793 = vmatpush2.xpose.msra.mxu0 0.0
    %1794 = vmatprep.subr.mxu0 0.0
    %1795 = vmatpush2.xpose.msra.mxu0 0.0
    %1796 = vmatprep.subr.mxu0 0.0
    %1797 = vmatpush2.xpose.msra.mxu0 0.0
    %1798 = vmatprep.subr.mxu0 0.0
    %1799 = vmatpush2.xpose.msra.mxu0 0.0
    %1800 = vmatprep.subr.mxu0 0.0
    %1801 = vmatpush2.xpose.msra.mxu0 0.0
    %1802 = vmatprep.subr.mxu0 0.0
    %1803 = vmatpush2.xpose.msra.mxu0 0.0
    %1804 = vmatprep.subr.mxu0 0.0
    %1805 = vmatpush2.xpose.msra.mxu0 0.0
    %1806 = vmatprep.subr.mxu0 0.0
    %1807 = vmatpush2.xpose.msra.mxu0 0.0
    %1808 = vmatprep.mubr.f32.mxu0 0.0
    %1809 = vmatmul.mubr.f32.gmra.mxu0 %v1738
    %v1810 = vpop.f32.mrf.mxu0
    %v1811 = vadd.f32 %v1743, %v1810
    %v1812 = vpop.f32.mrf.mxu0
    %1813 = vmatprep.mubr.f32.mxu0 0.0
    %1814 = vmatmul.mubr.f32.gmra.mxu0 %v1739
    %v1815 = vpop.f32.mrf.mxu0
    %v1816 = vadd.f32 %v1743, %v1815
    %v1817 = vpop.f32.mrf.mxu0
    %1818 = vdwg.mxu0
    %v1819 = vadd.f32 %v1811, %v1651
    %v1820 = vadd.f32 %v1816, %v1652
    %v1821 = vsel %vm75, %v1819, 0.0
    %1822 = vadd.xlane.f32.xlu0 %v1821
    %v1823 = vpop.xlane.xlu0 %1822
    %v1824 = vsel %vm75, %v1820, 0.0
    %1825 = vadd.xlane.f32.xlu0 %v1824
    %v1826 = vpop.xlane.xlu0 %1825
    %v1827 = vmul.f32 %v1823, %v1620
    %v1828 = vmul.f32 %v1826, %v1620
    %v1829 = vsub.f32 %v1819, %v1827
    %v1830 = vsub.f32 %v1820, %v1828
    %v1831 = vmul.f32 %v1829, %v1829
    %v1832 = vmul.f32 %v1830, %v1830
    %v1833 = vsel %vm75, %v1831, 0.0
    %1834 = vadd.xlane.f32.xlu0 %v1833
    %v1835 = vpop.xlane.xlu0 %1834
    %v1836 = vsel %vm75, %v1832, 0.0
    %1837 = vadd.xlane.f32.xlu0 %v1836
    %v1838 = vpop.xlane.xlu0 %1837
    %v1839 = vmul.f32 %v1835, %v1620
    %v1840 = vmul.f32 %v1838, %v1620
    %v1841 = vadd.f32 %v1839, 1e-05
    %v1842 = vadd.f32 %v1840, 1e-05
    %v1843 = vrsqrt.pop %v1841
    %v1844 = vrsqrt.pop %v1842
    %v1845 = vmul.f32 %v1829, %v1843
    %v1846 = vmul.f32 %v1830, %v1844
    %1847 = vrot.lane.b32.xlu0 %v1644, 64
    %v1848 = vpop.permute.xlu0 %1847
    %v1850 = vmul.f32 %v1845, %v1848
    %v1851 = vmul.f32 %v1846, %v1848
    %1852 = vrot.lane.b32.xlu0 %v1644, 32
    %v1853 = vpop.permute.xlu0 %1852
    %v1855 = vadd.f32 %v1850, %v1853
    %v1856 = vadd.f32 %v1851, %v1853
    %s1857 = scalar_lea.vmem [#allocation6], 128
    %v1858 = vld [vmem:[%s1857] sm:$0xff]
    %v1859 = vld [vmem:[%s1857 + $0x8] sm:$0xff]
    %v1860 = vld [vmem:[%s1857 + $0x10] sm:$0xff]
    %v1861 = vld [vmem:[%s1857 + $0x18] sm:$0xff]
    %v1862 = vld [vmem:[%s1857 + $0x20] sm:$0xff]
    %v1863 = vld [vmem:[%s1857 + $0x28] sm:$0xff]
    %v1864 = vld [vmem:[%s1857 + $0x30] sm:$0xff]
    %v1865 = vld [vmem:[%s1857 + $0x38] sm:$0xff]
    %v1866 = vld [vmem:[%s1857 + $0x40] sm:$0xff]
    %v1867 = vld [vmem:[%s1857 + $0x48] sm:$0xff]
    %v1868 = vld [vmem:[%s1857 + $0x50] sm:$0xff]
    %v1869 = vld [vmem:[%s1857 + $0x58] sm:$0xff]
    %v1870 = vld [vmem:[%s1857 + $0x60] sm:$0xff]
    %v1871 = vld [vmem:[%s1857 + $0x68] sm:$0xff]
    %v1872 = vld [vmem:[%s1857 + $0x70] sm:$0xff]
    %v1873 = vld [vmem:[%s1857 + $0x78] sm:$0xff]
    %s1874 = scalar_lea.vmem [#allocation8], 4
    %v1875 = vld [vmem:[%s1874] sm:$0xf]
    %v1877 = vsel %vm75, %v1855, 0
    %v1880 = vsel %vm75, %v1856, 0
    %1882 = vmatprep.subr.mxu0 0.0
    %1883 = vmatpush1.msra.mxu0 0.0
    %1884 = vmatprep.subr.mxu0 0.0
    %1885 = vmatpush1.msra.mxu0 0.0
    %1886 = vmatprep.subr.mxu0 0.0
    %1887 = vmatpush1.msra.mxu0 0.0
    %1888 = vmatprep.subr.mxu0 0.0
    %1889 = vmatpush1.msra.mxu0 0.0
    %1890 = vmatprep.subr.mxu0 0.0
    %1891 = vmatpush1.msra.mxu0 0.0
    %1892 = vmatprep.subr.mxu0 0.0
    %1893 = vmatpush1.msra.mxu0 0.0
    %1894 = vmatprep.subr.mxu0 0.0
    %1895 = vmatpush1.msra.mxu0 0.0
    %1896 = vmatprep.subr.mxu0 0.0
    %1897 = vmatpush1.msra.mxu0 0.0
    %1898 = vmatprep.subr.mxu0 0.0
    %1899 = vmatpush1.msra.mxu0 0.0
    %1900 = vmatprep.subr.mxu0 0.0
    %1901 = vmatpush1.msra.mxu0 0.0
    %1902 = vmatprep.subr.mxu0 0.0
    %1903 = vmatpush1.msra.mxu0 0.0
    %1904 = vmatprep.subr.mxu0 0.0
    %1905 = vmatpush1.msra.mxu0 0.0
    %1906 = vmatprep.subr.mxu0 0.0
    %1907 = vmatpush1.msra.mxu0 %v1870
    %1908 = vmatprep.subr.mxu0 0.0
    %1909 = vmatpush1.msra.mxu0 %v1866
    %1910 = vmatprep.subr.mxu0 0.0
    %1911 = vmatpush1.msra.mxu0 %v1862
    %1912 = vmatprep.subr.mxu0 0.0
    %1913 = vmatpush1.msra.mxu0 %v1858
    %1914 = vmatprep.subr.mxu0 0.0
    %1915 = vmatpush2.msra.mxu0 0.0
    %1916 = vmatprep.subr.mxu0 0.0
    %1917 = vmatpush2.msra.mxu0 0.0
    %1918 = vmatprep.subr.mxu0 0.0
    %1919 = vmatpush2.msra.mxu0 0.0
    %1920 = vmatprep.subr.mxu0 0.0
    %1921 = vmatpush2.msra.mxu0 0.0
    %1922 = vmatprep.subr.mxu0 0.0
    %1923 = vmatpush2.msra.mxu0 0.0
    %1924 = vmatprep.subr.mxu0 0.0
    %1925 = vmatpush2.msra.mxu0 0.0
    %1926 = vmatprep.subr.mxu0 0.0
    %1927 = vmatpush2.msra.mxu0 0.0
    %1928 = vmatprep.subr.mxu0 0.0
    %1929 = vmatpush2.msra.mxu0 0.0
    %1930 = vmatprep.subr.mxu0 0.0
    %1931 = vmatpush2.msra.mxu0 0.0
    %1932 = vmatprep.subr.mxu0 0.0
    %1933 = vmatpush2.msra.mxu0 0.0
    %1934 = vmatprep.subr.mxu0 0.0
    %1935 = vmatpush2.msra.mxu0 0.0
    %1936 = vmatprep.subr.mxu0 0.0
    %1937 = vmatpush2.msra.mxu0 0.0
    %1938 = vmatprep.subr.mxu0 0.0
    %1939 = vmatpush2.msra.mxu0 0.0
    %1940 = vmatprep.subr.mxu0 0.0
    %1941 = vmatpush2.msra.mxu0 0.0
    %1942 = vmatprep.subr.mxu0 0.0
    %1943 = vmatpush2.msra.mxu0 0.0
    %1944 = vmatprep.subr.mxu0 0.0
    %1945 = vmatpush2.msra.mxu0 0.0
    %1946 = vmatprep.mubr.f32.mxu0 0.0
    %1947 = vmatmul.mubr.f32.gmra.mxu0 %v1877
    %v1948 = vpop.f32.mrf.mxu0
    %v1949 = vadd.f32 0.0, %v1948
    %v1950 = vpop.f32.mrf.mxu0
    %1951 = vmatprep.mubr.f32.mxu0 0.0
    %1952 = vmatmul.mubr.f32.gmra.mxu0 %v1880
    %v1953 = vpop.f32.mrf.mxu0
    %v1954 = vadd.f32 0.0, %v1953
    %v1955 = vpop.f32.mrf.mxu0
    %1956 = vdwg.mxu0
    %v1957 = vlaneseq
    %v1958 = vshrl.u32 %v1957, 7
    %v1959 = vsub.s32 0, %v1958
    %v1960 = vrot.slane %v1875, %v1959
    %v1961 = vadd.f32 %v1949, %v1960
    %v1962 = vadd.f32 %v1954, %v1960
    %1964 = vrot.lane.b32.xlu0 %v1961, 96
    %v1965 = vpop.permute.xlu0 %1964
    %v1966 = vsel %vm166, %v1961, 0
    %v1968 = vsel %vm166, %v1965, 0
    %1970 = vmatprep.subr.mxu0 0.0
    %1971 = vmatpush1.xpose.msra.mxu0 0.0
    %1972 = vmatprep.subr.mxu0 0.0
    %1973 = vmatpush1.xpose.msra.mxu0 0.0
    %1974 = vmatprep.subr.mxu0 0.0
    %1975 = vmatpush1.xpose.msra.mxu0 0.0
    %1976 = vmatprep.subr.mxu0 0.0
    %1977 = vmatpush1.xpose.msra.mxu0 0.0
    %1978 = vmatprep.subr.mxu0 0.0
    %1979 = vmatpush1.xpose.msra.mxu0 0.0
    %1980 = vmatprep.subr.mxu0 0.0
    %1981 = vmatpush1.xpose.msra.mxu0 0.0
    %1982 = vmatprep.subr.mxu0 0.0
    %1983 = vmatpush1.xpose.msra.mxu0 0.0
    %1984 = vmatprep.subr.mxu0 0.0
    %1985 = vmatpush1.xpose.msra.mxu0 0.0
    %1986 = vmatprep.subr.mxu0 0.0
    %1987 = vmatpush1.xpose.msra.mxu0 0.0
    %1988 = vmatprep.subr.mxu0 0.0
    %1989 = vmatpush1.xpose.msra.mxu0 0.0
    %1990 = vmatprep.subr.mxu0 0.0
    %1991 = vmatpush1.xpose.msra.mxu0 0.0
    %1992 = vmatprep.subr.mxu0 0.0
    %1993 = vmatpush1.xpose.msra.mxu0 0.0
    %1994 = vmatprep.subr.mxu0 0.0
    %1995 = vmatpush1.xpose.msra.mxu0 0.0
    %1996 = vmatprep.subr.mxu0 0.0
    %1997 = vmatpush1.xpose.msra.mxu0 0.0
    %1998 = vmatprep.subr.mxu0 0.0
    %1999 = vmatpush1.xpose.msra.mxu0 0.0
    %2000 = vmatprep.subr.mxu0 0.0
    %2001 = vmatpush1.xpose.msra.mxu0 %v1968
    %2002 = vmatprep.subr.mxu0 0.0
    %2003 = vmatpush2.xpose.msra.mxu0 0.0
    %2004 = vmatprep.subr.mxu0 0.0
    %2005 = vmatpush2.xpose.msra.mxu0 0.0
    %2006 = vmatprep.subr.mxu0 0.0
    %2007 = vmatpush2.xpose.msra.mxu0 0.0
    %2008 = vmatprep.subr.mxu0 0.0
    %2009 = vmatpush2.xpose.msra.mxu0 0.0
    %2010 = vmatprep.subr.mxu0 0.0
    %2011 = vmatpush2.xpose.msra.mxu0 0.0
    %2012 = vmatprep.subr.mxu0 0.0
    %2013 = vmatpush2.xpose.msra.mxu0 0.0
    %2014 = vmatprep.subr.mxu0 0.0
    %2015 = vmatpush2.xpose.msra.mxu0 0.0
    %2016 = vmatprep.subr.mxu0 0.0
    %2017 = vmatpush2.xpose.msra.mxu0 0.0
    %2018 = vmatprep.subr.mxu0 0.0
    %2019 = vmatpush2.xpose.msra.mxu0 0.0
    %2020 = vmatprep.subr.mxu0 0.0
    %2021 = vmatpush2.xpose.msra.mxu0 0.0
    %2022 = vmatprep.subr.mxu0 0.0
    %2023 = vmatpush2.xpose.msra.mxu0 0.0
    %2024 = vmatprep.subr.mxu0 0.0
    %2025 = vmatpush2.xpose.msra.mxu0 0.0
    %2026 = vmatprep.subr.mxu0 0.0
    %2027 = vmatpush2.xpose.msra.mxu0 0.0
    %2028 = vmatprep.subr.mxu0 0.0
    %2029 = vmatpush2.xpose.msra.mxu0 0.0
    %2030 = vmatprep.subr.mxu0 0.0
    %2031 = vmatpush2.xpose.msra.mxu0 0.0
    %2032 = vmatprep.subr.mxu0 0.0
    %2033 = vmatpush2.xpose.msra.mxu0 0.0
    %2034 = vmatprep.mubr.f32.mxu0 0.0
    %2035 = vmatmul.mubr.f32.gmra.mxu0 %v1966
    %v2036 = vpop.f32.mrf.mxu0
    %v2037 = vadd.f32 0.0, %v2036
    %v2038 = vpop.f32.mrf.mxu0
    %2039 = vdwg.mxu0
    %v2040 = vmul.f32 %v2037, 0.35355338
    %v2041 = vsel %vm166, %v2040, -inf
    %2042 = vmax.xlane.f32.xlu0 %v2041
    %v2043 = vpop.xlane.xlu0 %2042
    %v2044 = vsub.f32 %v2040, %v2043
    %v2045 = vmul.f32 %v2044, 1.442695
    %v2046 = vpow.pop %v2045
    %v2047 = vsel %vm166, %v2046, 0.0
    %2048 = vadd.xlane.f32.xlu0 %v2047
    %v2049 = vpop.xlane.xlu0 %2048
    %v2050 = vrcp.pop %v2049
    %v2051 = vmul.f32 %v2046, %v2050
    %2052 = vrot.lane.b32.xlu0 %v1961, 64
    %v2053 = vpop.permute.xlu0 %2052
    %v2056 = vsel %vm166, %v2051, 0
    %2058 = vmatprep.subr.mxu0 0.0
    %2059 = vmatpush1.msra.mxu0 0.0
    %2060 = vmatprep.subr.mxu0 0.0
    %2061 = vmatpush1.msra.mxu0 0.0
    %2062 = vmatprep.subr.mxu0 0.0
    %2063 = vmatpush1.msra.mxu0 0.0
    %2064 = vmatprep.subr.mxu0 0.0
    %2065 = vmatpush1.msra.mxu0 0.0
    %2066 = vmatprep.subr.mxu0 0.0
    %2067 = vmatpush1.msra.mxu0 0.0
    %2068 = vmatprep.subr.mxu0 0.0
    %2069 = vmatpush1.msra.mxu0 0.0
    %2070 = vmatprep.subr.mxu0 0.0
    %2071 = vmatpush1.msra.mxu0 0.0
    %2072 = vmatprep.subr.mxu0 0.0
    %2073 = vmatpush1.msra.mxu0 0.0
    %2074 = vmatprep.subr.mxu0 0.0
    %2075 = vmatpush1.msra.mxu0 0.0
    %2076 = vmatprep.subr.mxu0 0.0
    %2077 = vmatpush1.msra.mxu0 0.0
    %2078 = vmatprep.subr.mxu0 0.0
    %2079 = vmatpush1.msra.mxu0 0.0
    %2080 = vmatprep.subr.mxu0 0.0
    %2081 = vmatpush1.msra.mxu0 0.0
    %2082 = vmatprep.subr.mxu0 0.0
    %2083 = vmatpush1.msra.mxu0 0.0
    %2084 = vmatprep.subr.mxu0 0.0
    %2085 = vmatpush1.msra.mxu0 0.0
    %2086 = vmatprep.subr.mxu0 0.0
    %2087 = vmatpush1.msra.mxu0 0.0
    %2088 = vmatprep.subr.mxu0 0.0
    %2089 = vmatpush1.msra.mxu0 %v2053
    %2090 = vmatprep.subr.mxu0 0.0
    %2091 = vmatpush2.msra.mxu0 0.0
    %2092 = vmatprep.subr.mxu0 0.0
    %2093 = vmatpush2.msra.mxu0 0.0
    %2094 = vmatprep.subr.mxu0 0.0
    %2095 = vmatpush2.msra.mxu0 0.0
    %2096 = vmatprep.subr.mxu0 0.0
    %2097 = vmatpush2.msra.mxu0 0.0
    %2098 = vmatprep.subr.mxu0 0.0
    %2099 = vmatpush2.msra.mxu0 0.0
    %2100 = vmatprep.subr.mxu0 0.0
    %2101 = vmatpush2.msra.mxu0 0.0
    %2102 = vmatprep.subr.mxu0 0.0
    %2103 = vmatpush2.msra.mxu0 0.0
    %2104 = vmatprep.subr.mxu0 0.0
    %2105 = vmatpush2.msra.mxu0 0.0
    %2106 = vmatprep.subr.mxu0 0.0
    %2107 = vmatpush2.msra.mxu0 0.0
    %2108 = vmatprep.subr.mxu0 0.0
    %2109 = vmatpush2.msra.mxu0 0.0
    %2110 = vmatprep.subr.mxu0 0.0
    %2111 = vmatpush2.msra.mxu0 0.0
    %2112 = vmatprep.subr.mxu0 0.0
    %2113 = vmatpush2.msra.mxu0 0.0
    %2114 = vmatprep.subr.mxu0 0.0
    %2115 = vmatpush2.msra.mxu0 0.0
    %2116 = vmatprep.subr.mxu0 0.0
    %2117 = vmatpush2.msra.mxu0 0.0
    %2118 = vmatprep.subr.mxu0 0.0
    %2119 = vmatpush2.msra.mxu0 0.0
    %2120 = vmatprep.subr.mxu0 0.0
    %2121 = vmatpush2.msra.mxu0 0.0
    %2122 = vmatprep.mubr.f32.mxu0 0.0
    %2123 = vmatmul.mubr.f32.gmra.mxu0 %v2056
    %v2124 = vpop.f32.mrf.mxu0
    %v2125 = vadd.f32 0.0, %v2124
    %v2126 = vpop.f32.mrf.mxu0
    %2127 = vdwg.mxu0
    %2128 = vst.msk [vmem:[#allocation2] sm:$0xff] %vm166, %v2125
    %2129 = vrot.lane.b32.xlu0 %v1961, 120
    %v2130 = vpop.permute.xlu0 %2129
    %2131 = vrot.lane.b32.xlu0 %v1961, 88
    %v2132 = vpop.permute.xlu0 %2131
    %v2133 = vsel %vm166, %v2130, 0
    %v2135 = vsel %vm166, %v2132, 0
    %2137 = vmatprep.subr.mxu0 0.0
    %2138 = vmatpush1.xpose.msra.mxu0 0.0
    %2139 = vmatprep.subr.mxu0 0.0
    %2140 = vmatpush1.xpose.msra.mxu0 0.0
    %2141 = vmatprep.subr.mxu0 0.0
    %2142 = vmatpush1.xpose.msra.mxu0 0.0
    %2143 = vmatprep.subr.mxu0 0.0
    %2144 = vmatpush1.xpose.msra.mxu0 0.0
    %2145 = vmatprep.subr.mxu0 0.0
    %2146 = vmatpush1.xpose.msra.mxu0 0.0
    %2147 = vmatprep.subr.mxu0 0.0
    %2148 = vmatpush1.xpose.msra.mxu0 0.0
    %2149 = vmatprep.subr.mxu0 0.0
    %2150 = vmatpush1.xpose.msra.mxu0 0.0
    %2151 = vmatprep.subr.mxu0 0.0
    %2152 = vmatpush1.xpose.msra.mxu0 0.0
    %2153 = vmatprep.subr.mxu0 0.0
    %2154 = vmatpush1.xpose.msra.mxu0 0.0
    %2155 = vmatprep.subr.mxu0 0.0
    %2156 = vmatpush1.xpose.msra.mxu0 0.0
    %2157 = vmatprep.subr.mxu0 0.0
    %2158 = vmatpush1.xpose.msra.mxu0 0.0
    %2159 = vmatprep.subr.mxu0 0.0
    %2160 = vmatpush1.xpose.msra.mxu0 0.0
    %2161 = vmatprep.subr.mxu0 0.0
    %2162 = vmatpush1.xpose.msra.mxu0 0.0
    %2163 = vmatprep.subr.mxu0 0.0
    %2164 = vmatpush1.xpose.msra.mxu0 0.0
    %2165 = vmatprep.subr.mxu0 0.0
    %2166 = vmatpush1.xpose.msra.mxu0 0.0
    %2167 = vmatprep.subr.mxu0 0.0
    %2168 = vmatpush1.xpose.msra.mxu0 %v2135
    %2169 = vmatprep.subr.mxu0 0.0
    %2170 = vmatpush2.xpose.msra.mxu0 0.0
    %2171 = vmatprep.subr.mxu0 0.0
    %2172 = vmatpush2.xpose.msra.mxu0 0.0
    %2173 = vmatprep.subr.mxu0 0.0
    %2174 = vmatpush2.xpose.msra.mxu0 0.0
    %2175 = vmatprep.subr.mxu0 0.0
    %2176 = vmatpush2.xpose.msra.mxu0 0.0
    %2177 = vmatprep.subr.mxu0 0.0
    %2178 = vmatpush2.xpose.msra.mxu0 0.0
    %2179 = vmatprep.subr.mxu0 0.0
    %2180 = vmatpush2.xpose.msra.mxu0 0.0
    %2181 = vmatprep.subr.mxu0 0.0
    %2182 = vmatpush2.xpose.msra.mxu0 0.0
    %2183 = vmatprep.subr.mxu0 0.0
    %2184 = vmatpush2.xpose.msra.mxu0 0.0
    %2185 = vmatprep.subr.mxu0 0.0
    %2186 = vmatpush2.xpose.msra.mxu0 0.0
    %2187 = vmatprep.subr.mxu0 0.0
    %2188 = vmatpush2.xpose.msra.mxu0 0.0
    %2189 = vmatprep.subr.mxu0 0.0
    %2190 = vmatpush2.xpose.msra.mxu0 0.0
    %2191 = vmatprep.subr.mxu0 0.0
    %2192 = vmatpush2.xpose.msra.mxu0 0.0
    %2193 = vmatprep.subr.mxu0 0.0
    %2194 = vmatpush2.xpose.msra.mxu0 0.0
    %2195 = vmatprep.subr.mxu0 0.0
    %2196 = vmatpush2.xpose.msra.mxu0 0.0
    %2197 = vmatprep.subr.mxu0 0.0
    %2198 = vmatpush2.xpose.msra.mxu0 0.0
    %2199 = vmatprep.subr.mxu0 0.0
    %2200 = vmatpush2.xpose.msra.mxu0 0.0
    %2201 = vmatprep.mubr.f32.mxu0 0.0
    %2202 = vmatmul.mubr.f32.gmra.mxu0 %v2133
    %v2203 = vpop.f32.mrf.mxu0
    %v2204 = vadd.f32 0.0, %v2203
    %v2205 = vpop.f32.mrf.mxu0
    %2206 = vdwg.mxu0
    %v2207 = vmul.f32 %v2204, 0.35355338
    %v2208 = vsel %vm166, %v2207, -inf
    %2209 = vmax.xlane.f32.xlu0 %v2208
    %v2210 = vpop.xlane.xlu0 %2209
    %v2211 = vsub.f32 %v2207, %v2210
    %v2212 = vmul.f32 %v2211, 1.442695
    %v2213 = vpow.pop %v2212
    %v2214 = vsel %vm166, %v2213, 0.0
    %2215 = vadd.xlane.f32.xlu0 %v2214
    %v2216 = vpop.xlane.xlu0 %2215
    %v2217 = vrcp.pop %v2216
    %v2218 = vmul.f32 %v2213, %v2217
    %2219 = vrot.lane.b32.xlu0 %v1961, 56
    %v2220 = vpop.permute.xlu0 %2219
    %v2223 = vsel %vm166, %v2218, 0
    %2225 = vmatprep.subr.mxu0 0.0
    %2226 = vmatpush1.msra.mxu0 0.0
    %2227 = vmatprep.subr.mxu0 0.0
    %2228 = vmatpush1.msra.mxu0 0.0
    %2229 = vmatprep.subr.mxu0 0.0
    %2230 = vmatpush1.msra.mxu0 0.0
    %2231 = vmatprep.subr.mxu0 0.0
    %2232 = vmatpush1.msra.mxu0 0.0
    %2233 = vmatprep.subr.mxu0 0.0
    %2234 = vmatpush1.msra.mxu0 0.0
    %2235 = vmatprep.subr.mxu0 0.0
    %2236 = vmatpush1.msra.mxu0 0.0
    %2237 = vmatprep.subr.mxu0 0.0
    %2238 = vmatpush1.msra.mxu0 0.0
    %2239 = vmatprep.subr.mxu0 0.0
    %2240 = vmatpush1.msra.mxu0 0.0
    %2241 = vmatprep.subr.mxu0 0.0
    %2242 = vmatpush1.msra.mxu0 0.0
    %2243 = vmatprep.subr.mxu0 0.0
    %2244 = vmatpush1.msra.mxu0 0.0
    %2245 = vmatprep.subr.mxu0 0.0
    %2246 = vmatpush1.msra.mxu0 0.0
    %2247 = vmatprep.subr.mxu0 0.0
    %2248 = vmatpush1.msra.mxu0 0.0
    %2249 = vmatprep.subr.mxu0 0.0
    %2250 = vmatpush1.msra.mxu0 0.0
    %2251 = vmatprep.subr.mxu0 0.0
    %2252 = vmatpush1.msra.mxu0 0.0
    %2253 = vmatprep.subr.mxu0 0.0
    %2254 = vmatpush1.msra.mxu0 0.0
    %2255 = vmatprep.subr.mxu0 0.0
    %2256 = vmatpush1.msra.mxu0 %v2220
    %2257 = vmatprep.subr.mxu0 0.0
    %2258 = vmatpush2.msra.mxu0 0.0
    %2259 = vmatprep.subr.mxu0 0.0
    %2260 = vmatpush2.msra.mxu0 0.0
    %2261 = vmatprep.subr.mxu0 0.0
    %2262 = vmatpush2.msra.mxu0 0.0
    %2263 = vmatprep.subr.mxu0 0.0
    %2264 = vmatpush2.msra.mxu0 0.0
    %2265 = vmatprep.subr.mxu0 0.0
    %2266 = vmatpush2.msra.mxu0 0.0
    %2267 = vmatprep.subr.mxu0 0.0
    %2268 = vmatpush2.msra.mxu0 0.0
    %2269 = vmatprep.subr.mxu0 0.0
    %2270 = vmatpush2.msra.mxu0 0.0
    %2271 = vmatprep.subr.mxu0 0.0
    %2272 = vmatpush2.msra.mxu0 0.0
    %2273 = vmatprep.subr.mxu0 0.0
    %2274 = vmatpush2.msra.mxu0 0.0
    %2275 = vmatprep.subr.mxu0 0.0
    %2276 = vmatpush2.msra.mxu0 0.0
    %2277 = vmatprep.subr.mxu0 0.0
    %2278 = vmatpush2.msra.mxu0 0.0
    %2279 = vmatprep.subr.mxu0 0.0
    %2280 = vmatpush2.msra.mxu0 0.0
    %2281 = vmatprep.subr.mxu0 0.0
    %2282 = vmatpush2.msra.mxu0 0.0
    %2283 = vmatprep.subr.mxu0 0.0
    %2284 = vmatpush2.msra.mxu0 0.0
    %2285 = vmatprep.subr.mxu0 0.0
    %2286 = vmatpush2.msra.mxu0 0.0
    %2287 = vmatprep.subr.mxu0 0.0
    %2288 = vmatpush2.msra.mxu0 0.0
    %2289 = vmatprep.mubr.f32.mxu0 0.0
    %2290 = vmatmul.mubr.f32.gmra.mxu0 %v2223
    %v2291 = vpop.f32.mrf.mxu0
    %v2292 = vadd.f32 0.0, %v2291
    %v2293 = vpop.f32.mrf.mxu0
    %2294 = vdwg.mxu0
    %2296 = vrot.lane.b32.xlu0 %v2292, 8
    %v2297 = vpop.permute.xlu0 %2296
    %2299 = vst.msk [vmem:[#allocation2] sm:$0xff] %vm500, %v2297
    %2300 = vrot.lane.b32.xlu0 %v1961, 112
    %v2301 = vpop.permute.xlu0 %2300
    %2302 = vrot.lane.b32.xlu0 %v1961, 80
    %v2303 = vpop.permute.xlu0 %2302
    %v2304 = vsel %vm166, %v2301, 0
    %v2306 = vsel %vm166, %v2303, 0
    %2308 = vmatprep.subr.mxu0 0.0
    %2309 = vmatpush1.xpose.msra.mxu0 0.0
    %2310 = vmatprep.subr.mxu0 0.0
    %2311 = vmatpush1.xpose.msra.mxu0 0.0
    %2312 = vmatprep.subr.mxu0 0.0
    %2313 = vmatpush1.xpose.msra.mxu0 0.0
    %2314 = vmatprep.subr.mxu0 0.0
    %2315 = vmatpush1.xpose.msra.mxu0 0.0
    %2316 = vmatprep.subr.mxu0 0.0
    %2317 = vmatpush1.xpose.msra.mxu0 0.0
    %2318 = vmatprep.subr.mxu0 0.0
    %2319 = vmatpush1.xpose.msra.mxu0 0.0
    %2320 = vmatprep.subr.mxu0 0.0
    %2321 = vmatpush1.xpose.msra.mxu0 0.0
    %2322 = vmatprep.subr.mxu0 0.0
    %2323 = vmatpush1.xpose.msra.mxu0 0.0
    %2324 = vmatprep.subr.mxu0 0.0
    %2325 = vmatpush1.xpose.msra.mxu0 0.0
    %2326 = vmatprep.subr.mxu0 0.0
    %2327 = vmatpush1.xpose.msra.mxu0 0.0
    %2328 = vmatprep.subr.mxu0 0.0
    %2329 = vmatpush1.xpose.msra.mxu0 0.0
    %2330 = vmatprep.subr.mxu0 0.0
    %2331 = vmatpush1.xpose.msra.mxu0 0.0
    %2332 = vmatprep.subr.mxu0 0.0
    %2333 = vmatpush1.xpose.msra.mxu0 0.0
    %2334 = vmatprep.subr.mxu0 0.0
    %2335 = vmatpush1.xpose.msra.mxu0 0.0
    %2336 = vmatprep.subr.mxu0 0.0
    %2337 = vmatpush1.xpose.msra.mxu0 0.0
    %2338 = vmatprep.subr.mxu0 0.0
    %2339 = vmatpush1.xpose.msra.mxu0 %v2306
    %2340 = vmatprep.subr.mxu0 0.0
    %2341 = vmatpush2.xpose.msra.mxu0 0.0
    %2342 = vmatprep.subr.mxu0 0.0
    %2343 = vmatpush2.xpose.msra.mxu0 0.0
    %2344 = vmatprep.subr.mxu0 0.0
    %2345 = vmatpush2.xpose.msra.mxu0 0.0
    %2346 = vmatprep.subr.mxu0 0.0
    %2347 = vmatpush2.xpose.msra.mxu0 0.0
    %2348 = vmatprep.subr.mxu0 0.0
    %2349 = vmatpush2.xpose.msra.mxu0 0.0
    %2350 = vmatprep.subr.mxu0 0.0
    %2351 = vmatpush2.xpose.msra.mxu0 0.0
    %2352 = vmatprep.subr.mxu0 0.0
    %2353 = vmatpush2.xpose.msra.mxu0 0.0
    %2354 = vmatprep.subr.mxu0 0.0
    %2355 = vmatpush2.xpose.msra.mxu0 0.0
    %2356 = vmatprep.subr.mxu0 0.0
    %2357 = vmatpush2.xpose.msra.mxu0 0.0
    %2358 = vmatprep.subr.mxu0 0.0
    %2359 = vmatpush2.xpose.msra.mxu0 0.0
    %2360 = vmatprep.subr.mxu0 0.0
    %2361 = vmatpush2.xpose.msra.mxu0 0.0
    %2362 = vmatprep.subr.mxu0 0.0
    %2363 = vmatpush2.xpose.msra.mxu0 0.0
    %2364 = vmatprep.subr.mxu0 0.0
    %2365 = vmatpush2.xpose.msra.mxu0 0.0
    %2366 = vmatprep.subr.mxu0 0.0
    %2367 = vmatpush2.xpose.msra.mxu0 0.0
    %2368 = vmatprep.subr.mxu0 0.0
    %2369 = vmatpush2.xpose.msra.mxu0 0.0
    %2370 = vmatprep.subr.mxu0 0.0
    %2371 = vmatpush2.xpose.msra.mxu0 0.0
    %2372 = vmatprep.mubr.f32.mxu0 0.0
    %2373 = vmatmul.mubr.f32.gmra.mxu0 %v2304
    %v2374 = vpop.f32.mrf.mxu0
    %v2375 = vadd.f32 0.0, %v2374
    %v2376 = vpop.f32.mrf.mxu0
    %2377 = vdwg.mxu0
    %v2378 = vmul.f32 %v2375, 0.35355338
    %v2379 = vsel %vm166, %v2378, -inf
    %2380 = vmax.xlane.f32.xlu0 %v2379
    %v2381 = vpop.xlane.xlu0 %2380
    %v2382 = vsub.f32 %v2378, %v2381
    %v2383 = vmul.f32 %v2382, 1.442695
    %v2384 = vpow.pop %v2383
    %v2385 = vsel %vm166, %v2384, 0.0
    %2386 = vadd.xlane.f32.xlu0 %v2385
    %v2387 = vpop.xlane.xlu0 %2386
    %v2388 = vrcp.pop %v2387
    %v2389 = vmul.f32 %v2384, %v2388
    %2390 = vrot.lane.b32.xlu0 %v1961, 48
    %v2391 = vpop.permute.xlu0 %2390
    %v2394 = vsel %vm166, %v2389, 0
    %2396 = vmatprep.subr.mxu0 0.0
    %2397 = vmatpush1.msra.mxu0 0.0
    %2398 = vmatprep.subr.mxu0 0.0
    %2399 = vmatpush1.msra.mxu0 0.0
    %2400 = vmatprep.subr.mxu0 0.0
    %2401 = vmatpush1.msra.mxu0 0.0
    %2402 = vmatprep.subr.mxu0 0.0
    %2403 = vmatpush1.msra.mxu0 0.0
    %2404 = vmatprep.subr.mxu0 0.0
    %2405 = vmatpush1.msra.mxu0 0.0
    %2406 = vmatprep.subr.mxu0 0.0
    %2407 = vmatpush1.msra.mxu0 0.0
    %2408 = vmatprep.subr.mxu0 0.0
    %2409 = vmatpush1.msra.mxu0 0.0
    %2410 = vmatprep.subr.mxu0 0.0
    %2411 = vmatpush1.msra.mxu0 0.0
    %2412 = vmatprep.subr.mxu0 0.0
    %2413 = vmatpush1.msra.mxu0 0.0
    %2414 = vmatprep.subr.mxu0 0.0
    %2415 = vmatpush1.msra.mxu0 0.0
    %2416 = vmatprep.subr.mxu0 0.0
    %2417 = vmatpush1.msra.mxu0 0.0
    %2418 = vmatprep.subr.mxu0 0.0
    %2419 = vmatpush1.msra.mxu0 0.0
    %2420 = vmatprep.subr.mxu0 0.0
    %2421 = vmatpush1.msra.mxu0 0.0
    %2422 = vmatprep.subr.mxu0 0.0
    %2423 = vmatpush1.msra.mxu0 0.0
    %2424 = vmatprep.subr.mxu0 0.0
    %2425 = vmatpush1.msra.mxu0 0.0
    %2426 = vmatprep.subr.mxu0 0.0
    %2427 = vmatpush1.msra.mxu0 %v2391
    %2428 = vmatprep.subr.mxu0 0.0
    %2429 = vmatpush2.msra.mxu0 0.0
    %2430 = vmatprep.subr.mxu0 0.0
    %2431 = vmatpush2.msra.mxu0 0.0
    %2432 = vmatprep.subr.mxu0 0.0
    %2433 = vmatpush2.msra.mxu0 0.0
    %2434 = vmatprep.subr.mxu0 0.0
    %2435 = vmatpush2.msra.mxu0 0.0
    %2436 = vmatprep.subr.mxu0 0.0
    %2437 = vmatpush2.msra.mxu0 0.0
    %2438 = vmatprep.subr.mxu0 0.0
    %2439 = vmatpush2.msra.mxu0 0.0
    %2440 = vmatprep.subr.mxu0 0.0
    %2441 = vmatpush2.msra.mxu0 0.0
    %2442 = vmatprep.subr.mxu0 0.0
    %2443 = vmatpush2.msra.mxu0 0.0
    %2444 = vmatprep.subr.mxu0 0.0
    %2445 = vmatpush2.msra.mxu0 0.0
    %2446 = vmatprep.subr.mxu0 0.0
    %2447 = vmatpush2.msra.mxu0 0.0
    %2448 = vmatprep.subr.mxu0 0.0
    %2449 = vmatpush2.msra.mxu0 0.0
    %2450 = vmatprep.subr.mxu0 0.0
    %2451 = vmatpush2.msra.mxu0 0.0
    %2452 = vmatprep.subr.mxu0 0.0
    %2453 = vmatpush2.msra.mxu0 0.0
    %2454 = vmatprep.subr.mxu0 0.0
    %2455 = vmatpush2.msra.mxu0 0.0
    %2456 = vmatprep.subr.mxu0 0.0
    %2457 = vmatpush2.msra.mxu0 0.0
    %2458 = vmatprep.subr.mxu0 0.0
    %2459 = vmatpush2.msra.mxu0 0.0
    %2460 = vmatprep.mubr.f32.mxu0 0.0
    %2461 = vmatmul.mubr.f32.gmra.mxu0 %v2394
    %v2462 = vpop.f32.mrf.mxu0
    %v2463 = vadd.f32 0.0, %v2462
    %v2464 = vpop.f32.mrf.mxu0
    %2465 = vdwg.mxu0
    %2467 = vrot.lane.b32.xlu0 %v2463, 16
    %v2468 = vpop.permute.xlu0 %2467
    %2470 = vst.msk [vmem:[#allocation2] sm:$0xff] %vm672, %v2468
    %2471 = vrot.lane.b32.xlu0 %v1961, 104
    %v2472 = vpop.permute.xlu0 %2471
    %2473 = vrot.lane.b32.xlu0 %v1961, 72
    %v2474 = vpop.permute.xlu0 %2473
    %v2475 = vsel %vm166, %v2472, 0
    %v2477 = vsel %vm166, %v2474, 0
    %2479 = vmatprep.subr.mxu0 0.0
    %2480 = vmatpush1.xpose.msra.mxu0 0.0
    %2481 = vmatprep.subr.mxu0 0.0
    %2482 = vmatpush1.xpose.msra.mxu0 0.0
    %2483 = vmatprep.subr.mxu0 0.0
    %2484 = vmatpush1.xpose.msra.mxu0 0.0
    %2485 = vmatprep.subr.mxu0 0.0
    %2486 = vmatpush1.xpose.msra.mxu0 0.0
    %2487 = vmatprep.subr.mxu0 0.0
    %2488 = vmatpush1.xpose.msra.mxu0 0.0
    %2489 = vmatprep.subr.mxu0 0.0
    %2490 = vmatpush1.xpose.msra.mxu0 0.0
    %2491 = vmatprep.subr.mxu0 0.0
    %2492 = vmatpush1.xpose.msra.mxu0 0.0
    %2493 = vmatprep.subr.mxu0 0.0
    %2494 = vmatpush1.xpose.msra.mxu0 0.0
    %2495 = vmatprep.subr.mxu0 0.0
    %2496 = vmatpush1.xpose.msra.mxu0 0.0
    %2497 = vmatprep.subr.mxu0 0.0
    %2498 = vmatpush1.xpose.msra.mxu0 0.0
    %2499 = vmatprep.subr.mxu0 0.0
    %2500 = vmatpush1.xpose.msra.mxu0 0.0
    %2501 = vmatprep.subr.mxu0 0.0
    %2502 = vmatpush1.xpose.msra.mxu0 0.0
    %2503 = vmatprep.subr.mxu0 0.0
    %2504 = vmatpush1.xpose.msra.mxu0 0.0
    %2505 = vmatprep.subr.mxu0 0.0
    %2506 = vmatpush1.xpose.msra.mxu0 0.0
    %2507 = vmatprep.subr.mxu0 0.0
    %2508 = vmatpush1.xpose.msra.mxu0 0.0
    %2509 = vmatprep.subr.mxu0 0.0
    %2510 = vmatpush1.xpose.msra.mxu0 %v2477
    %2511 = vmatprep.subr.mxu0 0.0
    %2512 = vmatpush2.xpose.msra.mxu0 0.0
    %2513 = vmatprep.subr.mxu0 0.0
    %2514 = vmatpush2.xpose.msra.mxu0 0.0
    %2515 = vmatprep.subr.mxu0 0.0
    %2516 = vmatpush2.xpose.msra.mxu0 0.0
    %2517 = vmatprep.subr.mxu0 0.0
    %2518 = vmatpush2.xpose.msra.mxu0 0.0
    %2519 = vmatprep.subr.mxu0 0.0
    %2520 = vmatpush2.xpose.msra.mxu0 0.0
    %2521 = vmatprep.subr.mxu0 0.0
    %2522 = vmatpush2.xpose.msra.mxu0 0.0
    %2523 = vmatprep.subr.mxu0 0.0
    %2524 = vmatpush2.xpose.msra.mxu0 0.0
    %2525 = vmatprep.subr.mxu0 0.0
    %2526 = vmatpush2.xpose.msra.mxu0 0.0
    %2527 = vmatprep.subr.mxu0 0.0
    %2528 = vmatpush2.xpose.msra.mxu0 0.0
    %2529 = vmatprep.subr.mxu0 0.0
    %2530 = vmatpush2.xpose.msra.mxu0 0.0
    %2531 = vmatprep.subr.mxu0 0.0
    %2532 = vmatpush2.xpose.msra.mxu0 0.0
    %2533 = vmatprep.subr.mxu0 0.0
    %2534 = vmatpush2.xpose.msra.mxu0 0.0
    %2535 = vmatprep.subr.mxu0 0.0
    %2536 = vmatpush2.xpose.msra.mxu0 0.0
    %2537 = vmatprep.subr.mxu0 0.0
    %2538 = vmatpush2.xpose.msra.mxu0 0.0
    %2539 = vmatprep.subr.mxu0 0.0
    %2540 = vmatpush2.xpose.msra.mxu0 0.0
    %2541 = vmatprep.subr.mxu0 0.0
    %2542 = vmatpush2.xpose.msra.mxu0 0.0
    %2543 = vmatprep.mubr.f32.mxu0 0.0
    %2544 = vmatmul.mubr.f32.gmra.mxu0 %v2475
    %v2545 = vpop.f32.mrf.mxu0
    %v2546 = vadd.f32 0.0, %v2545
    %v2547 = vpop.f32.mrf.mxu0
    %2548 = vdwg.mxu0
    %v2549 = vmul.f32 %v2546, 0.35355338
    %v2550 = vsel %vm166, %v2549, -inf
    %2551 = vmax.xlane.f32.xlu0 %v2550
    %v2552 = vpop.xlane.xlu0 %2551
    %v2553 = vsub.f32 %v2549, %v2552
    %v2554 = vmul.f32 %v2553, 1.442695
    %v2555 = vpow.pop %v2554
    %v2556 = vsel %vm166, %v2555, 0.0
    %2557 = vadd.xlane.f32.xlu0 %v2556
    %v2558 = vpop.xlane.xlu0 %2557
    %v2559 = vrcp.pop %v2558
    %v2560 = vmul.f32 %v2555, %v2559
    %2561 = vrot.lane.b32.xlu0 %v1961, 40
    %v2562 = vpop.permute.xlu0 %2561
    %v2565 = vsel %vm166, %v2560, 0
    %2567 = vmatprep.subr.mxu0 0.0
    %2568 = vmatpush1.msra.mxu0 0.0
    %2569 = vmatprep.subr.mxu0 0.0
    %2570 = vmatpush1.msra.mxu0 0.0
    %2571 = vmatprep.subr.mxu0 0.0
    %2572 = vmatpush1.msra.mxu0 0.0
    %2573 = vmatprep.subr.mxu0 0.0
    %2574 = vmatpush1.msra.mxu0 0.0
    %2575 = vmatprep.subr.mxu0 0.0
    %2576 = vmatpush1.msra.mxu0 0.0
    %2577 = vmatprep.subr.mxu0 0.0
    %2578 = vmatpush1.msra.mxu0 0.0
    %2579 = vmatprep.subr.mxu0 0.0
    %2580 = vmatpush1.msra.mxu0 0.0
    %2581 = vmatprep.subr.mxu0 0.0
    %2582 = vmatpush1.msra.mxu0 0.0
    %2583 = vmatprep.subr.mxu0 0.0
    %2584 = vmatpush1.msra.mxu0 0.0
    %2585 = vmatprep.subr.mxu0 0.0
    %2586 = vmatpush1.msra.mxu0 0.0
    %2587 = vmatprep.subr.mxu0 0.0
    %2588 = vmatpush1.msra.mxu0 0.0
    %2589 = vmatprep.subr.mxu0 0.0
    %2590 = vmatpush1.msra.mxu0 0.0
    %2591 = vmatprep.subr.mxu0 0.0
    %2592 = vmatpush1.msra.mxu0 0.0
    %2593 = vmatprep.subr.mxu0 0.0
    %2594 = vmatpush1.msra.mxu0 0.0
    %2595 = vmatprep.subr.mxu0 0.0
    %2596 = vmatpush1.msra.mxu0 0.0
    %2597 = vmatprep.subr.mxu0 0.0
    %2598 = vmatpush1.msra.mxu0 %v2562
    %2599 = vmatprep.subr.mxu0 0.0
    %2600 = vmatpush2.msra.mxu0 0.0
    %2601 = vmatprep.subr.mxu0 0.0
    %2602 = vmatpush2.msra.mxu0 0.0
    %2603 = vmatprep.subr.mxu0 0.0
    %2604 = vmatpush2.msra.mxu0 0.0
    %2605 = vmatprep.subr.mxu0 0.0
    %2606 = vmatpush2.msra.mxu0 0.0
    %2607 = vmatprep.subr.mxu0 0.0
    %2608 = vmatpush2.msra.mxu0 0.0
    %2609 = vmatprep.subr.mxu0 0.0
    %2610 = vmatpush2.msra.mxu0 0.0
    %2611 = vmatprep.subr.mxu0 0.0
    %2612 = vmatpush2.msra.mxu0 0.0
    %2613 = vmatprep.subr.mxu0 0.0
    %2614 = vmatpush2.msra.mxu0 0.0
    %2615 = vmatprep.subr.mxu0 0.0
    %2616 = vmatpush2.msra.mxu0 0.0
    %2617 = vmatprep.subr.mxu0 0.0
    %2618 = vmatpush2.msra.mxu0 0.0
    %2619 = vmatprep.subr.mxu0 0.0
    %2620 = vmatpush2.msra.mxu0 0.0
    %2621 = vmatprep.subr.mxu0 0.0
    %2622 = vmatpush2.msra.mxu0 0.0
    %2623 = vmatprep.subr.mxu0 0.0
    %2624 = vmatpush2.msra.mxu0 0.0
    %2625 = vmatprep.subr.mxu0 0.0
    %2626 = vmatpush2.msra.mxu0 0.0
    %2627 = vmatprep.subr.mxu0 0.0
    %2628 = vmatpush2.msra.mxu0 0.0
    %2629 = vmatprep.subr.mxu0 0.0
    %2630 = vmatpush2.msra.mxu0 0.0
    %2631 = vmatprep.mubr.f32.mxu0 0.0
    %2632 = vmatmul.mubr.f32.gmra.mxu0 %v2565
    %v2633 = vpop.f32.mrf.mxu0
    %v2634 = vadd.f32 0.0, %v2633
    %v2635 = vpop.f32.mrf.mxu0
    %2636 = vdwg.mxu0
    %2638 = vrot.lane.b32.xlu0 %v2634, 24
    %v2639 = vpop.permute.xlu0 %2638
    %2641 = vst.msk [vmem:[#allocation2] sm:$0xff] %vm844, %v2639
    %2643 = vrot.lane.b32.xlu0 %v1962, 96
    %v2644 = vpop.permute.xlu0 %2643
    %v2645 = vsel %vm166, %v1962, 0
    %v2647 = vsel %vm166, %v2644, 0
    %2649 = vmatprep.subr.mxu0 0.0
    %2650 = vmatpush1.xpose.msra.mxu0 0.0
    %2651 = vmatprep.subr.mxu0 0.0
    %2652 = vmatpush1.xpose.msra.mxu0 0.0
    %2653 = vmatprep.subr.mxu0 0.0
    %2654 = vmatpush1.xpose.msra.mxu0 0.0
    %2655 = vmatprep.subr.mxu0 0.0
    %2656 = vmatpush1.xpose.msra.mxu0 0.0
    %2657 = vmatprep.subr.mxu0 0.0
    %2658 = vmatpush1.xpose.msra.mxu0 0.0
    %2659 = vmatprep.subr.mxu0 0.0
    %2660 = vmatpush1.xpose.msra.mxu0 0.0
    %2661 = vmatprep.subr.mxu0 0.0
    %2662 = vmatpush1.xpose.msra.mxu0 0.0
    %2663 = vmatprep.subr.mxu0 0.0
    %2664 = vmatpush1.xpose.msra.mxu0 0.0
    %2665 = vmatprep.subr.mxu0 0.0
    %2666 = vmatpush1.xpose.msra.mxu0 0.0
    %2667 = vmatprep.subr.mxu0 0.0
    %2668 = vmatpush1.xpose.msra.mxu0 0.0
    %2669 = vmatprep.subr.mxu0 0.0
    %2670 = vmatpush1.xpose.msra.mxu0 0.0
    %2671 = vmatprep.subr.mxu0 0.0
    %2672 = vmatpush1.xpose.msra.mxu0 0.0
    %2673 = vmatprep.subr.mxu0 0.0
    %2674 = vmatpush1.xpose.msra.mxu0 0.0
    %2675 = vmatprep.subr.mxu0 0.0
    %2676 = vmatpush1.xpose.msra.mxu0 0.0
    %2677 = vmatprep.subr.mxu0 0.0
    %2678 = vmatpush1.xpose.msra.mxu0 0.0
    %2679 = vmatprep.subr.mxu0 0.0
    %2680 = vmatpush1.xpose.msra.mxu0 %v2647
    %2681 = vmatprep.subr.mxu0 0.0
    %2682 = vmatpush2.xpose.msra.mxu0 0.0
    %2683 = vmatprep.subr.mxu0 0.0
    %2684 = vmatpush2.xpose.msra.mxu0 0.0
    %2685 = vmatprep.subr.mxu0 0.0
    %2686 = vmatpush2.xpose.msra.mxu0 0.0
    %2687 = vmatprep.subr.mxu0 0.0
    %2688 = vmatpush2.xpose.msra.mxu0 0.0
    %2689 = vmatprep.subr.mxu0 0.0
    %2690 = vmatpush2.xpose.msra.mxu0 0.0
    %2691 = vmatprep.subr.mxu0 0.0
    %2692 = vmatpush2.xpose.msra.mxu0 0.0
    %2693 = vmatprep.subr.mxu0 0.0
    %2694 = vmatpush2.xpose.msra.mxu0 0.0
    %2695 = vmatprep.subr.mxu0 0.0
    %2696 = vmatpush2.xpose.msra.mxu0 0.0
    %2697 = vmatprep.subr.mxu0 0.0
    %2698 = vmatpush2.xpose.msra.mxu0 0.0
    %2699 = vmatprep.subr.mxu0 0.0
    %2700 = vmatpush2.xpose.msra.mxu0 0.0
    %2701 = vmatprep.subr.mxu0 0.0
    %2702 = vmatpush2.xpose.msra.mxu0 0.0
    %2703 = vmatprep.subr.mxu0 0.0
    %2704 = vmatpush2.xpose.msra.mxu0 0.0
    %2705 = vmatprep.subr.mxu0 0.0
    %2706 = vmatpush2.xpose.msra.mxu0 0.0
    %2707 = vmatprep.subr.mxu0 0.0
    %2708 = vmatpush2.xpose.msra.mxu0 0.0
    %2709 = vmatprep.subr.mxu0 0.0
    %2710 = vmatpush2.xpose.msra.mxu0 0.0
    %2711 = vmatprep.subr.mxu0 0.0
    %2712 = vmatpush2.xpose.msra.mxu0 0.0
    %2713 = vmatprep.mubr.f32.mxu0 0.0
    %2714 = vmatmul.mubr.f32.gmra.mxu0 %v2645
    %v2715 = vpop.f32.mrf.mxu0
    %v2716 = vadd.f32 0.0, %v2715
    %v2717 = vpop.f32.mrf.mxu0
    %2718 = vdwg.mxu0
    %v2719 = vmul.f32 %v2716, 0.35355338
    %v2720 = vsel %vm166, %v2719, -inf
    %2721 = vmax.xlane.f32.xlu0 %v2720
    %v2722 = vpop.xlane.xlu0 %2721
    %v2723 = vsub.f32 %v2719, %v2722
    %v2724 = vmul.f32 %v2723, 1.442695
    %v2725 = vpow.pop %v2724
    %v2726 = vsel %vm166, %v2725, 0.0
    %2727 = vadd.xlane.f32.xlu0 %v2726
    %v2728 = vpop.xlane.xlu0 %2727
    %v2729 = vrcp.pop %v2728
    %v2730 = vmul.f32 %v2725, %v2729
    %2731 = vrot.lane.b32.xlu0 %v1962, 64
    %v2732 = vpop.permute.xlu0 %2731
    %v2735 = vsel %vm166, %v2730, 0
    %2737 = vmatprep.subr.mxu0 0.0
    %2738 = vmatpush1.msra.mxu0 0.0
    %2739 = vmatprep.subr.mxu0 0.0
    %2740 = vmatpush1.msra.mxu0 0.0
    %2741 = vmatprep.subr.mxu0 0.0
    %2742 = vmatpush1.msra.mxu0 0.0
    %2743 = vmatprep.subr.mxu0 0.0
    %2744 = vmatpush1.msra.mxu0 0.0
    %2745 = vmatprep.subr.mxu0 0.0
    %2746 = vmatpush1.msra.mxu0 0.0
    %2747 = vmatprep.subr.mxu0 0.0
    %2748 = vmatpush1.msra.mxu0 0.0
    %2749 = vmatprep.subr.mxu0 0.0
    %2750 = vmatpush1.msra.mxu0 0.0
    %2751 = vmatprep.subr.mxu0 0.0
    %2752 = vmatpush1.msra.mxu0 0.0
    %2753 = vmatprep.subr.mxu0 0.0
    %2754 = vmatpush1.msra.mxu0 0.0
    %2755 = vmatprep.subr.mxu0 0.0
    %2756 = vmatpush1.msra.mxu0 0.0
    %2757 = vmatprep.subr.mxu0 0.0
    %2758 = vmatpush1.msra.mxu0 0.0
    %2759 = vmatprep.subr.mxu0 0.0
    %2760 = vmatpush1.msra.mxu0 0.0
    %2761 = vmatprep.subr.mxu0 0.0
    %2762 = vmatpush1.msra.mxu0 0.0
    %2763 = vmatprep.subr.mxu0 0.0
    %2764 = vmatpush1.msra.mxu0 0.0
    %2765 = vmatprep.subr.mxu0 0.0
    %2766 = vmatpush1.msra.mxu0 0.0
    %2767 = vmatprep.subr.mxu0 0.0
    %2768 = vmatpush1.msra.mxu0 %v2732
    %2769 = vmatprep.subr.mxu0 0.0
    %2770 = vmatpush2.msra.mxu0 0.0
    %2771 = vmatprep.subr.mxu0 0.0
    %2772 = vmatpush2.msra.mxu0 0.0
    %2773 = vmatprep.subr.mxu0 0.0
    %2774 = vmatpush2.msra.mxu0 0.0
    %2775 = vmatprep.subr.mxu0 0.0
    %2776 = vmatpush2.msra.mxu0 0.0
    %2777 = vmatprep.subr.mxu0 0.0
    %2778 = vmatpush2.msra.mxu0 0.0
    %2779 = vmatprep.subr.mxu0 0.0
    %2780 = vmatpush2.msra.mxu0 0.0
    %2781 = vmatprep.subr.mxu0 0.0
    %2782 = vmatpush2.msra.mxu0 0.0
    %2783 = vmatprep.subr.mxu0 0.0
    %2784 = vmatpush2.msra.mxu0 0.0
    %2785 = vmatprep.subr.mxu0 0.0
    %2786 = vmatpush2.msra.mxu0 0.0
    %2787 = vmatprep.subr.mxu0 0.0
    %2788 = vmatpush2.msra.mxu0 0.0
    %2789 = vmatprep.subr.mxu0 0.0
    %2790 = vmatpush2.msra.mxu0 0.0
    %2791 = vmatprep.subr.mxu0 0.0
    %2792 = vmatpush2.msra.mxu0 0.0
    %2793 = vmatprep.subr.mxu0 0.0
    %2794 = vmatpush2.msra.mxu0 0.0
    %2795 = vmatprep.subr.mxu0 0.0
    %2796 = vmatpush2.msra.mxu0 0.0
    %2797 = vmatprep.subr.mxu0 0.0
    %2798 = vmatpush2.msra.mxu0 0.0
    %2799 = vmatprep.subr.mxu0 0.0
    %2800 = vmatpush2.msra.mxu0 0.0
    %2801 = vmatprep.mubr.f32.mxu0 0.0
    %2802 = vmatmul.mubr.f32.gmra.mxu0 %v2735
    %v2803 = vpop.f32.mrf.mxu0
    %v2804 = vadd.f32 0.0, %v2803
    %v2805 = vpop.f32.mrf.mxu0
    %2806 = vdwg.mxu0
    %2807 = vst.msk [vmem:[#allocation2 + $0x8] sm:$0xff] %vm166, %v2804
    %2808 = vrot.lane.b32.xlu0 %v1962, 120
    %v2809 = vpop.permute.xlu0 %2808
    %2810 = vrot.lane.b32.xlu0 %v1962, 88
    %v2811 = vpop.permute.xlu0 %2810
    %v2812 = vsel %vm166, %v2809, 0
    %v2814 = vsel %vm166, %v2811, 0
    %2816 = vmatprep.subr.mxu0 0.0
    %2817 = vmatpush1.xpose.msra.mxu0 0.0
    %2818 = vmatprep.subr.mxu0 0.0
    %2819 = vmatpush1.xpose.msra.mxu0 0.0
    %2820 = vmatprep.subr.mxu0 0.0
    %2821 = vmatpush1.xpose.msra.mxu0 0.0
    %2822 = vmatprep.subr.mxu0 0.0
    %2823 = vmatpush1.xpose.msra.mxu0 0.0
    %2824 = vmatprep.subr.mxu0 0.0
    %2825 = vmatpush1.xpose.msra.mxu0 0.0
    %2826 = vmatprep.subr.mxu0 0.0
    %2827 = vmatpush1.xpose.msra.mxu0 0.0
    %2828 = vmatprep.subr.mxu0 0.0
    %2829 = vmatpush1.xpose.msra.mxu0 0.0
    %2830 = vmatprep.subr.mxu0 0.0
    %2831 = vmatpush1.xpose.msra.mxu0 0.0
    %2832 = vmatprep.subr.mxu0 0.0
    %2833 = vmatpush1.xpose.msra.mxu0 0.0
    %2834 = vmatprep.subr.mxu0 0.0
    %2835 = vmatpush1.xpose.msra.mxu0 0.0
    %2836 = vmatprep.subr.mxu0 0.0
    %2837 = vmatpush1.xpose.msra.mxu0 0.0
    %2838 = vmatprep.subr.mxu0 0.0
    %2839 = vmatpush1.xpose.msra.mxu0 0.0
    %2840 = vmatprep.subr.mxu0 0.0
    %2841 = vmatpush1.xpose.msra.mxu0 0.0
    %2842 = vmatprep.subr.mxu0 0.0
    %2843 = vmatpush1.xpose.msra.mxu0 0.0
    %2844 = vmatprep.subr.mxu0 0.0
    %2845 = vmatpush1.xpose.msra.mxu0 0.0
    %2846 = vmatprep.subr.mxu0 0.0
    %2847 = vmatpush1.xpose.msra.mxu0 %v2814
    %2848 = vmatprep.subr.mxu0 0.0
    %2849 = vmatpush2.xpose.msra.mxu0 0.0
    %2850 = vmatprep.subr.mxu0 0.0
    %2851 = vmatpush2.xpose.msra.mxu0 0.0
    %2852 = vmatprep.subr.mxu0 0.0
    %2853 = vmatpush2.xpose.msra.mxu0 0.0
    %2854 = vmatprep.subr.mxu0 0.0
    %2855 = vmatpush2.xpose.msra.mxu0 0.0
    %2856 = vmatprep.subr.mxu0 0.0
    %2857 = vmatpush2.xpose.msra.mxu0 0.0
    %2858 = vmatprep.subr.mxu0 0.0
    %2859 = vmatpush2.xpose.msra.mxu0 0.0
    %2860 = vmatprep.subr.mxu0 0.0
    %2861 = vmatpush2.xpose.msra.mxu0 0.0
    %2862 = vmatprep.subr.mxu0 0.0
    %2863 = vmatpush2.xpose.msra.mxu0 0.0
    %2864 = vmatprep.subr.mxu0 0.0
    %2865 = vmatpush2.xpose.msra.mxu0 0.0
    %2866 = vmatprep.subr.mxu0 0.0
    %2867 = vmatpush2.xpose.msra.mxu0 0.0
    %2868 = vmatprep.subr.mxu0 0.0
    %2869 = vmatpush2.xpose.msra.mxu0 0.0
    %2870 = vmatprep.subr.mxu0 0.0
    %2871 = vmatpush2.xpose.msra.mxu0 0.0
    %2872 = vmatprep.subr.mxu0 0.0
    %2873 = vmatpush2.xpose.msra.mxu0 0.0
    %2874 = vmatprep.subr.mxu0 0.0
    %2875 = vmatpush2.xpose.msra.mxu0 0.0
    %2876 = vmatprep.subr.mxu0 0.0
    %2877 = vmatpush2.xpose.msra.mxu0 0.0
    %2878 = vmatprep.subr.mxu0 0.0
    %2879 = vmatpush2.xpose.msra.mxu0 0.0
    %2880 = vmatprep.mubr.f32.mxu0 0.0
    %2881 = vmatmul.mubr.f32.gmra.mxu0 %v2812
    %v2882 = vpop.f32.mrf.mxu0
    %v2883 = vadd.f32 0.0, %v2882
    %v2884 = vpop.f32.mrf.mxu0
    %2885 = vdwg.mxu0
    %v2886 = vmul.f32 %v2883, 0.35355338
    %v2887 = vsel %vm166, %v2886, -inf
    %2888 = vmax.xlane.f32.xlu0 %v2887
    %v2889 = vpop.xlane.xlu0 %2888
    %v2890 = vsub.f32 %v2886, %v2889
    %v2891 = vmul.f32 %v2890, 1.442695
    %v2892 = vpow.pop %v2891
    %v2893 = vsel %vm166, %v2892, 0.0
    %2894 = vadd.xlane.f32.xlu0 %v2893
    %v2895 = vpop.xlane.xlu0 %2894
    %v2896 = vrcp.pop %v2895
    %v2897 = vmul.f32 %v2892, %v2896
    %2898 = vrot.lane.b32.xlu0 %v1962, 56
    %v2899 = vpop.permute.xlu0 %2898
    %v2902 = vsel %vm166, %v2897, 0
    %2904 = vmatprep.subr.mxu0 0.0
    %2905 = vmatpush1.msra.mxu0 0.0
    %2906 = vmatprep.subr.mxu0 0.0
    %2907 = vmatpush1.msra.mxu0 0.0
    %2908 = vmatprep.subr.mxu0 0.0
    %2909 = vmatpush1.msra.mxu0 0.0
    %2910 = vmatprep.subr.mxu0 0.0
    %2911 = vmatpush1.msra.mxu0 0.0
    %2912 = vmatprep.subr.mxu0 0.0
    %2913 = vmatpush1.msra.mxu0 0.0
    %2914 = vmatprep.subr.mxu0 0.0
    %2915 = vmatpush1.msra.mxu0 0.0
    %2916 = vmatprep.subr.mxu0 0.0
    %2917 = vmatpush1.msra.mxu0 0.0
    %2918 = vmatprep.subr.mxu0 0.0
    %2919 = vmatpush1.msra.mxu0 0.0
    %2920 = vmatprep.subr.mxu0 0.0
    %2921 = vmatpush1.msra.mxu0 0.0
    %2922 = vmatprep.subr.mxu0 0.0
    %2923 = vmatpush1.msra.mxu0 0.0
    %2924 = vmatprep.subr.mxu0 0.0
    %2925 = vmatpush1.msra.mxu0 0.0
    %2926 = vmatprep.subr.mxu0 0.0
    %2927 = vmatpush1.msra.mxu0 0.0
    %2928 = vmatprep.subr.mxu0 0.0
    %2929 = vmatpush1.msra.mxu0 0.0
    %2930 = vmatprep.subr.mxu0 0.0
    %2931 = vmatpush1.msra.mxu0 0.0
    %2932 = vmatprep.subr.mxu0 0.0
    %2933 = vmatpush1.msra.mxu0 0.0
    %2934 = vmatprep.subr.mxu0 0.0
    %2935 = vmatpush1.msra.mxu0 %v2899
    %2936 = vmatprep.subr.mxu0 0.0
    %2937 = vmatpush2.msra.mxu0 0.0
    %2938 = vmatprep.subr.mxu0 0.0
    %2939 = vmatpush2.msra.mxu0 0.0
    %2940 = vmatprep.subr.mxu0 0.0
    %2941 = vmatpush2.msra.mxu0 0.0
    %2942 = vmatprep.subr.mxu0 0.0
    %2943 = vmatpush2.msra.mxu0 0.0
    %2944 = vmatprep.subr.mxu0 0.0
    %2945 = vmatpush2.msra.mxu0 0.0
    %2946 = vmatprep.subr.mxu0 0.0
    %2947 = vmatpush2.msra.mxu0 0.0
    %2948 = vmatprep.subr.mxu0 0.0
    %2949 = vmatpush2.msra.mxu0 0.0
    %2950 = vmatprep.subr.mxu0 0.0
    %2951 = vmatpush2.msra.mxu0 0.0
    %2952 = vmatprep.subr.mxu0 0.0
    %2953 = vmatpush2.msra.mxu0 0.0
    %2954 = vmatprep.subr.mxu0 0.0
    %2955 = vmatpush2.msra.mxu0 0.0
    %2956 = vmatprep.subr.mxu0 0.0
    %2957 = vmatpush2.msra.mxu0 0.0
    %2958 = vmatprep.subr.mxu0 0.0
    %2959 = vmatpush2.msra.mxu0 0.0
    %2960 = vmatprep.subr.mxu0 0.0
    %2961 = vmatpush2.msra.mxu0 0.0
    %2962 = vmatprep.subr.mxu0 0.0
    %2963 = vmatpush2.msra.mxu0 0.0
    %2964 = vmatprep.subr.mxu0 0.0
    %2965 = vmatpush2.msra.mxu0 0.0
    %2966 = vmatprep.subr.mxu0 0.0
    %2967 = vmatpush2.msra.mxu0 0.0
    %2968 = vmatprep.mubr.f32.mxu0 0.0
    %2969 = vmatmul.mubr.f32.gmra.mxu0 %v2902
    %v2970 = vpop.f32.mrf.mxu0
    %v2971 = vadd.f32 0.0, %v2970
    %v2972 = vpop.f32.mrf.mxu0
    %2973 = vdwg.mxu0
    %2975 = vrot.lane.b32.xlu0 %v2971, 8
    %v2976 = vpop.permute.xlu0 %2975
    %2978 = vst.msk [vmem:[#allocation2 + $0x8] sm:$0xff] %vm500, %v2976
    %2979 = vrot.lane.b32.xlu0 %v1962, 112
    %v2980 = vpop.permute.xlu0 %2979
    %2981 = vrot.lane.b32.xlu0 %v1962, 80
    %v2982 = vpop.permute.xlu0 %2981
    %v2983 = vsel %vm166, %v2980, 0
    %v2985 = vsel %vm166, %v2982, 0
    %2987 = vmatprep.subr.mxu0 0.0
    %2988 = vmatpush1.xpose.msra.mxu0 0.0
    %2989 = vmatprep.subr.mxu0 0.0
    %2990 = vmatpush1.xpose.msra.mxu0 0.0
    %2991 = vmatprep.subr.mxu0 0.0
    %2992 = vmatpush1.xpose.msra.mxu0 0.0
    %2993 = vmatprep.subr.mxu0 0.0
    %2994 = vmatpush1.xpose.msra.mxu0 0.0
    %2995 = vmatprep.subr.mxu0 0.0
    %2996 = vmatpush1.xpose.msra.mxu0 0.0
    %2997 = vmatprep.subr.mxu0 0.0
    %2998 = vmatpush1.xpose.msra.mxu0 0.0
    %2999 = vmatprep.subr.mxu0 0.0
    %3000 = vmatpush1.xpose.msra.mxu0 0.0
    %3001 = vmatprep.subr.mxu0 0.0
    %3002 = vmatpush1.xpose.msra.mxu0 0.0
    %3003 = vmatprep.subr.mxu0 0.0
    %3004 = vmatpush1.xpose.msra.mxu0 0.0
    %3005 = vmatprep.subr.mxu0 0.0
    %3006 = vmatpush1.xpose.msra.mxu0 0.0
    %3007 = vmatprep.subr.mxu0 0.0
    %3008 = vmatpush1.xpose.msra.mxu0 0.0
    %3009 = vmatprep.subr.mxu0 0.0
    %3010 = vmatpush1.xpose.msra.mxu0 0.0
    %3011 = vmatprep.subr.mxu0 0.0
    %3012 = vmatpush1.xpose.msra.mxu0 0.0
    %3013 = vmatprep.subr.mxu0 0.0
    %3014 = vmatpush1.xpose.msra.mxu0 0.0
    %3015 = vmatprep.subr.mxu0 0.0
    %3016 = vmatpush1.xpose.msra.mxu0 0.0
    %3017 = vmatprep.subr.mxu0 0.0
    %3018 = vmatpush1.xpose.msra.mxu0 %v2985
    %3019 = vmatprep.subr.mxu0 0.0
    %3020 = vmatpush2.xpose.msra.mxu0 0.0
    %3021 = vmatprep.subr.mxu0 0.0
    %3022 = vmatpush2.xpose.msra.mxu0 0.0
    %3023 = vmatprep.subr.mxu0 0.0
    %3024 = vmatpush2.xpose.msra.mxu0 0.0
    %3025 = vmatprep.subr.mxu0 0.0
    %3026 = vmatpush2.xpose.msra.mxu0 0.0
    %3027 = vmatprep.subr.mxu0 0.0
    %3028 = vmatpush2.xpose.msra.mxu0 0.0
    %3029 = vmatprep.subr.mxu0 0.0
    %3030 = vmatpush2.xpose.msra.mxu0 0.0
    %3031 = vmatprep.subr.mxu0 0.0
    %3032 = vmatpush2.xpose.msra.mxu0 0.0
    %3033 = vmatprep.subr.mxu0 0.0
    %3034 = vmatpush2.xpose.msra.mxu0 0.0
    %3035 = vmatprep.subr.mxu0 0.0
    %3036 = vmatpush2.xpose.msra.mxu0 0.0
    %3037 = vmatprep.subr.mxu0 0.0
    %3038 = vmatpush2.xpose.msra.mxu0 0.0
    %3039 = vmatprep.subr.mxu0 0.0
    %3040 = vmatpush2.xpose.msra.mxu0 0.0
    %3041 = vmatprep.subr.mxu0 0.0
    %3042 = vmatpush2.xpose.msra.mxu0 0.0
    %3043 = vmatprep.subr.mxu0 0.0
    %3044 = vmatpush2.xpose.msra.mxu0 0.0
    %3045 = vmatprep.subr.mxu0 0.0
    %3046 = vmatpush2.xpose.msra.mxu0 0.0
    %3047 = vmatprep.subr.mxu0 0.0
    %3048 = vmatpush2.xpose.msra.mxu0 0.0
    %3049 = vmatprep.subr.mxu0 0.0
    %3050 = vmatpush2.xpose.msra.mxu0 0.0
    %3051 = vmatprep.mubr.f32.mxu0 0.0
    %3052 = vmatmul.mubr.f32.gmra.mxu0 %v2983
    %v3053 = vpop.f32.mrf.mxu0
    %v3054 = vadd.f32 0.0, %v3053
    %v3055 = vpop.f32.mrf.mxu0
    %3056 = vdwg.mxu0
    %v3057 = vmul.f32 %v3054, 0.35355338
    %v3058 = vsel %vm166, %v3057, -inf
    %3059 = vmax.xlane.f32.xlu0 %v3058
    %v3060 = vpop.xlane.xlu0 %3059
    %v3061 = vsub.f32 %v3057, %v3060
    %v3062 = vmul.f32 %v3061, 1.442695
    %v3063 = vpow.pop %v3062
    %v3064 = vsel %vm166, %v3063, 0.0
    %3065 = vadd.xlane.f32.xlu0 %v3064
    %v3066 = vpop.xlane.xlu0 %3065
    %v3067 = vrcp.pop %v3066
    %v3068 = vmul.f32 %v3063, %v3067
    %3069 = vrot.lane.b32.xlu0 %v1962, 48
    %v3070 = vpop.permute.xlu0 %3069
    %v3073 = vsel %vm166, %v3068, 0
    %3075 = vmatprep.subr.mxu0 0.0
    %3076 = vmatpush1.msra.mxu0 0.0
    %3077 = vmatprep.subr.mxu0 0.0
    %3078 = vmatpush1.msra.mxu0 0.0
    %3079 = vmatprep.subr.mxu0 0.0
    %3080 = vmatpush1.msra.mxu0 0.0
    %3081 = vmatprep.subr.mxu0 0.0
    %3082 = vmatpush1.msra.mxu0 0.0
    %3083 = vmatprep.subr.mxu0 0.0
    %3084 = vmatpush1.msra.mxu0 0.0
    %3085 = vmatprep.subr.mxu0 0.0
    %3086 = vmatpush1.msra.mxu0 0.0
    %3087 = vmatprep.subr.mxu0 0.0
    %3088 = vmatpush1.msra.mxu0 0.0
    %3089 = vmatprep.subr.mxu0 0.0
    %3090 = vmatpush1.msra.mxu0 0.0
    %3091 = vmatprep.subr.mxu0 0.0
    %3092 = vmatpush1.msra.mxu0 0.0
    %3093 = vmatprep.subr.mxu0 0.0
    %3094 = vmatpush1.msra.mxu0 0.0
    %3095 = vmatprep.subr.mxu0 0.0
    %3096 = vmatpush1.msra.mxu0 0.0
    %3097 = vmatprep.subr.mxu0 0.0
    %3098 = vmatpush1.msra.mxu0 0.0
    %3099 = vmatprep.subr.mxu0 0.0
    %3100 = vmatpush1.msra.mxu0 0.0
    %3101 = vmatprep.subr.mxu0 0.0
    %3102 = vmatpush1.msra.mxu0 0.0
    %3103 = vmatprep.subr.mxu0 0.0
    %3104 = vmatpush1.msra.mxu0 0.0
    %3105 = vmatprep.subr.mxu0 0.0
    %3106 = vmatpush1.msra.mxu0 %v3070
    %3107 = vmatprep.subr.mxu0 0.0
    %3108 = vmatpush2.msra.mxu0 0.0
    %3109 = vmatprep.subr.mxu0 0.0
    %3110 = vmatpush2.msra.mxu0 0.0
    %3111 = vmatprep.subr.mxu0 0.0
    %3112 = vmatpush2.msra.mxu0 0.0
    %3113 = vmatprep.subr.mxu0 0.0
    %3114 = vmatpush2.msra.mxu0 0.0
    %3115 = vmatprep.subr.mxu0 0.0
    %3116 = vmatpush2.msra.mxu0 0.0
    %3117 = vmatprep.subr.mxu0 0.0
    %3118 = vmatpush2.msra.mxu0 0.0
    %3119 = vmatprep.subr.mxu0 0.0
    %3120 = vmatpush2.msra.mxu0 0.0
    %3121 = vmatprep.subr.mxu0 0.0
    %3122 = vmatpush2.msra.mxu0 0.0
    %3123 = vmatprep.subr.mxu0 0.0
    %3124 = vmatpush2.msra.mxu0 0.0
    %3125 = vmatprep.subr.mxu0 0.0
    %3126 = vmatpush2.msra.mxu0 0.0
    %3127 = vmatprep.subr.mxu0 0.0
    %3128 = vmatpush2.msra.mxu0 0.0
    %3129 = vmatprep.subr.mxu0 0.0
    %3130 = vmatpush2.msra.mxu0 0.0
    %3131 = vmatprep.subr.mxu0 0.0
    %3132 = vmatpush2.msra.mxu0 0.0
    %3133 = vmatprep.subr.mxu0 0.0
    %3134 = vmatpush2.msra.mxu0 0.0
    %3135 = vmatprep.subr.mxu0 0.0
    %3136 = vmatpush2.msra.mxu0 0.0
    %3137 = vmatprep.subr.mxu0 0.0
    %3138 = vmatpush2.msra.mxu0 0.0
    %3139 = vmatprep.mubr.f32.mxu0 0.0
    %3140 = vmatmul.mubr.f32.gmra.mxu0 %v3073
    %v3141 = vpop.f32.mrf.mxu0
    %v3142 = vadd.f32 0.0, %v3141
    %v3143 = vpop.f32.mrf.mxu0
    %3144 = vdwg.mxu0
    %3146 = vrot.lane.b32.xlu0 %v3142, 16
    %v3147 = vpop.permute.xlu0 %3146
    %3149 = vst.msk [vmem:[#allocation2 + $0x8] sm:$0xff] %vm672, %v3147
    %3150 = vrot.lane.b32.xlu0 %v1962, 104
    %v3151 = vpop.permute.xlu0 %3150
    %3152 = vrot.lane.b32.xlu0 %v1962, 72
    %v3153 = vpop.permute.xlu0 %3152
    %v3154 = vsel %vm166, %v3151, 0
    %v3156 = vsel %vm166, %v3153, 0
    %3158 = vmatprep.subr.mxu0 0.0
    %3159 = vmatpush1.xpose.msra.mxu0 0.0
    %3160 = vmatprep.subr.mxu0 0.0
    %3161 = vmatpush1.xpose.msra.mxu0 0.0
    %3162 = vmatprep.subr.mxu0 0.0
    %3163 = vmatpush1.xpose.msra.mxu0 0.0
    %3164 = vmatprep.subr.mxu0 0.0
    %3165 = vmatpush1.xpose.msra.mxu0 0.0
    %3166 = vmatprep.subr.mxu0 0.0
    %3167 = vmatpush1.xpose.msra.mxu0 0.0
    %3168 = vmatprep.subr.mxu0 0.0
    %3169 = vmatpush1.xpose.msra.mxu0 0.0
    %3170 = vmatprep.subr.mxu0 0.0
    %3171 = vmatpush1.xpose.msra.mxu0 0.0
    %3172 = vmatprep.subr.mxu0 0.0
    %3173 = vmatpush1.xpose.msra.mxu0 0.0
    %3174 = vmatprep.subr.mxu0 0.0
    %3175 = vmatpush1.xpose.msra.mxu0 0.0
    %3176 = vmatprep.subr.mxu0 0.0
    %3177 = vmatpush1.xpose.msra.mxu0 0.0
    %3178 = vmatprep.subr.mxu0 0.0
    %3179 = vmatpush1.xpose.msra.mxu0 0.0
    %3180 = vmatprep.subr.mxu0 0.0
    %3181 = vmatpush1.xpose.msra.mxu0 0.0
    %3182 = vmatprep.subr.mxu0 0.0
    %3183 = vmatpush1.xpose.msra.mxu0 0.0
    %3184 = vmatprep.subr.mxu0 0.0
    %3185 = vmatpush1.xpose.msra.mxu0 0.0
    %3186 = vmatprep.subr.mxu0 0.0
    %3187 = vmatpush1.xpose.msra.mxu0 0.0
    %3188 = vmatprep.subr.mxu0 0.0
    %3189 = vmatpush1.xpose.msra.mxu0 %v3156
    %3190 = vmatprep.subr.mxu0 0.0
    %3191 = vmatpush2.xpose.msra.mxu0 0.0
    %3192 = vmatprep.subr.mxu0 0.0
    %3193 = vmatpush2.xpose.msra.mxu0 0.0
    %3194 = vmatprep.subr.mxu0 0.0
    %3195 = vmatpush2.xpose.msra.mxu0 0.0
    %3196 = vmatprep.subr.mxu0 0.0
    %3197 = vmatpush2.xpose.msra.mxu0 0.0
    %3198 = vmatprep.subr.mxu0 0.0
    %3199 = vmatpush2.xpose.msra.mxu0 0.0
    %3200 = vmatprep.subr.mxu0 0.0
    %3201 = vmatpush2.xpose.msra.mxu0 0.0
    %3202 = vmatprep.subr.mxu0 0.0
    %3203 = vmatpush2.xpose.msra.mxu0 0.0
    %3204 = vmatprep.subr.mxu0 0.0
    %3205 = vmatpush2.xpose.msra.mxu0 0.0
    %3206 = vmatprep.subr.mxu0 0.0
    %3207 = vmatpush2.xpose.msra.mxu0 0.0
    %3208 = vmatprep.subr.mxu0 0.0
    %3209 = vmatpush2.xpose.msra.mxu0 0.0
    %3210 = vmatprep.subr.mxu0 0.0
    %3211 = vmatpush2.xpose.msra.mxu0 0.0
    %3212 = vmatprep.subr.mxu0 0.0
    %3213 = vmatpush2.xpose.msra.mxu0 0.0
    %3214 = vmatprep.subr.mxu0 0.0
    %3215 = vmatpush2.xpose.msra.mxu0 0.0
    %3216 = vmatprep.subr.mxu0 0.0
    %3217 = vmatpush2.xpose.msra.mxu0 0.0
    %3218 = vmatprep.subr.mxu0 0.0
    %3219 = vmatpush2.xpose.msra.mxu0 0.0
    %3220 = vmatprep.subr.mxu0 0.0
    %3221 = vmatpush2.xpose.msra.mxu0 0.0
    %3222 = vmatprep.mubr.f32.mxu0 0.0
    %3223 = vmatmul.mubr.f32.gmra.mxu0 %v3154
    %v3224 = vpop.f32.mrf.mxu0
    %v3225 = vadd.f32 0.0, %v3224
    %v3226 = vpop.f32.mrf.mxu0
    %3227 = vdwg.mxu0
    %v3228 = vmul.f32 %v3225, 0.35355338
    %v3229 = vsel %vm166, %v3228, -inf
    %3230 = vmax.xlane.f32.xlu0 %v3229
    %v3231 = vpop.xlane.xlu0 %3230
    %v3232 = vsub.f32 %v3228, %v3231
    %v3233 = vmul.f32 %v3232, 1.442695
    %v3234 = vpow.pop %v3233
    %v3235 = vsel %vm166, %v3234, 0.0
    %3236 = vadd.xlane.f32.xlu0 %v3235
    %v3237 = vpop.xlane.xlu0 %3236
    %v3238 = vrcp.pop %v3237
    %v3239 = vmul.f32 %v3234, %v3238
    %3240 = vrot.lane.b32.xlu0 %v1962, 40
    %v3241 = vpop.permute.xlu0 %3240
    %v3244 = vsel %vm166, %v3239, 0
    %3246 = vmatprep.subr.mxu0 0.0
    %3247 = vmatpush1.msra.mxu0 0.0
    %3248 = vmatprep.subr.mxu0 0.0
    %3249 = vmatpush1.msra.mxu0 0.0
    %3250 = vmatprep.subr.mxu0 0.0
    %3251 = vmatpush1.msra.mxu0 0.0
    %3252 = vmatprep.subr.mxu0 0.0
    %3253 = vmatpush1.msra.mxu0 0.0
    %3254 = vmatprep.subr.mxu0 0.0
    %3255 = vmatpush1.msra.mxu0 0.0
    %3256 = vmatprep.subr.mxu0 0.0
    %3257 = vmatpush1.msra.mxu0 0.0
    %3258 = vmatprep.subr.mxu0 0.0
    %3259 = vmatpush1.msra.mxu0 0.0
    %3260 = vmatprep.subr.mxu0 0.0
    %3261 = vmatpush1.msra.mxu0 0.0
    %3262 = vmatprep.subr.mxu0 0.0
    %3263 = vmatpush1.msra.mxu0 0.0
    %3264 = vmatprep.subr.mxu0 0.0
    %3265 = vmatpush1.msra.mxu0 0.0
    %3266 = vmatprep.subr.mxu0 0.0
    %3267 = vmatpush1.msra.mxu0 0.0
    %3268 = vmatprep.subr.mxu0 0.0
    %3269 = vmatpush1.msra.mxu0 0.0
    %3270 = vmatprep.subr.mxu0 0.0
    %3271 = vmatpush1.msra.mxu0 0.0
    %3272 = vmatprep.subr.mxu0 0.0
    %3273 = vmatpush1.msra.mxu0 0.0
    %3274 = vmatprep.subr.mxu0 0.0
    %3275 = vmatpush1.msra.mxu0 0.0
    %3276 = vmatprep.subr.mxu0 0.0
    %3277 = vmatpush1.msra.mxu0 %v3241
    %3278 = vmatprep.subr.mxu0 0.0
    %3279 = vmatpush2.msra.mxu0 0.0
    %3280 = vmatprep.subr.mxu0 0.0
    %3281 = vmatpush2.msra.mxu0 0.0
    %3282 = vmatprep.subr.mxu0 0.0
    %3283 = vmatpush2.msra.mxu0 0.0
    %3284 = vmatprep.subr.mxu0 0.0
    %3285 = vmatpush2.msra.mxu0 0.0
    %3286 = vmatprep.subr.mxu0 0.0
    %3287 = vmatpush2.msra.mxu0 0.0
    %3288 = vmatprep.subr.mxu0 0.0
    %3289 = vmatpush2.msra.mxu0 0.0
    %3290 = vmatprep.subr.mxu0 0.0
    %3291 = vmatpush2.msra.mxu0 0.0
    %3292 = vmatprep.subr.mxu0 0.0
    %3293 = vmatpush2.msra.mxu0 0.0
    %3294 = vmatprep.subr.mxu0 0.0
    %3295 = vmatpush2.msra.mxu0 0.0
    %3296 = vmatprep.subr.mxu0 0.0
    %3297 = vmatpush2.msra.mxu0 0.0
    %3298 = vmatprep.subr.mxu0 0.0
    %3299 = vmatpush2.msra.mxu0 0.0
    %3300 = vmatprep.subr.mxu0 0.0
    %3301 = vmatpush2.msra.mxu0 0.0
    %3302 = vmatprep.subr.mxu0 0.0
    %3303 = vmatpush2.msra.mxu0 0.0
    %3304 = vmatprep.subr.mxu0 0.0
    %3305 = vmatpush2.msra.mxu0 0.0
    %3306 = vmatprep.subr.mxu0 0.0
    %3307 = vmatpush2.msra.mxu0 0.0
    %3308 = vmatprep.subr.mxu0 0.0
    %3309 = vmatpush2.msra.mxu0 0.0
    %3310 = vmatprep.mubr.f32.mxu0 0.0
    %3311 = vmatmul.mubr.f32.gmra.mxu0 %v3244
    %v3312 = vpop.f32.mrf.mxu0
    %v3313 = vadd.f32 0.0, %v3312
    %v3314 = vpop.f32.mrf.mxu0
    %3315 = vdwg.mxu0
    %3317 = vrot.lane.b32.xlu0 %v3313, 24
    %v3318 = vpop.permute.xlu0 %3317
    %3320 = vst.msk [vmem:[#allocation2 + $0x8] sm:$0xff] %vm844, %v3318
    %v3321 = vld [vmem:[#allocation2] sm:$0xff]
    %v3322 = vld [vmem:[#allocation2 + $0x8] sm:$0xff]
    %3324 = vrot.lane.b32.xlu0 %v1960, 32
    %v3325 = vpop.permute.xlu0 %3324
    %v3328 = vsel %vm75, %v3321, 0
    %v3331 = vsel %vm75, %v3322, 0
    %3333 = vmatprep.subr.mxu0 0.0
    %3334 = vmatpush1.msra.mxu0 0.0
    %3335 = vmatprep.subr.mxu0 0.0
    %3336 = vmatpush1.msra.mxu0 0.0
    %3337 = vmatprep.subr.mxu0 0.0
    %3338 = vmatpush1.msra.mxu0 0.0
    %3339 = vmatprep.subr.mxu0 0.0
    %3340 = vmatpush1.msra.mxu0 0.0
    %3341 = vmatprep.subr.mxu0 0.0
    %3342 = vmatpush1.msra.mxu0 0.0
    %3343 = vmatprep.subr.mxu0 0.0
    %3344 = vmatpush1.msra.mxu0 0.0
    %3345 = vmatprep.subr.mxu0 0.0
    %3346 = vmatpush1.msra.mxu0 0.0
    %3347 = vmatprep.subr.mxu0 0.0
    %3348 = vmatpush1.msra.mxu0 0.0
    %3349 = vmatprep.subr.mxu0 0.0
    %3350 = vmatpush1.msra.mxu0 0.0
    %3351 = vmatprep.subr.mxu0 0.0
    %3352 = vmatpush1.msra.mxu0 0.0
    %3353 = vmatprep.subr.mxu0 0.0
    %3354 = vmatpush1.msra.mxu0 0.0
    %3355 = vmatprep.subr.mxu0 0.0
    %3356 = vmatpush1.msra.mxu0 0.0
    %3357 = vmatprep.subr.mxu0 0.0
    %3358 = vmatpush1.msra.mxu0 %v1873
    %3359 = vmatprep.subr.mxu0 0.0
    %3360 = vmatpush1.msra.mxu0 %v1869
    %3361 = vmatprep.subr.mxu0 0.0
    %3362 = vmatpush1.msra.mxu0 %v1865
    %3363 = vmatprep.subr.mxu0 0.0
    %3364 = vmatpush1.msra.mxu0 %v1861
    %3365 = vmatprep.subr.mxu0 0.0
    %3366 = vmatpush2.msra.mxu0 0.0
    %3367 = vmatprep.subr.mxu0 0.0
    %3368 = vmatpush2.msra.mxu0 0.0
    %3369 = vmatprep.subr.mxu0 0.0
    %3370 = vmatpush2.msra.mxu0 0.0
    %3371 = vmatprep.subr.mxu0 0.0
    %3372 = vmatpush2.msra.mxu0 0.0
    %3373 = vmatprep.subr.mxu0 0.0
    %3374 = vmatpush2.msra.mxu0 0.0
    %3375 = vmatprep.subr.mxu0 0.0
    %3376 = vmatpush2.msra.mxu0 0.0
    %3377 = vmatprep.subr.mxu0 0.0
    %3378 = vmatpush2.msra.mxu0 0.0
    %3379 = vmatprep.subr.mxu0 0.0
    %3380 = vmatpush2.msra.mxu0 0.0
    %3381 = vmatprep.subr.mxu0 0.0
    %3382 = vmatpush2.msra.mxu0 0.0
    %3383 = vmatprep.subr.mxu0 0.0
    %3384 = vmatpush2.msra.mxu0 0.0
    %3385 = vmatprep.subr.mxu0 0.0
    %3386 = vmatpush2.msra.mxu0 0.0
    %3387 = vmatprep.subr.mxu0 0.0
    %3388 = vmatpush2.msra.mxu0 0.0
    %3389 = vmatprep.subr.mxu0 0.0
    %3390 = vmatpush2.msra.mxu0 0.0
    %3391 = vmatprep.subr.mxu0 0.0
    %3392 = vmatpush2.msra.mxu0 0.0
    %3393 = vmatprep.subr.mxu0 0.0
    %3394 = vmatpush2.msra.mxu0 0.0
    %3395 = vmatprep.subr.mxu0 0.0
    %3396 = vmatpush2.msra.mxu0 0.0
    %3397 = vmatprep.mubr.f32.mxu0 0.0
    %3398 = vmatmul.mubr.f32.gmra.mxu0 %v3328
    %v3399 = vpop.f32.mrf.mxu0
    %v3400 = vadd.f32 %v3325, %v3399
    %v3401 = vpop.f32.mrf.mxu0
    %3402 = vmatprep.mubr.f32.mxu0 0.0
    %3403 = vmatmul.mubr.f32.gmra.mxu0 %v3331
    %v3404 = vpop.f32.mrf.mxu0
    %v3405 = vadd.f32 %v3325, %v3404
    %v3406 = vpop.f32.mrf.mxu0
    %3407 = vdwg.mxu0
    %v3408 = vadd.f32 %v3400, %v1855
    %v3409 = vadd.f32 %v3405, %v1856
    %v3410 = vsel %vm75, %v3408, 0.0
    %3411 = vadd.xlane.f32.xlu0 %v3410
    %v3412 = vpop.xlane.xlu0 %3411
    %v3413 = vsel %vm75, %v3409, 0.0
    %3414 = vadd.xlane.f32.xlu0 %v3413
    %v3415 = vpop.xlane.xlu0 %3414
    %v3416 = vmul.f32 %v3412, %v1620
    %v3417 = vmul.f32 %v3415, %v1620
    %v3418 = vsub.f32 %v3408, %v3416
    %v3419 = vsub.f32 %v3409, %v3417
    %v3420 = vmul.f32 %v3418, %v3418
    %v3421 = vmul.f32 %v3419, %v3419
    %v3422 = vsel %vm75, %v3420, 0.0
    %3423 = vadd.xlane.f32.xlu0 %v3422
    %v3424 = vpop.xlane.xlu0 %3423
    %v3425 = vsel %vm75, %v3421, 0.0
    %3426 = vadd.xlane.f32.xlu0 %v3425
    %v3427 = vpop.xlane.xlu0 %3426
    %v3428 = vmul.f32 %v3424, %v1620
    %v3429 = vmul.f32 %v3427, %v1620
    %v3430 = vadd.f32 %v3428, 1e-05
    %v3431 = vadd.f32 %v3429, 1e-05
    %v3432 = vrsqrt.pop %v3430
    %v3433 = vrsqrt.pop %v3431
    %v3434 = vmul.f32 %v3418, %v3432
    %v3435 = vmul.f32 %v3419, %v3433
    %v3436 = vlaneseq
    %v3437 = vshrl.u32 %v3436, 7
    %v3438 = vsub.s32 2, %v3437
    %v3439 = vrot.slane %v1875, %v3438
    %v3440 = vmul.f32 %v3434, %v3439
    %v3441 = vmul.f32 %v3435, %v3439
    %3443 = vrot.lane.b32.xlu0 %v3439, 96
    %v3444 = vpop.permute.xlu0 %3443
    %v3446 = vadd.f32 %v3440, %v3444
    %v3447 = vadd.f32 %v3441, %v3444
    %v3448 = vlaneseq
    %v3449 = vshrl.u32 %v3448, 7
    %v3450 = vsub.s32 1, %v3449
    %v3451 = vrot.slane %v1875, %v3450
    %v3453 = vsel %vm75, %v3446, 0
    %v3456 = vsel %vm75, %v3447, 0
    %3458 = vmatprep.subr.mxu0 0.0
    %3459 = vmatpush1.msra.mxu0 0.0
    %3460 = vmatprep.subr.mxu0 0.0
    %3461 = vmatpush1.msra.mxu0 0.0
    %3462 = vmatprep.subr.mxu0 0.0
    %3463 = vmatpush1.msra.mxu0 0.0
    %3464 = vmatprep.subr.mxu0 0.0
    %3465 = vmatpush1.msra.mxu0 0.0
    %3466 = vmatprep.subr.mxu0 0.0
    %3467 = vmatpush1.msra.mxu0 0.0
    %3468 = vmatprep.subr.mxu0 0.0
    %3469 = vmatpush1.msra.mxu0 0.0
    %3470 = vmatprep.subr.mxu0 0.0
    %3471 = vmatpush1.msra.mxu0 0.0
    %3472 = vmatprep.subr.mxu0 0.0
    %3473 = vmatpush1.msra.mxu0 0.0
    %3474 = vmatprep.subr.mxu0 0.0
    %3475 = vmatpush1.msra.mxu0 0.0
    %3476 = vmatprep.subr.mxu0 0.0
    %3477 = vmatpush1.msra.mxu0 0.0
    %3478 = vmatprep.subr.mxu0 0.0
    %3479 = vmatpush1.msra.mxu0 0.0
    %3480 = vmatprep.subr.mxu0 0.0
    %3481 = vmatpush1.msra.mxu0 0.0
    %3482 = vmatprep.subr.mxu0 0.0
    %3483 = vmatpush1.msra.mxu0 %v1871
    %3484 = vmatprep.subr.mxu0 0.0
    %3485 = vmatpush1.msra.mxu0 %v1867
    %3486 = vmatprep.subr.mxu0 0.0
    %3487 = vmatpush1.msra.mxu0 %v1863
    %3488 = vmatprep.subr.mxu0 0.0
    %3489 = vmatpush1.msra.mxu0 %v1859
    %3490 = vmatprep.subr.mxu0 0.0
    %3491 = vmatpush2.msra.mxu0 0.0
    %3492 = vmatprep.subr.mxu0 0.0
    %3493 = vmatpush2.msra.mxu0 0.0
    %3494 = vmatprep.subr.mxu0 0.0
    %3495 = vmatpush2.msra.mxu0 0.0
    %3496 = vmatprep.subr.mxu0 0.0
    %3497 = vmatpush2.msra.mxu0 0.0
    %3498 = vmatprep.subr.mxu0 0.0
    %3499 = vmatpush2.msra.mxu0 0.0
    %3500 = vmatprep.subr.mxu0 0.0
    %3501 = vmatpush2.msra.mxu0 0.0
    %3502 = vmatprep.subr.mxu0 0.0
    %3503 = vmatpush2.msra.mxu0 0.0
    %3504 = vmatprep.subr.mxu0 0.0
    %3505 = vmatpush2.msra.mxu0 0.0
    %3506 = vmatprep.subr.mxu0 0.0
    %3507 = vmatpush2.msra.mxu0 0.0
    %3508 = vmatprep.subr.mxu0 0.0
    %3509 = vmatpush2.msra.mxu0 0.0
    %3510 = vmatprep.subr.mxu0 0.0
    %3511 = vmatpush2.msra.mxu0 0.0
    %3512 = vmatprep.subr.mxu0 0.0
    %3513 = vmatpush2.msra.mxu0 0.0
    %3514 = vmatprep.subr.mxu0 0.0
    %3515 = vmatpush2.msra.mxu0 0.0
    %3516 = vmatprep.subr.mxu0 0.0
    %3517 = vmatpush2.msra.mxu0 0.0
    %3518 = vmatprep.subr.mxu0 0.0
    %3519 = vmatpush2.msra.mxu0 0.0
    %3520 = vmatprep.subr.mxu0 0.0
    %3521 = vmatpush2.msra.mxu0 0.0
    %3522 = vmatprep.mubr.f32.mxu0 0.0
    %3523 = vmatmul.mubr.f32.gmra.mxu0 %v3453
    %v3524 = vpop.f32.mrf.mxu0
    %v3525 = vadd.f32 %v3451, %v3524
    %v3526 = vpop.f32.mrf.mxu0
    %3527 = vmatprep.mubr.f32.mxu0 0.0
    %3528 = vmatmul.mubr.f32.gmra.mxu0 %v3456
    %v3529 = vpop.f32.mrf.mxu0
    %v3530 = vadd.f32 %v3451, %v3529
    %v3531 = vpop.f32.mrf.mxu0
    %3532 = vdwg.mxu0
    %v3533 = vmax.f32 %v3525, 0.0
    %v3534 = vmax.f32 %v3530, 0.0
    %v3535 = vlaneseq
    %v3536 = vshrl.u32 %v3535, 7
    %v3537 = vsub.s32 3, %v3536
    %v3538 = vrot.slane %v1875, %v3537
    %3539 = vmatprep.subr.mxu0 0.0
    %3540 = vmatpush1.xpose.msra.mxu0 0.0
    %3541 = vmatprep.subr.mxu0 0.0
    %3542 = vmatpush1.xpose.msra.mxu0 0.0
    %3543 = vmatprep.subr.mxu0 0.0
    %3544 = vmatpush1.xpose.msra.mxu0 0.0
    %3545 = vmatprep.subr.mxu0 0.0
    %3546 = vmatpush1.xpose.msra.mxu0 0.0
    %3547 = vmatprep.subr.mxu0 0.0
    %3548 = vmatpush1.xpose.msra.mxu0 0.0
    %3549 = vmatprep.subr.mxu0 0.0
    %3550 = vmatpush1.xpose.msra.mxu0 0.0
    %3551 = vmatprep.subr.mxu0 0.0
    %3552 = vmatpush1.xpose.msra.mxu0 0.0
    %3553 = vmatprep.subr.mxu0 0.0
    %3554 = vmatpush1.xpose.msra.mxu0 0.0
    %3555 = vmatprep.subr.mxu0 0.0
    %3556 = vmatpush1.xpose.msra.mxu0 0.0
    %3557 = vmatprep.subr.mxu0 0.0
    %3558 = vmatpush1.xpose.msra.mxu0 0.0
    %3559 = vmatprep.subr.mxu0 0.0
    %3560 = vmatpush1.xpose.msra.mxu0 0.0
    %3561 = vmatprep.subr.mxu0 0.0
    %3562 = vmatpush1.xpose.msra.mxu0 0.0
    %3563 = vmatprep.subr.mxu0 0.0
    %3564 = vmatpush1.xpose.msra.mxu0 %v1872
    %3565 = vmatprep.subr.mxu0 0.0
    %3566 = vmatpush1.xpose.msra.mxu0 %v1868
    %3567 = vmatprep.subr.mxu0 0.0
    %3568 = vmatpush1.xpose.msra.mxu0 %v1864
    %3569 = vmatprep.subr.mxu0 0.0
    %3570 = vmatpush1.xpose.msra.mxu0 %v1860
    %3571 = vmatprep.subr.mxu0 0.0
    %3572 = vmatpush2.xpose.msra.mxu0 0.0
    %3573 = vmatprep.subr.mxu0 0.0
    %3574 = vmatpush2.xpose.msra.mxu0 0.0
    %3575 = vmatprep.subr.mxu0 0.0
    %3576 = vmatpush2.xpose.msra.mxu0 0.0
    %3577 = vmatprep.subr.mxu0 0.0
    %3578 = vmatpush2.xpose.msra.mxu0 0.0
    %3579 = vmatprep.subr.mxu0 0.0
    %3580 = vmatpush2.xpose.msra.mxu0 0.0
    %3581 = vmatprep.subr.mxu0 0.0
    %3582 = vmatpush2.xpose.msra.mxu0 0.0
    %3583 = vmatprep.subr.mxu0 0.0
    %3584 = vmatpush2.xpose.msra.mxu0 0.0
    %3585 = vmatprep.subr.mxu0 0.0
    %3586 = vmatpush2.xpose.msra.mxu0 0.0
    %3587 = vmatprep.subr.mxu0 0.0
    %3588 = vmatpush2.xpose.msra.mxu0 0.0
    %3589 = vmatprep.subr.mxu0 0.0
    %3590 = vmatpush2.xpose.msra.mxu0 0.0
    %3591 = vmatprep.subr.mxu0 0.0
    %3592 = vmatpush2.xpose.msra.mxu0 0.0
    %3593 = vmatprep.subr.mxu0 0.0
    %3594 = vmatpush2.xpose.msra.mxu0 0.0
    %3595 = vmatprep.subr.mxu0 0.0
    %3596 = vmatpush2.xpose.msra.mxu0 0.0
    %3597 = vmatprep.subr.mxu0 0.0
    %3598 = vmatpush2.xpose.msra.mxu0 0.0
    %3599 = vmatprep.subr.mxu0 0.0
    %3600 = vmatpush2.xpose.msra.mxu0 0.0
    %3601 = vmatprep.subr.mxu0 0.0
    %3602 = vmatpush2.xpose.msra.mxu0 0.0
    %3603 = vmatprep.mubr.f32.mxu0 0.0
    %3604 = vmatmul.mubr.f32.gmra.mxu0 %v3533
    %v3605 = vpop.f32.mrf.mxu0
    %v3606 = vadd.f32 %v3538, %v3605
    %v3607 = vpop.f32.mrf.mxu0
    %3608 = vmatprep.mubr.f32.mxu0 0.0
    %3609 = vmatmul.mubr.f32.gmra.mxu0 %v3534
    %v3610 = vpop.f32.mrf.mxu0
    %v3611 = vadd.f32 %v3538, %v3610
    %v3612 = vpop.f32.mrf.mxu0
    %3613 = vdwg.mxu0
    %v3614 = vadd.f32 %v3606, %v3446
    %v3615 = vadd.f32 %v3611, %v3447
    %v3616 = vsel %vm75, %v3614, 0.0
    %3617 = vadd.xlane.f32.xlu0 %v3616
    %v3618 = vpop.xlane.xlu0 %3617
    %v3619 = vsel %vm75, %v3615, 0.0
    %3620 = vadd.xlane.f32.xlu0 %v3619
    %v3621 = vpop.xlane.xlu0 %3620
    %v3622 = vmul.f32 %v3618, %v1620
    %v3623 = vmul.f32 %v3621, %v1620
    %v3624 = vsub.f32 %v3614, %v3622
    %v3625 = vsub.f32 %v3615, %v3623
    %v3626 = vmul.f32 %v3624, %v3624
    %v3627 = vmul.f32 %v3625, %v3625
    %v3628 = vsel %vm75, %v3626, 0.0
    %3629 = vadd.xlane.f32.xlu0 %v3628
    %v3630 = vpop.xlane.xlu0 %3629
    %v3631 = vsel %vm75, %v3627, 0.0
    %3632 = vadd.xlane.f32.xlu0 %v3631
    %v3633 = vpop.xlane.xlu0 %3632
    %v3634 = vmul.f32 %v3630, %v1620
    %v3635 = vmul.f32 %v3633, %v1620
    %v3636 = vadd.f32 %v3634, 1e-05
    %v3637 = vadd.f32 %v3635, 1e-05
    %v3638 = vrsqrt.pop %v3636
    %v3639 = vrsqrt.pop %v3637
    %v3640 = vmul.f32 %v3624, %v3638
    %v3641 = vmul.f32 %v3625, %v3639
    %3642 = vrot.lane.b32.xlu0 %v3439, 64
    %v3643 = vpop.permute.xlu0 %3642
    %v3645 = vmul.f32 %v3640, %v3643
    %v3646 = vmul.f32 %v3641, %v3643
    %3647 = vrot.lane.b32.xlu0 %v3439, 32
    %v3648 = vpop.permute.xlu0 %3647
    %v3650 = vadd.f32 %v3645, %v3648
    %v3651 = vadd.f32 %v3646, %v3648
    %3652 = vst.msk [vmem:[#allocation9] sm:$0xff] %vm75, %v3650
    %3653 = vst.msk [vmem:[#allocation9 + $0x8] sm:$0xff] %vm75, %v3651
    // Predicated region
    $region26: #{tpu_custom_call.1} parent=1 // pred_check
      _
    $region27: #{tpu_custom_call.1} parent=1 // pred_check_branch
      %3655 = sbr.rel (0) target = $region29
    $region28: #{tpu_custom_call.1} parent=1 // pred_region
      %s3657 = ssub.s32 256, 256
      %3658 = vsyncadd [#allocation5], %s3657
      %s3659 = sshll.u32 [#allocation9], 4
      %s3660 = int_to_ptr.vmem [resolvable:$true] %s3659
      %3665 = dma.vmem_to_hbm [thread:$0]  %s3660, 256, %s3, [#allocation5], 128, 128, 8
    $region29: #{tpu_custom_call.1} parent=1 // pred_fallthru
      _
    // Predicated region
    $region30: #{tpu_custom_call.1} parent=1 // pred_check
      _
    $region31: #{tpu_custom_call.1} parent=1 // pred_check_branch
      %3667 = sbr.rel (0) target = $region33
    $region32: #{tpu_custom_call.1} parent=1 // pred_region
      %3668 = dma.done [#allocation5], 256
    $region33: #{tpu_custom_call.1} parent=1 // pred_fallthru
      _
    %3669 = vsyncpa [#allocation4], 1
    %3670 = vsyncpa [#allocation7], 1
    %3671 = vsyncpa [#allocation5], 1

</llo_original>
